<compile_context>
chip_gen: v7x
topology: tpu7x:2x2x1
jax: 0.10.0
libtpu: 0.0.40
codegen_flags: <defaults>
</compile_context>

<pallas_src>
import functools

import jax
import jax.numpy as jnp
from jax.experimental import pallas as pl
from jax.experimental.pallas import tpu as pltpu


def _resblock_kernel(x_ref, w1_ref, b1_ref, w2_ref, b2_ref, mask_ref, o_ref,
                     *, B, C, H, W, KS, res_scale):
    """Single grid step covering the whole (batch-folded) problem.

    x_ref   : (B*C, H*W)  f32   activations, channels (x batch) on sublanes, pixels on lanes
    w*_ref  : (KS*KS, C, C) bf16  per-tap weights, tap t = dh*KS + dw, layout (Cout, Cin)
    b*_ref  : (C, 1)      f32   conv biases
    mask_ref: (KS*KS, H*W) f32  per-tap validity mask over flat pixels (0/1)
    o_ref   : (B*C, H*W)        output (lane-dense store)
    """
    P = H * W
    pad = KS // 2

    xf = x_ref[...].astype(jnp.float32)                       # (B*C, P)

    # Hoist per-tap mask rows once; both convs reuse them.
    mask_rows = {}
    for t in range(KS * KS):
        oh, ow = t // KS - pad, t % KS - pad
        if (oh, ow) != (0, 0):
            mask_rows[t] = mask_ref[pl.ds(t, 1), :]            # (1, P) f32, broadcast over sublanes

    def conv(a, w_ref, b_ref):
        # Per-tap accumulation: for each (dh, dw) one (C, C) x (C, P) MXU dot per image,
        # bf16 operands, f32 accumulation.  No materialized im2col patches buffer.
        accs = [None] * B
        for t in range(KS * KS):
            oh, ow = t // KS - pad, t % KS - pad
            s = oh * W + ow                                    # flat-pixel shift of this tap
            if s == 0:
                ta = a
            else:
                # shifted[:, p] = a[:, (p + s) mod P]; wrap/out-of-bounds pixels are
                # killed by the precomputed validity mask (zero-padding semantics).
                ta = pltpu.roll(a, shift=(-s) % P, axis=1)
                ta = ta * mask_rows[t]
            ta_bf = ta.astype(jnp.bfloat16)                    # MXU operand
            w_t = w_ref[t]                                     # (Cout, Cin) bf16, static index
            for b in range(B):
                d = jnp.dot(w_t, ta_bf[b * C:(b + 1) * C, :],
                            preferred_element_type=jnp.float32)
                accs[b] = d if accs[b] is None else accs[b] + d
        bias = b_ref[...]                                      # (C, 1) f32, broadcasts over lanes
        return jnp.concatenate([acc + bias for acc in accs], axis=0)   # (B*C, P) f32

    h1 = jnp.maximum(conv(xf, w1_ref, b1_ref), 0.0)            # conv1 + bias + ReLU (f32)
    res = conv(h1, w2_ref, b2_ref) * res_scale                 # conv2 + bias, scaled (f32)
    o_ref[...] = (res + xf).astype(o_ref.dtype)                # residual add, lane-dense store


def resblock_forward(x_nchw, w1, b1, w2, b2, *, res_scale=1.0):
    """ResBlock forward.  x_nchw: (B, C, H, W); w*: (KS, KS, Cin, Cout) (HWIO); b*: (C,)."""
    B, C, H, W = x_nchw.shape
    KS = w1.shape[0]
    # pad = KS // 2 reproduces PyTorch 'same' conv only for odd kernel sizes.
    assert KS % 2 == 1, "ResBlock kernel assumes an odd kernel_size"
    pad = KS // 2
    P = H * W

    # Free contiguous reshape only - no pad, no transpose of the activations.
    x_flat = x_nchw.reshape(B * C, P)

    def prep_w(w):
        # (KS, KS, Cin, Cout) -> (KS*KS, Cout, Cin), bf16 MXU operands.
        return jnp.transpose(w, (0, 1, 3, 2)).reshape(KS * KS, C, C).astype(jnp.bfloat16)

    w1_t, w2_t = prep_w(w1), prep_w(w2)
    b1c = b1.reshape(C, 1).astype(jnp.float32)
    b2c = b2.reshape(C, 1).astype(jnp.float32)

    # Per-tap validity mask over flat pixels: tap (dh, dw) at output pixel (i, j) reads
    # input (i+dh-pad, j+dw-pad); invalid (out of image / roll wrap-around) -> 0.
    ii = jnp.arange(H, dtype=jnp.int32)[:, None]
    jj = jnp.arange(W, dtype=jnp.int32)[None, :]
    rows = []
    for dh in range(KS):
        for dw in range(KS):
            oh, ow = dh - pad, dw - pad
            valid = (ii + oh >= 0) & (ii + oh < H) & (jj + ow >= 0) & (jj + ow < W)
            rows.append(valid.reshape(P))
    mask = jnp.stack(rows).astype(jnp.float32)                 # (KS*KS, P)

    kernel = functools.partial(_resblock_kernel, B=B, C=C, H=H, W=W, KS=KS,
                               res_scale=float(res_scale))

    itemsize = jnp.dtype(x_nchw.dtype).itemsize
    flops = 2 * 2 * B * P * C * C * KS * KS                    # 2 convs, 2 flops/MAC
    bytes_accessed = (2 * B * C * P * itemsize                 # input + output
                      + 2 * KS * KS * C * C * 2                # bf16 weights
                      + 2 * C * 4                              # biases
                      + KS * KS * P * 4)                       # mask table

    out_flat = pl.pallas_call(
        kernel,
        out_shape=jax.ShapeDtypeStruct((B * C, P), x_nchw.dtype),
        grid=(1,),                                             # whole problem in one step at this shape
        in_specs=[
            pl.BlockSpec((B * C, P), lambda i: (0, 0)),        # x
            pl.BlockSpec((KS * KS, C, C), lambda i: (0, 0, 0)),# w1 per-tap
            pl.BlockSpec((C, 1), lambda i: (0, 0)),            # b1
            pl.BlockSpec((KS * KS, C, C), lambda i: (0, 0, 0)),# w2 per-tap
            pl.BlockSpec((C, 1), lambda i: (0, 0)),            # b2
            pl.BlockSpec((KS * KS, P), lambda i: (0, 0)),      # tap validity masks
        ],
        out_specs=pl.BlockSpec((B * C, P), lambda i: (0, 0)),
        compiler_params=pltpu.CompilerParams(
            dimension_semantics=("arbitrary",)),
        cost_estimate=pl.CostEstimate(flops=flops, transcendentals=0,
                                      bytes_accessed=bytes_accessed),
    )(x_flat, w1_t, b1c, w2_t, b2c, mask)

    return out_flat.reshape(B, C, H, W)


def _reference_forward(x_nchw, w1, b1, w2, b2, res_scale):
    """Pure-JAX f32 reference (matches PyTorch ResBlock with default_conv, bn=False)."""
    dn = jax.lax.conv_dimension_numbers(x_nchw.shape, w1.shape, ("NCHW", "HWIO", "NCHW"))
    y = jax.lax.conv_general_dilated(x_nchw, w1, (1, 1), "SAME", dimension_numbers=dn)
    y = y + b1[None, :, None, None]
    y = jnp.maximum(y, 0.0)
    y = jax.lax.conv_general_dilated(y, w2, (1, 1), "SAME", dimension_numbers=dn)
    y = y + b2[None, :, None, None]
    return y * res_scale + x_nchw


if __name__ == "__main__":
    # Small shapes consistent with ResBlock(conv, n_feat, kernel_size).
    # n_feat=16 keeps Cin/Cout a multiple of the bf16 sublane tile (16 rows).
    B, n_feat, H, W, ks = 2, 16, 16, 16, 3
    res_scale = 1.0

    key = jax.random.PRNGKey(0)
    kx, kw1, kb1, kw2, kb2 = jax.random.split(key, 5)
    x = jax.random.normal(kx, (B, n_feat, H, W), dtype=jnp.float32)
    # Synthetic conv parameters stored as (KH, KW, Cin, Cout).
    w1 = 0.1 * jax.random.normal(kw1, (ks, ks, n_feat, n_feat), dtype=jnp.float32)
    b1 = 0.1 * jax.random.normal(kb1, (n_feat,), dtype=jnp.float32)
    w2 = 0.1 * jax.random.normal(kw2, (ks, ks, n_feat, n_feat), dtype=jnp.float32)
    b2 = 0.1 * jax.random.normal(kb2, (n_feat,), dtype=jnp.float32)

    out = jax.block_until_ready(resblock_forward(x, w1, b1, w2, b2, res_scale=res_scale))
    ref = jax.block_until_ready(_reference_forward(x, w1, b1, w2, b2, res_scale))

    assert out.shape == (B, n_feat, H, W) and out.dtype == x.dtype
    # bf16 MXU operands with f32 accumulation -> loosened tolerance vs the f32 reference.
    assert jnp.allclose(out, ref, rtol=5e-2, atol=5e-2), "mismatch vs reference conv"

    print("KERNEL_OK")
</pallas_src>

<mosaic_0001>
module attributes {stable_mosaic.version = 11 : i64} {
  func.func @_resblock_kernel(%arg0: i32, %arg1: memref<32x256xf32, #tpu.memory_space<vmem>>, %arg2: memref<9x16x16xbf16, #tpu.memory_space<vmem>>, %arg3: memref<16x1xf32, #tpu.memory_space<vmem>>, %arg4: memref<9x16x16xbf16, #tpu.memory_space<vmem>>, %arg5: memref<16x1xf32, #tpu.memory_space<vmem>>, %arg6: memref<9x256xf32, #tpu.memory_space<vmem>>, %arg7: memref<32x256xf32, #tpu.memory_space<vmem>>) attributes {dimension_semantics = [#tpu.dimension_semantics<arbitrary>], iteration_bounds = array<i64: 1>, scalar_prefetch = 0 : i64, scratch_operands = 0 : i64, tpu.core_type = #tpu.core_type<tc>, window_params = [{pipeline_mode = #tpu.pipeline_mode<synchronous>, transform_indices = @transform_0, window_bounds = array<i64: 32, 256>}, {pipeline_mode = #tpu.pipeline_mode<synchronous>, transform_indices = @transform_1, window_bounds = array<i64: 9, 16, 16>}, {pipeline_mode = #tpu.pipeline_mode<synchronous>, transform_indices = @transform_2, window_bounds = array<i64: 16, 1>}, {pipeline_mode = #tpu.pipeline_mode<synchronous>, transform_indices = @transform_3, window_bounds = array<i64: 9, 16, 16>}, {pipeline_mode = #tpu.pipeline_mode<synchronous>, transform_indices = @transform_4, window_bounds = array<i64: 16, 1>}, {pipeline_mode = #tpu.pipeline_mode<synchronous>, transform_indices = @transform_5, window_bounds = array<i64: 9, 256>}, {pipeline_mode = #tpu.pipeline_mode<synchronous>, transform_indices = @transform_6, window_bounds = array<i64: 32, 256>}]} {
    %c0 = arith.constant 0 : index
    %c0_0 = arith.constant 0 : index
    %0 = vector.load %arg1[%c0, %c0_0] : memref<32x256xf32, #tpu.memory_space<vmem>>, vector<32x256xf32>
    %c0_1 = arith.constant 0 : index
    %c0_2 = arith.constant 0 : index
    %1 = vector.load %arg6[%c0_1, %c0_2] : memref<9x256xf32, #tpu.memory_space<vmem>>, vector<1x256xf32>
    %c1 = arith.constant 1 : index
    %c0_3 = arith.constant 0 : index
    %2 = vector.load %arg6[%c1, %c0_3] : memref<9x256xf32, #tpu.memory_space<vmem>>, vector<1x256xf32>
    %c2 = arith.constant 2 : index
    %c0_4 = arith.constant 0 : index
    %3 = vector.load %arg6[%c2, %c0_4] : memref<9x256xf32, #tpu.memory_space<vmem>>, vector<1x256xf32>
    %c3 = arith.constant 3 : index
    %c0_5 = arith.constant 0 : index
    %4 = vector.load %arg6[%c3, %c0_5] : memref<9x256xf32, #tpu.memory_space<vmem>>, vector<1x256xf32>
    %c5 = arith.constant 5 : index
    %c0_6 = arith.constant 0 : index
    %5 = vector.load %arg6[%c5, %c0_6] : memref<9x256xf32, #tpu.memory_space<vmem>>, vector<1x256xf32>
    %c6 = arith.constant 6 : index
    %c0_7 = arith.constant 0 : index
    %6 = vector.load %arg6[%c6, %c0_7] : memref<9x256xf32, #tpu.memory_space<vmem>>, vector<1x256xf32>
    %c7 = arith.constant 7 : index
    %c0_8 = arith.constant 0 : index
    %7 = vector.load %arg6[%c7, %c0_8] : memref<9x256xf32, #tpu.memory_space<vmem>>, vector<1x256xf32>
    %c8 = arith.constant 8 : index
    %c0_9 = arith.constant 0 : index
    %8 = vector.load %arg6[%c8, %c0_9] : memref<9x256xf32, #tpu.memory_space<vmem>>, vector<1x256xf32>
    %c17_i32 = arith.constant 17 : i32
    %9 = tpu.dynamic_rotate %0 by %c17_i32 dim 1 : vector<32x256xf32>, i32 -> vector<32x256xf32>
    %10 = vector.broadcast %1 : vector<1x256xf32> to vector<32x256xf32>
    %11 = arith.mulf %9, %10 : vector<32x256xf32>
    %12 = arith.truncf %11 : vector<32x256xf32> to vector<32x256xbf16>
    %c0_10 = arith.constant 0 : index
    %c0_11 = arith.constant 0 : index
    %c0_12 = arith.constant 0 : index
    %13 = vector.load %arg2[%c0_10, %c0_11, %c0_12] : memref<9x16x16xbf16, #tpu.memory_space<vmem>>, vector<1x16x16xbf16>
    %14 = vector.shape_cast %13 : vector<1x16x16xbf16> to vector<16x16xbf16>
    %15 = vector.extract_strided_slice %12 {offsets = [0, 0], sizes = [16, 256], strides = [1, 1]} : vector<32x256xbf16> to vector<16x256xbf16>
    %cst = arith.constant dense<0.000000e+00> : vector<16x256xf32>
    %16 = tpu.matmul %14, %15, %cst {dimension_numbers = #tpu.dot_dimension_numbers<[1], [0], [0], [1], [0, 0, 1, 1], [], []>} : vector<16x16xbf16>, vector<16x256xbf16>, vector<16x256xf32> -> vector<16x256xf32>
    %17 = vector.extract_strided_slice %12 {offsets = [16, 0], sizes = [16, 256], strides = [1, 1]} : vector<32x256xbf16> to vector<16x256xbf16>
    %cst_13 = arith.constant dense<0.000000e+00> : vector<16x256xf32>
    %18 = tpu.matmul %14, %17, %cst_13 {dimension_numbers = #tpu.dot_dimension_numbers<[1], [0], [0], [1], [0, 0, 1, 1], [], []>} : vector<16x16xbf16>, vector<16x256xbf16>, vector<16x256xf32> -> vector<16x256xf32>
    %c16_i32 = arith.constant 16 : i32
    %19 = tpu.dynamic_rotate %0 by %c16_i32 dim 1 : vector<32x256xf32>, i32 -> vector<32x256xf32>
    %20 = vector.broadcast %2 : vector<1x256xf32> to vector<32x256xf32>
    %21 = arith.mulf %19, %20 : vector<32x256xf32>
    %22 = arith.truncf %21 : vector<32x256xf32> to vector<32x256xbf16>
    %c1_14 = arith.constant 1 : index
    %c0_15 = arith.constant 0 : index
    %c0_16 = arith.constant 0 : index
    %23 = vector.load %arg2[%c1_14, %c0_15, %c0_16] : memref<9x16x16xbf16, #tpu.memory_space<vmem>>, vector<1x16x16xbf16>
    %24 = vector.shape_cast %23 : vector<1x16x16xbf16> to vector<16x16xbf16>
    %25 = vector.extract_strided_slice %22 {offsets = [0, 0], sizes = [16, 256], strides = [1, 1]} : vector<32x256xbf16> to vector<16x256xbf16>
    %cst_17 = arith.constant dense<0.000000e+00> : vector<16x256xf32>
    %26 = tpu.matmul %24, %25, %cst_17 {dimension_numbers = #tpu.dot_dimension_numbers<[1], [0], [0], [1], [0, 0, 1, 1], [], []>} : vector<16x16xbf16>, vector<16x256xbf16>, vector<16x256xf32> -> vector<16x256xf32>
    %27 = arith.addf %16, %26 : vector<16x256xf32>
    %28 = vector.extract_strided_slice %22 {offsets = [16, 0], sizes = [16, 256], strides = [1, 1]} : vector<32x256xbf16> to vector<16x256xbf16>
    %cst_18 = arith.constant dense<0.000000e+00> : vector<16x256xf32>
    %29 = tpu.matmul %24, %28, %cst_18 {dimension_numbers = #tpu.dot_dimension_numbers<[1], [0], [0], [1], [0, 0, 1, 1], [], []>} : vector<16x16xbf16>, vector<16x256xbf16>, vector<16x256xf32> -> vector<16x256xf32>
    %30 = arith.addf %18, %29 : vector<16x256xf32>
    %c15_i32 = arith.constant 15 : i32
    %31 = tpu.dynamic_rotate %0 by %c15_i32 dim 1 : vector<32x256xf32>, i32 -> vector<32x256xf32>
    %32 = vector.broadcast %3 : vector<1x256xf32> to vector<32x256xf32>
    %33 = arith.mulf %31, %32 : vector<32x256xf32>
    %34 = arith.truncf %33 : vector<32x256xf32> to vector<32x256xbf16>
    %c2_19 = arith.constant 2 : index
    %c0_20 = arith.constant 0 : index
    %c0_21 = arith.constant 0 : index
    %35 = vector.load %arg2[%c2_19, %c0_20, %c0_21] : memref<9x16x16xbf16, #tpu.memory_space<vmem>>, vector<1x16x16xbf16>
    %36 = vector.shape_cast %35 : vector<1x16x16xbf16> to vector<16x16xbf16>
    %37 = vector.extract_strided_slice %34 {offsets = [0, 0], sizes = [16, 256], strides = [1, 1]} : vector<32x256xbf16> to vector<16x256xbf16>
    %cst_22 = arith.constant dense<0.000000e+00> : vector<16x256xf32>
    %38 = tpu.matmul %36, %37, %cst_22 {dimension_numbers = #tpu.dot_dimension_numbers<[1], [0], [0], [1], [0, 0, 1, 1], [], []>} : vector<16x16xbf16>, vector<16x256xbf16>, vector<16x256xf32> -> vector<16x256xf32>
    %39 = arith.addf %27, %38 : vector<16x256xf32>
    %40 = vector.extract_strided_slice %34 {offsets = [16, 0], sizes = [16, 256], strides = [1, 1]} : vector<32x256xbf16> to vector<16x256xbf16>
    %cst_23 = arith.constant dense<0.000000e+00> : vector<16x256xf32>
    %41 = tpu.matmul %36, %40, %cst_23 {dimension_numbers = #tpu.dot_dimension_numbers<[1], [0], [0], [1], [0, 0, 1, 1], [], []>} : vector<16x16xbf16>, vector<16x256xbf16>, vector<16x256xf32> -> vector<16x256xf32>
    %42 = arith.addf %30, %41 : vector<16x256xf32>
    %c1_i32 = arith.constant 1 : i32
    %43 = tpu.dynamic_rotate %0 by %c1_i32 dim 1 : vector<32x256xf32>, i32 -> vector<32x256xf32>
    %44 = vector.broadcast %4 : vector<1x256xf32> to vector<32x256xf32>
    %45 = arith.mulf %43, %44 : vector<32x256xf32>
    %46 = arith.truncf %45 : vector<32x256xf32> to vector<32x256xbf16>
    %c3_24 = arith.constant 3 : index
    %c0_25 = arith.constant 0 : index
    %c0_26 = arith.constant 0 : index
    %47 = vector.load %arg2[%c3_24, %c0_25, %c0_26] : memref<9x16x16xbf16, #tpu.memory_space<vmem>>, vector<1x16x16xbf16>
    %48 = vector.shape_cast %47 : vector<1x16x16xbf16> to vector<16x16xbf16>
    %49 = vector.extract_strided_slice %46 {offsets = [0, 0], sizes = [16, 256], strides = [1, 1]} : vector<32x256xbf16> to vector<16x256xbf16>
    %cst_27 = arith.constant dense<0.000000e+00> : vector<16x256xf32>
    %50 = tpu.matmul %48, %49, %cst_27 {dimension_numbers = #tpu.dot_dimension_numbers<[1], [0], [0], [1], [0, 0, 1, 1], [], []>} : vector<16x16xbf16>, vector<16x256xbf16>, vector<16x256xf32> -> vector<16x256xf32>
    %51 = arith.addf %39, %50 : vector<16x256xf32>
    %52 = vector.extract_strided_slice %46 {offsets = [16, 0], sizes = [16, 256], strides = [1, 1]} : vector<32x256xbf16> to vector<16x256xbf16>
    %cst_28 = arith.constant dense<0.000000e+00> : vector<16x256xf32>
    %53 = tpu.matmul %48, %52, %cst_28 {dimension_numbers = #tpu.dot_dimension_numbers<[1], [0], [0], [1], [0, 0, 1, 1], [], []>} : vector<16x16xbf16>, vector<16x256xbf16>, vector<16x256xf32> -> vector<16x256xf32>
    %54 = arith.addf %42, %53 : vector<16x256xf32>
    %55 = arith.truncf %0 : vector<32x256xf32> to vector<32x256xbf16>
    %c4 = arith.constant 4 : index
    %c0_29 = arith.constant 0 : index
    %c0_30 = arith.constant 0 : index
    %56 = vector.load %arg2[%c4, %c0_29, %c0_30] : memref<9x16x16xbf16, #tpu.memory_space<vmem>>, vector<1x16x16xbf16>
    %57 = vector.shape_cast %56 : vector<1x16x16xbf16> to vector<16x16xbf16>
    %58 = vector.extract_strided_slice %55 {offsets = [0, 0], sizes = [16, 256], strides = [1, 1]} : vector<32x256xbf16> to vector<16x256xbf16>
    %cst_31 = arith.constant dense<0.000000e+00> : vector<16x256xf32>
    %59 = tpu.matmul %57, %58, %cst_31 {dimension_numbers = #tpu.dot_dimension_numbers<[1], [0], [0], [1], [0, 0, 1, 1], [], []>} : vector<16x16xbf16>, vector<16x256xbf16>, vector<16x256xf32> -> vector<16x256xf32>
    %60 = arith.addf %51, %59 : vector<16x256xf32>
    %61 = vector.extract_strided_slice %55 {offsets = [16, 0], sizes = [16, 256], strides = [1, 1]} : vector<32x256xbf16> to vector<16x256xbf16>
    %cst_32 = arith.constant dense<0.000000e+00> : vector<16x256xf32>
    %62 = tpu.matmul %57, %61, %cst_32 {dimension_numbers = #tpu.dot_dimension_numbers<[1], [0], [0], [1], [0, 0, 1, 1], [], []>} : vector<16x16xbf16>, vector<16x256xbf16>, vector<16x256xf32> -> vector<16x256xf32>
    %63 = arith.addf %54, %62 : vector<16x256xf32>
    %c255_i32 = arith.constant 255 : i32
    %64 = tpu.dynamic_rotate %0 by %c255_i32 dim 1 : vector<32x256xf32>, i32 -> vector<32x256xf32>
    %65 = vector.broadcast %5 : vector<1x256xf32> to vector<32x256xf32>
    %66 = arith.mulf %64, %65 : vector<32x256xf32>
    %67 = arith.truncf %66 : vector<32x256xf32> to vector<32x256xbf16>
    %c5_33 = arith.constant 5 : index
    %c0_34 = arith.constant 0 : index
    %c0_35 = arith.constant 0 : index
    %68 = vector.load %arg2[%c5_33, %c0_34, %c0_35] : memref<9x16x16xbf16, #tpu.memory_space<vmem>>, vector<1x16x16xbf16>
    %69 = vector.shape_cast %68 : vector<1x16x16xbf16> to vector<16x16xbf16>
    %70 = vector.extract_strided_slice %67 {offsets = [0, 0], sizes = [16, 256], strides = [1, 1]} : vector<32x256xbf16> to vector<16x256xbf16>
    %cst_36 = arith.constant dense<0.000000e+00> : vector<16x256xf32>
    %71 = tpu.matmul %69, %70, %cst_36 {dimension_numbers = #tpu.dot_dimension_numbers<[1], [0], [0], [1], [0, 0, 1, 1], [], []>} : vector<16x16xbf16>, vector<16x256xbf16>, vector<16x256xf32> -> vector<16x256xf32>
    %72 = arith.addf %60, %71 : vector<16x256xf32>
    %73 = vector.extract_strided_slice %67 {offsets = [16, 0], sizes = [16, 256], strides = [1, 1]} : vector<32x256xbf16> to vector<16x256xbf16>
    %cst_37 = arith.constant dense<0.000000e+00> : vector<16x256xf32>
    %74 = tpu.matmul %69, %73, %cst_37 {dimension_numbers = #tpu.dot_dimension_numbers<[1], [0], [0], [1], [0, 0, 1, 1], [], []>} : vector<16x16xbf16>, vector<16x256xbf16>, vector<16x256xf32> -> vector<16x256xf32>
    %75 = arith.addf %63, %74 : vector<16x256xf32>
    %c241_i32 = arith.constant 241 : i32
    %76 = tpu.dynamic_rotate %0 by %c241_i32 dim 1 : vector<32x256xf32>, i32 -> vector<32x256xf32>
    %77 = vector.broadcast %6 : vector<1x256xf32> to vector<32x256xf32>
    %78 = arith.mulf %76, %77 : vector<32x256xf32>
    %79 = arith.truncf %78 : vector<32x256xf32> to vector<32x256xbf16>
    %c6_38 = arith.constant 6 : index
    %c0_39 = arith.constant 0 : index
    %c0_40 = arith.constant 0 : index
    %80 = vector.load %arg2[%c6_38, %c0_39, %c0_40] : memref<9x16x16xbf16, #tpu.memory_space<vmem>>, vector<1x16x16xbf16>
    %81 = vector.shape_cast %80 : vector<1x16x16xbf16> to vector<16x16xbf16>
    %82 = vector.extract_strided_slice %79 {offsets = [0, 0], sizes = [16, 256], strides = [1, 1]} : vector<32x256xbf16> to vector<16x256xbf16>
    %cst_41 = arith.constant dense<0.000000e+00> : vector<16x256xf32>
    %83 = tpu.matmul %81, %82, %cst_41 {dimension_numbers = #tpu.dot_dimension_numbers<[1], [0], [0], [1], [0, 0, 1, 1], [], []>} : vector<16x16xbf16>, vector<16x256xbf16>, vector<16x256xf32> -> vector<16x256xf32>
    %84 = arith.addf %72, %83 : vector<16x256xf32>
    %85 = vector.extract_strided_slice %79 {offsets = [16, 0], sizes = [16, 256], strides = [1, 1]} : vector<32x256xbf16> to vector<16x256xbf16>
    %cst_42 = arith.constant dense<0.000000e+00> : vector<16x256xf32>
    %86 = tpu.matmul %81, %85, %cst_42 {dimension_numbers = #tpu.dot_dimension_numbers<[1], [0], [0], [1], [0, 0, 1, 1], [], []>} : vector<16x16xbf16>, vector<16x256xbf16>, vector<16x256xf32> -> vector<16x256xf32>
    %87 = arith.addf %75, %86 : vector<16x256xf32>
    %c240_i32 = arith.constant 240 : i32
    %88 = tpu.dynamic_rotate %0 by %c240_i32 dim 1 : vector<32x256xf32>, i32 -> vector<32x256xf32>
    %89 = vector.broadcast %7 : vector<1x256xf32> to vector<32x256xf32>
    %90 = arith.mulf %88, %89 : vector<32x256xf32>
    %91 = arith.truncf %90 : vector<32x256xf32> to vector<32x256xbf16>
    %c7_43 = arith.constant 7 : index
    %c0_44 = arith.constant 0 : index
    %c0_45 = arith.constant 0 : index
    %92 = vector.load %arg2[%c7_43, %c0_44, %c0_45] : memref<9x16x16xbf16, #tpu.memory_space<vmem>>, vector<1x16x16xbf16>
    %93 = vector.shape_cast %92 : vector<1x16x16xbf16> to vector<16x16xbf16>
    %94 = vector.extract_strided_slice %91 {offsets = [0, 0], sizes = [16, 256], strides = [1, 1]} : vector<32x256xbf16> to vector<16x256xbf16>
    %cst_46 = arith.constant dense<0.000000e+00> : vector<16x256xf32>
    %95 = tpu.matmul %93, %94, %cst_46 {dimension_numbers = #tpu.dot_dimension_numbers<[1], [0], [0], [1], [0, 0, 1, 1], [], []>} : vector<16x16xbf16>, vector<16x256xbf16>, vector<16x256xf32> -> vector<16x256xf32>
    %96 = arith.addf %84, %95 : vector<16x256xf32>
    %97 = vector.extract_strided_slice %91 {offsets = [16, 0], sizes = [16, 256], strides = [1, 1]} : vector<32x256xbf16> to vector<16x256xbf16>
    %cst_47 = arith.constant dense<0.000000e+00> : vector<16x256xf32>
    %98 = tpu.matmul %93, %97, %cst_47 {dimension_numbers = #tpu.dot_dimension_numbers<[1], [0], [0], [1], [0, 0, 1, 1], [], []>} : vector<16x16xbf16>, vector<16x256xbf16>, vector<16x256xf32> -> vector<16x256xf32>
    %99 = arith.addf %87, %98 : vector<16x256xf32>
    %c239_i32 = arith.constant 239 : i32
    %100 = tpu.dynamic_rotate %0 by %c239_i32 dim 1 : vector<32x256xf32>, i32 -> vector<32x256xf32>
    %101 = vector.broadcast %8 : vector<1x256xf32> to vector<32x256xf32>
    %102 = arith.mulf %100, %101 : vector<32x256xf32>
    %103 = arith.truncf %102 : vector<32x256xf32> to vector<32x256xbf16>
    %c8_48 = arith.constant 8 : index
    %c0_49 = arith.constant 0 : index
    %c0_50 = arith.constant 0 : index
    %104 = vector.load %arg2[%c8_48, %c0_49, %c0_50] : memref<9x16x16xbf16, #tpu.memory_space<vmem>>, vector<1x16x16xbf16>
    %105 = vector.shape_cast %104 : vector<1x16x16xbf16> to vector<16x16xbf16>
    %106 = vector.extract_strided_slice %103 {offsets = [0, 0], sizes = [16, 256], strides = [1, 1]} : vector<32x256xbf16> to vector<16x256xbf16>
    %cst_51 = arith.constant dense<0.000000e+00> : vector<16x256xf32>
    %107 = tpu.matmul %105, %106, %cst_51 {dimension_numbers = #tpu.dot_dimension_numbers<[1], [0], [0], [1], [0, 0, 1, 1], [], []>} : vector<16x16xbf16>, vector<16x256xbf16>, vector<16x256xf32> -> vector<16x256xf32>
    %108 = arith.addf %96, %107 : vector<16x256xf32>
    %109 = vector.extract_strided_slice %103 {offsets = [16, 0], sizes = [16, 256], strides = [1, 1]} : vector<32x256xbf16> to vector<16x256xbf16>
    %cst_52 = arith.constant dense<0.000000e+00> : vector<16x256xf32>
    %110 = tpu.matmul %105, %109, %cst_52 {dimension_numbers = #tpu.dot_dimension_numbers<[1], [0], [0], [1], [0, 0, 1, 1], [], []>} : vector<16x16xbf16>, vector<16x256xbf16>, vector<16x256xf32> -> vector<16x256xf32>
    %111 = arith.addf %99, %110 : vector<16x256xf32>
    %c0_53 = arith.constant 0 : index
    %c0_54 = arith.constant 0 : index
    %112 = vector.load %arg3[%c0_53, %c0_54] : memref<16x1xf32, #tpu.memory_space<vmem>>, vector<16x1xf32>
    %113 = vector.broadcast %112 : vector<16x1xf32> to vector<16x256xf32>
    %114 = arith.addf %108, %113 : vector<16x256xf32>
    %115 = vector.broadcast %112 : vector<16x1xf32> to vector<16x256xf32>
    %116 = arith.addf %111, %115 : vector<16x256xf32>
    %117 = tpu.concatenate %114, %116 in 0 : vector<16x256xf32>, vector<16x256xf32> -> vector<32x256xf32>
    %cst_55 = arith.constant 0.000000e+00 : f32
    %118 = vector.broadcast %cst_55 : f32 to vector<32x256xf32>
    %119 = arith.maximumf %117, %118 : vector<32x256xf32>
    %c17_i32_56 = arith.constant 17 : i32
    %120 = tpu.dynamic_rotate %119 by %c17_i32_56 dim 1 : vector<32x256xf32>, i32 -> vector<32x256xf32>
    %121 = vector.broadcast %1 : vector<1x256xf32> to vector<32x256xf32>
    %122 = arith.mulf %120, %121 : vector<32x256xf32>
    %123 = arith.truncf %122 : vector<32x256xf32> to vector<32x256xbf16>
    %c0_57 = arith.constant 0 : index
    %c0_58 = arith.constant 0 : index
    %c0_59 = arith.constant 0 : index
    %124 = vector.load %arg4[%c0_57, %c0_58, %c0_59] : memref<9x16x16xbf16, #tpu.memory_space<vmem>>, vector<1x16x16xbf16>
    %125 = vector.shape_cast %124 : vector<1x16x16xbf16> to vector<16x16xbf16>
    %126 = vector.extract_strided_slice %123 {offsets = [0, 0], sizes = [16, 256], strides = [1, 1]} : vector<32x256xbf16> to vector<16x256xbf16>
    %cst_60 = arith.constant dense<0.000000e+00> : vector<16x256xf32>
    %127 = tpu.matmul %125, %126, %cst_60 {dimension_numbers = #tpu.dot_dimension_numbers<[1], [0], [0], [1], [0, 0, 1, 1], [], []>} : vector<16x16xbf16>, vector<16x256xbf16>, vector<16x256xf32> -> vector<16x256xf32>
    %128 = vector.extract_strided_slice %123 {offsets = [16, 0], sizes = [16, 256], strides = [1, 1]} : vector<32x256xbf16> to vector<16x256xbf16>
    %cst_61 = arith.constant dense<0.000000e+00> : vector<16x256xf32>
    %129 = tpu.matmul %125, %128, %cst_61 {dimension_numbers = #tpu.dot_dimension_numbers<[1], [0], [0], [1], [0, 0, 1, 1], [], []>} : vector<16x16xbf16>, vector<16x256xbf16>, vector<16x256xf32> -> vector<16x256xf32>
    %c16_i32_62 = arith.constant 16 : i32
    %130 = tpu.dynamic_rotate %119 by %c16_i32_62 dim 1 : vector<32x256xf32>, i32 -> vector<32x256xf32>
    %131 = vector.broadcast %2 : vector<1x256xf32> to vector<32x256xf32>
    %132 = arith.mulf %130, %131 : vector<32x256xf32>
    %133 = arith.truncf %132 : vector<32x256xf32> to vector<32x256xbf16>
    %c1_63 = arith.constant 1 : index
    %c0_64 = arith.constant 0 : index
    %c0_65 = arith.constant 0 : index
    %134 = vector.load %arg4[%c1_63, %c0_64, %c0_65] : memref<9x16x16xbf16, #tpu.memory_space<vmem>>, vector<1x16x16xbf16>
    %135 = vector.shape_cast %134 : vector<1x16x16xbf16> to vector<16x16xbf16>
    %136 = vector.extract_strided_slice %133 {offsets = [0, 0], sizes = [16, 256], strides = [1, 1]} : vector<32x256xbf16> to vector<16x256xbf16>
    %cst_66 = arith.constant dense<0.000000e+00> : vector<16x256xf32>
    %137 = tpu.matmul %135, %136, %cst_66 {dimension_numbers = #tpu.dot_dimension_numbers<[1], [0], [0], [1], [0, 0, 1, 1], [], []>} : vector<16x16xbf16>, vector<16x256xbf16>, vector<16x256xf32> -> vector<16x256xf32>
    %138 = arith.addf %127, %137 : vector<16x256xf32>
    %139 = vector.extract_strided_slice %133 {offsets = [16, 0], sizes = [16, 256], strides = [1, 1]} : vector<32x256xbf16> to vector<16x256xbf16>
    %cst_67 = arith.constant dense<0.000000e+00> : vector<16x256xf32>
    %140 = tpu.matmul %135, %139, %cst_67 {dimension_numbers = #tpu.dot_dimension_numbers<[1], [0], [0], [1], [0, 0, 1, 1], [], []>} : vector<16x16xbf16>, vector<16x256xbf16>, vector<16x256xf32> -> vector<16x256xf32>
    %141 = arith.addf %129, %140 : vector<16x256xf32>
    %c15_i32_68 = arith.constant 15 : i32
    %142 = tpu.dynamic_rotate %119 by %c15_i32_68 dim 1 : vector<32x256xf32>, i32 -> vector<32x256xf32>
    %143 = vector.broadcast %3 : vector<1x256xf32> to vector<32x256xf32>
    %144 = arith.mulf %142, %143 : vector<32x256xf32>
    %145 = arith.truncf %144 : vector<32x256xf32> to vector<32x256xbf16>
    %c2_69 = arith.constant 2 : index
    %c0_70 = arith.constant 0 : index
    %c0_71 = arith.constant 0 : index
    %146 = vector.load %arg4[%c2_69, %c0_70, %c0_71] : memref<9x16x16xbf16, #tpu.memory_space<vmem>>, vector<1x16x16xbf16>
    %147 = vector.shape_cast %146 : vector<1x16x16xbf16> to vector<16x16xbf16>
    %148 = vector.extract_strided_slice %145 {offsets = [0, 0], sizes = [16, 256], strides = [1, 1]} : vector<32x256xbf16> to vector<16x256xbf16>
    %cst_72 = arith.constant dense<0.000000e+00> : vector<16x256xf32>
    %149 = tpu.matmul %147, %148, %cst_72 {dimension_numbers = #tpu.dot_dimension_numbers<[1], [0], [0], [1], [0, 0, 1, 1], [], []>} : vector<16x16xbf16>, vector<16x256xbf16>, vector<16x256xf32> -> vector<16x256xf32>
    %150 = arith.addf %138, %149 : vector<16x256xf32>
    %151 = vector.extract_strided_slice %145 {offsets = [16, 0], sizes = [16, 256], strides = [1, 1]} : vector<32x256xbf16> to vector<16x256xbf16>
    %cst_73 = arith.constant dense<0.000000e+00> : vector<16x256xf32>
    %152 = tpu.matmul %147, %151, %cst_73 {dimension_numbers = #tpu.dot_dimension_numbers<[1], [0], [0], [1], [0, 0, 1, 1], [], []>} : vector<16x16xbf16>, vector<16x256xbf16>, vector<16x256xf32> -> vector<16x256xf32>
    %153 = arith.addf %141, %152 : vector<16x256xf32>
    %c1_i32_74 = arith.constant 1 : i32
    %154 = tpu.dynamic_rotate %119 by %c1_i32_74 dim 1 : vector<32x256xf32>, i32 -> vector<32x256xf32>
    %155 = vector.broadcast %4 : vector<1x256xf32> to vector<32x256xf32>
    %156 = arith.mulf %154, %155 : vector<32x256xf32>
    %157 = arith.truncf %156 : vector<32x256xf32> to vector<32x256xbf16>
    %c3_75 = arith.constant 3 : index
    %c0_76 = arith.constant 0 : index
    %c0_77 = arith.constant 0 : index
    %158 = vector.load %arg4[%c3_75, %c0_76, %c0_77] : memref<9x16x16xbf16, #tpu.memory_space<vmem>>, vector<1x16x16xbf16>
    %159 = vector.shape_cast %158 : vector<1x16x16xbf16> to vector<16x16xbf16>
    %160 = vector.extract_strided_slice %157 {offsets = [0, 0], sizes = [16, 256], strides = [1, 1]} : vector<32x256xbf16> to vector<16x256xbf16>
    %cst_78 = arith.constant dense<0.000000e+00> : vector<16x256xf32>
    %161 = tpu.matmul %159, %160, %cst_78 {dimension_numbers = #tpu.dot_dimension_numbers<[1], [0], [0], [1], [0, 0, 1, 1], [], []>} : vector<16x16xbf16>, vector<16x256xbf16>, vector<16x256xf32> -> vector<16x256xf32>
    %162 = arith.addf %150, %161 : vector<16x256xf32>
    %163 = vector.extract_strided_slice %157 {offsets = [16, 0], sizes = [16, 256], strides = [1, 1]} : vector<32x256xbf16> to vector<16x256xbf16>
    %cst_79 = arith.constant dense<0.000000e+00> : vector<16x256xf32>
    %164 = tpu.matmul %159, %163, %cst_79 {dimension_numbers = #tpu.dot_dimension_numbers<[1], [0], [0], [1], [0, 0, 1, 1], [], []>} : vector<16x16xbf16>, vector<16x256xbf16>, vector<16x256xf32> -> vector<16x256xf32>
    %165 = arith.addf %153, %164 : vector<16x256xf32>
    %166 = arith.truncf %119 : vector<32x256xf32> to vector<32x256xbf16>
    %c4_80 = arith.constant 4 : index
    %c0_81 = arith.constant 0 : index
    %c0_82 = arith.constant 0 : index
    %167 = vector.load %arg4[%c4_80, %c0_81, %c0_82] : memref<9x16x16xbf16, #tpu.memory_space<vmem>>, vector<1x16x16xbf16>
    %168 = vector.shape_cast %167 : vector<1x16x16xbf16> to vector<16x16xbf16>
    %169 = vector.extract_strided_slice %166 {offsets = [0, 0], sizes = [16, 256], strides = [1, 1]} : vector<32x256xbf16> to vector<16x256xbf16>
    %cst_83 = arith.constant dense<0.000000e+00> : vector<16x256xf32>
    %170 = tpu.matmul %168, %169, %cst_83 {dimension_numbers = #tpu.dot_dimension_numbers<[1], [0], [0], [1], [0, 0, 1, 1], [], []>} : vector<16x16xbf16>, vector<16x256xbf16>, vector<16x256xf32> -> vector<16x256xf32>
    %171 = arith.addf %162, %170 : vector<16x256xf32>
    %172 = vector.extract_strided_slice %166 {offsets = [16, 0], sizes = [16, 256], strides = [1, 1]} : vector<32x256xbf16> to vector<16x256xbf16>
    %cst_84 = arith.constant dense<0.000000e+00> : vector<16x256xf32>
    %173 = tpu.matmul %168, %172, %cst_84 {dimension_numbers = #tpu.dot_dimension_numbers<[1], [0], [0], [1], [0, 0, 1, 1], [], []>} : vector<16x16xbf16>, vector<16x256xbf16>, vector<16x256xf32> -> vector<16x256xf32>
    %174 = arith.addf %165, %173 : vector<16x256xf32>
    %c255_i32_85 = arith.constant 255 : i32
    %175 = tpu.dynamic_rotate %119 by %c255_i32_85 dim 1 : vector<32x256xf32>, i32 -> vector<32x256xf32>
    %176 = vector.broadcast %5 : vector<1x256xf32> to vector<32x256xf32>
    %177 = arith.mulf %175, %176 : vector<32x256xf32>
    %178 = arith.truncf %177 : vector<32x256xf32> to vector<32x256xbf16>
    %c5_86 = arith.constant 5 : index
    %c0_87 = arith.constant 0 : index
    %c0_88 = arith.constant 0 : index
    %179 = vector.load %arg4[%c5_86, %c0_87, %c0_88] : memref<9x16x16xbf16, #tpu.memory_space<vmem>>, vector<1x16x16xbf16>
    %180 = vector.shape_cast %179 : vector<1x16x16xbf16> to vector<16x16xbf16>
    %181 = vector.extract_strided_slice %178 {offsets = [0, 0], sizes = [16, 256], strides = [1, 1]} : vector<32x256xbf16> to vector<16x256xbf16>
    %cst_89 = arith.constant dense<0.000000e+00> : vector<16x256xf32>
    %182 = tpu.matmul %180, %181, %cst_89 {dimension_numbers = #tpu.dot_dimension_numbers<[1], [0], [0], [1], [0, 0, 1, 1], [], []>} : vector<16x16xbf16>, vector<16x256xbf16>, vector<16x256xf32> -> vector<16x256xf32>
    %183 = arith.addf %171, %182 : vector<16x256xf32>
    %184 = vector.extract_strided_slice %178 {offsets = [16, 0], sizes = [16, 256], strides = [1, 1]} : vector<32x256xbf16> to vector<16x256xbf16>
    %cst_90 = arith.constant dense<0.000000e+00> : vector<16x256xf32>
    %185 = tpu.matmul %180, %184, %cst_90 {dimension_numbers = #tpu.dot_dimension_numbers<[1], [0], [0], [1], [0, 0, 1, 1], [], []>} : vector<16x16xbf16>, vector<16x256xbf16>, vector<16x256xf32> -> vector<16x256xf32>
    %186 = arith.addf %174, %185 : vector<16x256xf32>
    %c241_i32_91 = arith.constant 241 : i32
    %187 = tpu.dynamic_rotate %119 by %c241_i32_91 dim 1 : vector<32x256xf32>, i32 -> vector<32x256xf32>
    %188 = vector.broadcast %6 : vector<1x256xf32> to vector<32x256xf32>
    %189 = arith.mulf %187, %188 : vector<32x256xf32>
    %190 = arith.truncf %189 : vector<32x256xf32> to vector<32x256xbf16>
    %c6_92 = arith.constant 6 : index
    %c0_93 = arith.constant 0 : index
    %c0_94 = arith.constant 0 : index
    %191 = vector.load %arg4[%c6_92, %c0_93, %c0_94] : memref<9x16x16xbf16, #tpu.memory_space<vmem>>, vector<1x16x16xbf16>
    %192 = vector.shape_cast %191 : vector<1x16x16xbf16> to vector<16x16xbf16>
    %193 = vector.extract_strided_slice %190 {offsets = [0, 0], sizes = [16, 256], strides = [1, 1]} : vector<32x256xbf16> to vector<16x256xbf16>
    %cst_95 = arith.constant dense<0.000000e+00> : vector<16x256xf32>
    %194 = tpu.matmul %192, %193, %cst_95 {dimension_numbers = #tpu.dot_dimension_numbers<[1], [0], [0], [1], [0, 0, 1, 1], [], []>} : vector<16x16xbf16>, vector<16x256xbf16>, vector<16x256xf32> -> vector<16x256xf32>
    %195 = arith.addf %183, %194 : vector<16x256xf32>
    %196 = vector.extract_strided_slice %190 {offsets = [16, 0], sizes = [16, 256], strides = [1, 1]} : vector<32x256xbf16> to vector<16x256xbf16>
    %cst_96 = arith.constant dense<0.000000e+00> : vector<16x256xf32>
    %197 = tpu.matmul %192, %196, %cst_96 {dimension_numbers = #tpu.dot_dimension_numbers<[1], [0], [0], [1], [0, 0, 1, 1], [], []>} : vector<16x16xbf16>, vector<16x256xbf16>, vector<16x256xf32> -> vector<16x256xf32>
    %198 = arith.addf %186, %197 : vector<16x256xf32>
    %c240_i32_97 = arith.constant 240 : i32
    %199 = tpu.dynamic_rotate %119 by %c240_i32_97 dim 1 : vector<32x256xf32>, i32 -> vector<32x256xf32>
    %200 = vector.broadcast %7 : vector<1x256xf32> to vector<32x256xf32>
    %201 = arith.mulf %199, %200 : vector<32x256xf32>
    %202 = arith.truncf %201 : vector<32x256xf32> to vector<32x256xbf16>
    %c7_98 = arith.constant 7 : index
    %c0_99 = arith.constant 0 : index
    %c0_100 = arith.constant 0 : index
    %203 = vector.load %arg4[%c7_98, %c0_99, %c0_100] : memref<9x16x16xbf16, #tpu.memory_space<vmem>>, vector<1x16x16xbf16>
    %204 = vector.shape_cast %203 : vector<1x16x16xbf16> to vector<16x16xbf16>
    %205 = vector.extract_strided_slice %202 {offsets = [0, 0], sizes = [16, 256], strides = [1, 1]} : vector<32x256xbf16> to vector<16x256xbf16>
    %cst_101 = arith.constant dense<0.000000e+00> : vector<16x256xf32>
    %206 = tpu.matmul %204, %205, %cst_101 {dimension_numbers = #tpu.dot_dimension_numbers<[1], [0], [0], [1], [0, 0, 1, 1], [], []>} : vector<16x16xbf16>, vector<16x256xbf16>, vector<16x256xf32> -> vector<16x256xf32>
    %207 = arith.addf %195, %206 : vector<16x256xf32>
    %208 = vector.extract_strided_slice %202 {offsets = [16, 0], sizes = [16, 256], strides = [1, 1]} : vector<32x256xbf16> to vector<16x256xbf16>
    %cst_102 = arith.constant dense<0.000000e+00> : vector<16x256xf32>
    %209 = tpu.matmul %204, %208, %cst_102 {dimension_numbers = #tpu.dot_dimension_numbers<[1], [0], [0], [1], [0, 0, 1, 1], [], []>} : vector<16x16xbf16>, vector<16x256xbf16>, vector<16x256xf32> -> vector<16x256xf32>
    %210 = arith.addf %198, %209 : vector<16x256xf32>
    %c239_i32_103 = arith.constant 239 : i32
    %211 = tpu.dynamic_rotate %119 by %c239_i32_103 dim 1 : vector<32x256xf32>, i32 -> vector<32x256xf32>
    %212 = vector.broadcast %8 : vector<1x256xf32> to vector<32x256xf32>
    %213 = arith.mulf %211, %212 : vector<32x256xf32>
    %214 = arith.truncf %213 : vector<32x256xf32> to vector<32x256xbf16>
    %c8_104 = arith.constant 8 : index
    %c0_105 = arith.constant 0 : index
    %c0_106 = arith.constant 0 : index
    %215 = vector.load %arg4[%c8_104, %c0_105, %c0_106] : memref<9x16x16xbf16, #tpu.memory_space<vmem>>, vector<1x16x16xbf16>
    %216 = vector.shape_cast %215 : vector<1x16x16xbf16> to vector<16x16xbf16>
    %217 = vector.extract_strided_slice %214 {offsets = [0, 0], sizes = [16, 256], strides = [1, 1]} : vector<32x256xbf16> to vector<16x256xbf16>
    %cst_107 = arith.constant dense<0.000000e+00> : vector<16x256xf32>
    %218 = tpu.matmul %216, %217, %cst_107 {dimension_numbers = #tpu.dot_dimension_numbers<[1], [0], [0], [1], [0, 0, 1, 1], [], []>} : vector<16x16xbf16>, vector<16x256xbf16>, vector<16x256xf32> -> vector<16x256xf32>
    %219 = arith.addf %207, %218 : vector<16x256xf32>
    %220 = vector.extract_strided_slice %214 {offsets = [16, 0], sizes = [16, 256], strides = [1, 1]} : vector<32x256xbf16> to vector<16x256xbf16>
    %cst_108 = arith.constant dense<0.000000e+00> : vector<16x256xf32>
    %221 = tpu.matmul %216, %220, %cst_108 {dimension_numbers = #tpu.dot_dimension_numbers<[1], [0], [0], [1], [0, 0, 1, 1], [], []>} : vector<16x16xbf16>, vector<16x256xbf16>, vector<16x256xf32> -> vector<16x256xf32>
    %222 = arith.addf %210, %221 : vector<16x256xf32>
    %c0_109 = arith.constant 0 : index
    %c0_110 = arith.constant 0 : index
    %223 = vector.load %arg5[%c0_109, %c0_110] : memref<16x1xf32, #tpu.memory_space<vmem>>, vector<16x1xf32>
    %224 = vector.broadcast %223 : vector<16x1xf32> to vector<16x256xf32>
    %225 = arith.addf %219, %224 : vector<16x256xf32>
    %226 = vector.broadcast %223 : vector<16x1xf32> to vector<16x256xf32>
    %227 = arith.addf %222, %226 : vector<16x256xf32>
    %228 = tpu.concatenate %225, %227 in 0 : vector<16x256xf32>, vector<16x256xf32> -> vector<32x256xf32>
    %cst_111 = arith.constant 1.000000e+00 : f32
    %229 = vector.broadcast %cst_111 : f32 to vector<32x256xf32>
    %230 = arith.mulf %228, %229 : vector<32x256xf32>
    %231 = arith.addf %230, %0 : vector<32x256xf32>
    %c0_112 = arith.constant 0 : index
    %c0_113 = arith.constant 0 : index
    %232 = vector.load %arg7[%c0_112, %c0_113] : memref<32x256xf32, #tpu.memory_space<vmem>>, vector<32x256xf32>
    tpu.vector_store %arg7[%c0_112, %c0_113], %231 {strides = array<i32>} : memref<32x256xf32, #tpu.memory_space<vmem>>, vector<32x256xf32>,
    return
  }
  func.func @transform_0(%arg0: i32) -> (i32, i32) {
    %c0_i32 = arith.constant 0 : i32
    %c0_i32_0 = arith.constant 0 : i32
    %c0_i32_1 = arith.constant 0 : i32
    return %c0_i32, %c0_i32_0 : i32, i32
  }
  func.func @transform_1(%arg0: i32) -> (i32, i32, i32) {
    %c0_i32 = arith.constant 0 : i32
    %c0_i32_0 = arith.constant 0 : i32
    %c0_i32_1 = arith.constant 0 : i32
    %c0_i32_2 = arith.constant 0 : i32
    return %c0_i32, %c0_i32_0, %c0_i32_1 : i32, i32, i32
  }
  func.func @transform_2(%arg0: i32) -> (i32, i32) {
    %c0_i32 = arith.constant 0 : i32
    %c0_i32_0 = arith.constant 0 : i32
    %c0_i32_1 = arith.constant 0 : i32
    return %c0_i32, %c0_i32_0 : i32, i32
  }
  func.func @transform_3(%arg0: i32) -> (i32, i32, i32) {
    %c0_i32 = arith.constant 0 : i32
    %c0_i32_0 = arith.constant 0 : i32
    %c0_i32_1 = arith.constant 0 : i32
    %c0_i32_2 = arith.constant 0 : i32
    return %c0_i32, %c0_i32_0, %c0_i32_1 : i32, i32, i32
  }
  func.func @transform_4(%arg0: i32) -> (i32, i32) {
    %c0_i32 = arith.constant 0 : i32
    %c0_i32_0 = arith.constant 0 : i32
    %c0_i32_1 = arith.constant 0 : i32
    return %c0_i32, %c0_i32_0 : i32, i32
  }
  func.func @transform_5(%arg0: i32) -> (i32, i32) {
    %c0_i32 = arith.constant 0 : i32
    %c0_i32_0 = arith.constant 0 : i32
    %c0_i32_1 = arith.constant 0 : i32
    return %c0_i32, %c0_i32_0 : i32, i32
  }
  func.func @transform_6(%arg0: i32) -> (i32, i32) {
    %c0_i32 = arith.constant 0 : i32
    %c0_i32_0 = arith.constant 0 : i32
    %c0_i32_1 = arith.constant 0 : i32
    return %c0_i32, %c0_i32_0 : i32, i32
  }
}

</mosaic_0001>

<llo_original>
// kernel: tpu_custom_call.1
$region0: #{tpu_custom_call.1}
  #allocation0 [shape = 'u32[]', space=smem, size = 0x4, offset = 0x4, fixed_abs, tag = 'smem constant byte address 0x4 - core index']
  #allocation1 [shape = 'u32[144,128]{1,0:T(1,128)}', space=vmem, size = 0x12000, scoped, tag = 'internal scratch']
  %s0 = inlined_call_operand.hbm [shape: f32[32,256], index: 0, kind: input, shape index: {}]
  %s1 = inlined_call_operand.hbm [shape: bf16[9,16,16], index: 1, kind: input, shape index: {}]
  %s2 = inlined_call_operand.vmem [shape: f32[16,1], index: 2, kind: input, shape index: {}]
  %s3 = inlined_call_operand.hbm [shape: bf16[9,16,16], index: 3, kind: input, shape index: {}]
  %s4 = inlined_call_operand.vmem [shape: f32[16,1], index: 4, kind: input, shape index: {}]
  %s5 = inlined_call_operand.vmem [shape: f32[9,256], index: 5, kind: input, shape index: {}]
  %s6 = inlined_call_operand.hbm [shape: f32[32,256], index: 6, kind: output, shape index: {}]
  %s7 = sld [smem:[#allocation0]]
  $region46: #{tpu_custom_call.1} parent=0
    _
  %s9 = ssub.s32 1, %s7
  %s10 = scalar_select 0, %s9, %s7
  $region1: #{tpu_custom_call.1} parent=0
    #allocation2 [shape = 'u8[32768]{0}', space=vmem, size = 0x8000, scoped, tag = 'input window, operand 0, single buffered']
    #allocation3 [shape = 's32[1]{0}', space=sflag, size = 0x4, scoped, tag = 'scoped memory for tpu_custom_call.1']
    #allocation4 [shape = 's32[1]{0}', space=sflag, size = 0x4, scoped, tag = 'scoped memory for tpu_custom_call.1']
    #allocation5 [shape = 'u8[36864]{0}', space=vmem, size = 0x9000, scoped, tag = 'input window, operand 1, single buffered']
    #allocation6 [shape = 's32[1]{0}', space=sflag, size = 0x4, scoped, tag = 'scoped memory for tpu_custom_call.1']
    #allocation7 [shape = 'u8[36864]{0}', space=vmem, size = 0x9000, scoped, tag = 'input window, operand 3, single buffered']
    #allocation8 [shape = 'u8[32768]{0}', space=vmem, size = 0x8000, scoped, tag = 'output window, operand 0, single buffered']
    %11 = vsyncpa [#allocation3], 0
    %12 = vsyncpa [#allocation6], 0
    %13 = vsyncpa [#allocation4], 0
    // Predicated region
    $region2: #{tpu_custom_call.1} parent=1 // pred_check
      _
    $region3: #{tpu_custom_call.1} parent=1 // pred_check_branch
      %15 = sbr.rel (0) target = $region5
    $region4: #{tpu_custom_call.1} parent=1 // pred_region
      %s17 = ssub.s32 1024, 1024
      %18 = vsyncadd [#allocation3], %s17
      %s19 = sshll.u32 [#allocation2], 4
      %s20 = int_to_ptr.vmem [resolvable:$true] %s19
      %25 = dma.hbm_to_vmem [thread:$0]  %s0, 1024, %s20, [#allocation3], 256, 256, 16
    $region5: #{tpu_custom_call.1} parent=1 // pred_fallthru
      _
    // Predicated region
    $region6: #{tpu_custom_call.1} parent=1 // pred_check
      _
    $region7: #{tpu_custom_call.1} parent=1 // pred_check_branch
      %27 = sbr.rel (0) target = $region9
    $region8: #{tpu_custom_call.1} parent=1 // pred_region
      %s29 = ssub.s32 1152, 1152
      %30 = vsyncadd [#allocation6], %s29
      %s31 = sshll.u32 [#allocation5], 4
      %s32 = int_to_ptr.vmem [resolvable:$true] %s31
      %37 = dma.hbm_to_vmem [thread:$0]  %s1, 1152, %s32, [#allocation6], 64, 64, 4
    $region9: #{tpu_custom_call.1} parent=1 // pred_fallthru
      _
    // Predicated region
    $region10: #{tpu_custom_call.1} parent=1 // pred_check
      _
    $region11: #{tpu_custom_call.1} parent=1 // pred_check_branch
      %39 = sbr.rel (0) target = $region13
    $region12: #{tpu_custom_call.1} parent=1 // pred_region
      _
    $region13: #{tpu_custom_call.1} parent=1 // pred_fallthru
      _
    // Predicated region
    $region14: #{tpu_custom_call.1} parent=1 // pred_check
      _
    $region15: #{tpu_custom_call.1} parent=1 // pred_check_branch
      %41 = sbr.rel (0) target = $region17
    $region16: #{tpu_custom_call.1} parent=1 // pred_region
      %s43 = ssub.s32 1152, 1152
      %44 = vsyncadd [#allocation6], %s43
      %s45 = sshll.u32 [#allocation7], 4
      %s46 = int_to_ptr.vmem [resolvable:$true] %s45
      %51 = dma.hbm_to_vmem [thread:$0]  %s3, 1152, %s46, [#allocation6], 64, 64, 4
    $region17: #{tpu_custom_call.1} parent=1 // pred_fallthru
      _
    // Predicated region
    $region18: #{tpu_custom_call.1} parent=1 // pred_check
      _
    $region19: #{tpu_custom_call.1} parent=1 // pred_check_branch
      %53 = sbr.rel (0) target = $region21
    $region20: #{tpu_custom_call.1} parent=1 // pred_region
      _
    $region21: #{tpu_custom_call.1} parent=1 // pred_fallthru
      _
    // Predicated region
    $region22: #{tpu_custom_call.1} parent=1 // pred_check
      _
    $region23: #{tpu_custom_call.1} parent=1 // pred_check_branch
      %55 = sbr.rel (0) target = $region25
    $region24: #{tpu_custom_call.1} parent=1 // pred_region
      _
    $region25: #{tpu_custom_call.1} parent=1 // pred_fallthru
      _
    // Predicated region
    $region26: #{tpu_custom_call.1} parent=1 // pred_check
      _
    $region27: #{tpu_custom_call.1} parent=1 // pred_check_branch
      %57 = sbr.rel (0) target = $region29
    $region28: #{tpu_custom_call.1} parent=1 // pred_region
      %58 = dma.done [#allocation3], 1024
    $region29: #{tpu_custom_call.1} parent=1 // pred_fallthru
      _
    // Predicated region
    $region30: #{tpu_custom_call.1} parent=1 // pred_check
      _
    $region31: #{tpu_custom_call.1} parent=1 // pred_check_branch
      %60 = sbr.rel (0) target = $region33
    $region32: #{tpu_custom_call.1} parent=1 // pred_region
      %61 = dma.done [#allocation6], 1152
    $region33: #{tpu_custom_call.1} parent=1 // pred_fallthru
      _
    // Predicated region
    $region34: #{tpu_custom_call.1} parent=1 // pred_check
      _
    $region35: #{tpu_custom_call.1} parent=1 // pred_check_branch
      %63 = sbr.rel (0) target = $region37
    $region36: #{tpu_custom_call.1} parent=1 // pred_region
      %64 = dma.done [#allocation6], 1152
    $region37: #{tpu_custom_call.1} parent=1 // pred_fallthru
      _
    %v66 = vld [vmem:[#allocation2] sm:$0xff]
    %v67 = vld [vmem:[#allocation2 + $0x8] sm:$0xff]
    %v68 = vld [vmem:[#allocation2 + $0x10] sm:$0xff]
    %v69 = vld [vmem:[#allocation2 + $0x18] sm:$0xff]
    %v70 = vld [vmem:[#allocation2 + $0x20] sm:$0xff]
    %v71 = vld [vmem:[#allocation2 + $0x28] sm:$0xff]
    %v72 = vld [vmem:[#allocation2 + $0x30] sm:$0xff]
    %v73 = vld [vmem:[#allocation2 + $0x38] sm:$0xff]
    %v74 = vld [vmem:[%s5] ss:$8 sm:$0x3]
    %s75 = scalar_lea.vmem %s5, 1
    %v76 = vld [vmem:[%s75] ss:$8 sm:$0x3]
    %s77 = scalar_lea.vmem %s5, 2
    %v78 = vld [vmem:[%s77] ss:$8 sm:$0x3]
    %s79 = scalar_lea.vmem %s5, 3
    %v80 = vld [vmem:[%s79] ss:$8 sm:$0x3]
    %s81 = scalar_lea.vmem %s5, 5
    %v82 = vld [vmem:[%s81] ss:$8 sm:$0x3]
    %s83 = scalar_lea.vmem %s5, 6
    %v84 = vld [vmem:[%s83] ss:$8 sm:$0x3]
    %s85 = scalar_lea.vmem %s5, 7
    %v86 = vld [vmem:[%s85] ss:$8 sm:$0x3]
    %s87 = scalar_lea.vmem %s5, 16
    %v88 = vld [vmem:[%s87] ss:$8 sm:$0x3]
    %89 = vrot.lane.b32.xlu0 %v66, 17
    %v90 = vpop.permute.xlu0 %89
    %91 = vrot.lane.b32.xlu0 %v68, 17
    %v92 = vpop.permute.xlu0 %91
    %93 = vrot.lane.b32.xlu0 %v70, 17
    %v94 = vpop.permute.xlu0 %93
    %95 = vrot.lane.b32.xlu0 %v72, 17
    %v96 = vpop.permute.xlu0 %95
    %97 = vrot.lane.b32.xlu0 %v67, 17
    %v98 = vpop.permute.xlu0 %97
    %99 = vrot.lane.b32.xlu0 %v69, 17
    %v100 = vpop.permute.xlu0 %99
    %101 = vrot.lane.b32.xlu0 %v71, 17
    %v102 = vpop.permute.xlu0 %101
    %103 = vrot.lane.b32.xlu0 %v73, 17
    %v104 = vpop.permute.xlu0 %103
    %v105 = vlaneseq
    %v106 = vand.u32 %v105, 127
    %vm107 = vcmp.lt.s32.totalorder %v106, 17
    %v108 = vsel %vm107, %v90, %v98
    %v109 = vsel %vm107, %v92, %v100
    %v110 = vsel %vm107, %v94, %v102
    %v111 = vsel %vm107, %v96, %v104
    %v112 = vsel %vm107, %v98, %v90
    %v113 = vsel %vm107, %v100, %v92
    %v114 = vsel %vm107, %v102, %v94
    %v115 = vsel %vm107, %v104, %v96
    %v117 = vlaneseq
    %v118 = vshrl.u32 %v117, 7
    %v119 = vsub.s32 0, %v118
    %v120 = vrot.slane %v74, %v119
    %v121 = vlaneseq
    %v122 = vshrl.u32 %v121, 7
    %v123 = vsub.s32 1, %v122
    %v124 = vrot.slane %v74, %v123
    %v127 = vmul.f32 %v112, %v120
    %v128 = vmul.f32 %v108, %v124
    %v129 = vmul.f32 %v113, %v120
    %v130 = vmul.f32 %v109, %v124
    %v131 = vmul.f32 %v114, %v120
    %v132 = vmul.f32 %v110, %v124
    %v133 = vmul.f32 %v115, %v120
    %v134 = vmul.f32 %v111, %v124
    %v135 = vpack.c.bf16 %v129, %v127
    %v136 = vpack.c.bf16 %v130, %v128
    %v137 = vpack.c.bf16 %v133, %v131
    %v138 = vpack.c.bf16 %v134, %v132
    %v139 = vld [vmem:[#allocation5] sm:$0xf]
    %v140 = vld [vmem:[#allocation5 + $0x4] sm:$0xf]
    %141 = vrot.lane.b32.xlu0 %v66, 16
    %v142 = vpop.permute.xlu0 %141
    %143 = vrot.lane.b32.xlu0 %v68, 16
    %v144 = vpop.permute.xlu0 %143
    %145 = vrot.lane.b32.xlu0 %v70, 16
    %v146 = vpop.permute.xlu0 %145
    %147 = vrot.lane.b32.xlu0 %v72, 16
    %v148 = vpop.permute.xlu0 %147
    %149 = vrot.lane.b32.xlu0 %v67, 16
    %v150 = vpop.permute.xlu0 %149
    %151 = vrot.lane.b32.xlu0 %v69, 16
    %v152 = vpop.permute.xlu0 %151
    %153 = vrot.lane.b32.xlu0 %v71, 16
    %v154 = vpop.permute.xlu0 %153
    %155 = vrot.lane.b32.xlu0 %v73, 16
    %v156 = vpop.permute.xlu0 %155
    %vm157 = vcmp.lt.s32.totalorder %v106, 16
    %v158 = vsel %vm157, %v142, %v150
    %v159 = vsel %vm157, %v144, %v152
    %v160 = vsel %vm157, %v146, %v154
    %v161 = vsel %vm157, %v148, %v156
    %v162 = vsel %vm157, %v150, %v142
    %v163 = vsel %vm157, %v152, %v144
    %v164 = vsel %vm157, %v154, %v146
    %v165 = vsel %vm157, %v156, %v148
    %v167 = vlaneseq
    %v168 = vshrl.u32 %v167, 7
    %v169 = vsub.s32 0, %v168
    %v170 = vrot.slane %v76, %v169
    %v171 = vlaneseq
    %v172 = vshrl.u32 %v171, 7
    %v173 = vsub.s32 1, %v172
    %v174 = vrot.slane %v76, %v173
    %v177 = vmul.f32 %v162, %v170
    %v178 = vmul.f32 %v158, %v174
    %v179 = vmul.f32 %v163, %v170
    %v180 = vmul.f32 %v159, %v174
    %v181 = vmul.f32 %v164, %v170
    %v182 = vmul.f32 %v160, %v174
    %v183 = vmul.f32 %v165, %v170
    %v184 = vmul.f32 %v161, %v174
    %v185 = vpack.c.bf16 %v179, %v177
    %v186 = vpack.c.bf16 %v180, %v178
    %v187 = vpack.c.bf16 %v183, %v181
    %v188 = vpack.c.bf16 %v184, %v182
    %s189 = scalar_lea.vmem [#allocation5], 8
    %v190 = vld [vmem:[%s189] sm:$0xf]
    %v191 = vld [vmem:[%s189 + $0x4] sm:$0xf]
    %v194 = vunpack.c.l.b16 %v190
    %v195 = vunpack.c.l.b16 %v191
    %v196 = vpack.c.b16 %v195, %v194
    %vm197 = vcmask 130048
    %v199 = vsel %vm197, %v196, 0
    %201 = vmatprep.subr.bf16.mxu0 %v186
    %202 = vmatpush1.bf16.msra.mxu0 %v185
    %203 = vmatprep.subr.bf16.mxu0 0
    %204 = vmatpush1.bf16.msra.mxu0 0
    %205 = vmatprep.subr.bf16.mxu0 0
    %206 = vmatpush1.bf16.msra.mxu0 0
    %207 = vmatprep.subr.bf16.mxu0 0
    %208 = vmatpush1.bf16.msra.mxu0 0
    %209 = vmatprep.subr.bf16.mxu0 0
    %210 = vmatpush1.bf16.msra.mxu0 0
    %211 = vmatprep.subr.bf16.mxu0 0
    %212 = vmatpush1.bf16.msra.mxu0 0
    %213 = vmatprep.subr.bf16.mxu0 0
    %214 = vmatpush1.bf16.msra.mxu0 0
    %215 = vmatprep.subr.bf16.mxu0 0
    %216 = vmatpush1.bf16.msra.mxu0 0
    %217 = vmatprep.subr.bf16.mxu0 0
    %218 = vmatpush1.bf16.msra.mxu0 0
    %219 = vmatprep.subr.bf16.mxu0 0
    %220 = vmatpush1.bf16.msra.mxu0 0
    %221 = vmatprep.subr.bf16.mxu0 0
    %222 = vmatpush1.bf16.msra.mxu0 0
    %223 = vmatprep.subr.bf16.mxu0 0
    %224 = vmatpush1.bf16.msra.mxu0 0
    %225 = vmatprep.subr.bf16.mxu0 0
    %226 = vmatpush1.bf16.msra.mxu0 0
    %227 = vmatprep.subr.bf16.mxu0 0
    %228 = vmatpush1.bf16.msra.mxu0 0
    %229 = vmatprep.subr.bf16.mxu0 0
    %230 = vmatpush1.bf16.msra.mxu0 0
    %231 = vmatprep.subr.bf16.mxu0 0
    %232 = vmatpush1.bf16.msra.mxu0 0
    %233 = vmatprep.mubr.bf16.mxu0 0
    %234 = vmatmul.mubr.bf16.gmra.mrb[0].mxu0 %v199
    %v235 = vpop.f32.mrb[0].mxu0
    %v236 = vadd.f32 0.0, %v235
    %v237 = vpop.f32.mrb[0].mxu0
    %v238 = vadd.f32 0.0, %v237
    %v239 = vpop.f32.mrb[0].mxu0
    %v240 = vadd.f32 0.0, %v239
    %v241 = vpop.f32.mrb[0].mxu0
    %v242 = vadd.f32 0.0, %v241
    %243 = vdwg.mxu0
    %v246 = vunpack.c.l.b16 %v139
    %v247 = vunpack.c.l.b16 %v140
    %v248 = vpack.c.b16 %v247, %v246
    %v250 = vsel %vm197, %v248, 0
    %252 = vmatprep.subr.bf16.mxu0 %v136
    %253 = vmatpush1.bf16.msra.mxu0 %v135
    %254 = vmatprep.subr.bf16.mxu0 0
    %255 = vmatpush1.bf16.msra.mxu0 0
    %256 = vmatprep.subr.bf16.mxu0 0
    %257 = vmatpush1.bf16.msra.mxu0 0
    %258 = vmatprep.subr.bf16.mxu0 0
    %259 = vmatpush1.bf16.msra.mxu0 0
    %260 = vmatprep.subr.bf16.mxu0 0
    %261 = vmatpush1.bf16.msra.mxu0 0
    %262 = vmatprep.subr.bf16.mxu0 0
    %263 = vmatpush1.bf16.msra.mxu0 0
    %264 = vmatprep.subr.bf16.mxu0 0
    %265 = vmatpush1.bf16.msra.mxu0 0
    %266 = vmatprep.subr.bf16.mxu0 0
    %267 = vmatpush1.bf16.msra.mxu0 0
    %268 = vmatprep.subr.bf16.mxu0 0
    %269 = vmatpush1.bf16.msra.mxu0 0
    %270 = vmatprep.subr.bf16.mxu0 0
    %271 = vmatpush1.bf16.msra.mxu0 0
    %272 = vmatprep.subr.bf16.mxu0 0
    %273 = vmatpush1.bf16.msra.mxu0 0
    %274 = vmatprep.subr.bf16.mxu0 0
    %275 = vmatpush1.bf16.msra.mxu0 0
    %276 = vmatprep.subr.bf16.mxu0 0
    %277 = vmatpush1.bf16.msra.mxu0 0
    %278 = vmatprep.subr.bf16.mxu0 0
    %279 = vmatpush1.bf16.msra.mxu0 0
    %280 = vmatprep.subr.bf16.mxu0 0
    %281 = vmatpush1.bf16.msra.mxu0 0
    %282 = vmatprep.subr.bf16.mxu0 0
    %283 = vmatpush1.bf16.msra.mxu0 0
    %284 = vmatprep.mubr.bf16.mxu0 0
    %285 = vmatmul.mubr.bf16.gmra.mrb[0].mxu0 %v250
    %v286 = vpop.f32.mrb[0].mxu0
    %v287 = vadd.f32 %v236, %v286
    %v288 = vpop.f32.mrb[0].mxu0
    %v289 = vadd.f32 %v238, %v288
    %v290 = vpop.f32.mrb[0].mxu0
    %v291 = vadd.f32 %v240, %v290
    %v292 = vpop.f32.mrb[0].mxu0
    %v293 = vadd.f32 %v242, %v292
    %294 = vdwg.mxu0
    %295 = vmatprep.subr.bf16.mxu0 %v188
    %296 = vmatpush1.bf16.msra.mxu0 %v187
    %297 = vmatprep.subr.bf16.mxu0 0
    %298 = vmatpush1.bf16.msra.mxu0 0
    %299 = vmatprep.subr.bf16.mxu0 0
    %300 = vmatpush1.bf16.msra.mxu0 0
    %301 = vmatprep.subr.bf16.mxu0 0
    %302 = vmatpush1.bf16.msra.mxu0 0
    %303 = vmatprep.subr.bf16.mxu0 0
    %304 = vmatpush1.bf16.msra.mxu0 0
    %305 = vmatprep.subr.bf16.mxu0 0
    %306 = vmatpush1.bf16.msra.mxu0 0
    %307 = vmatprep.subr.bf16.mxu0 0
    %308 = vmatpush1.bf16.msra.mxu0 0
    %309 = vmatprep.subr.bf16.mxu0 0
    %310 = vmatpush1.bf16.msra.mxu0 0
    %311 = vmatprep.subr.bf16.mxu0 0
    %312 = vmatpush1.bf16.msra.mxu0 0
    %313 = vmatprep.subr.bf16.mxu0 0
    %314 = vmatpush1.bf16.msra.mxu0 0
    %315 = vmatprep.subr.bf16.mxu0 0
    %316 = vmatpush1.bf16.msra.mxu0 0
    %317 = vmatprep.subr.bf16.mxu0 0
    %318 = vmatpush1.bf16.msra.mxu0 0
    %319 = vmatprep.subr.bf16.mxu0 0
    %320 = vmatpush1.bf16.msra.mxu0 0
    %321 = vmatprep.subr.bf16.mxu0 0
    %322 = vmatpush1.bf16.msra.mxu0 0
    %323 = vmatprep.subr.bf16.mxu0 0
    %324 = vmatpush1.bf16.msra.mxu0 0
    %325 = vmatprep.subr.bf16.mxu0 0
    %326 = vmatpush1.bf16.msra.mxu0 0
    %327 = vmatprep.mubr.bf16.mxu0 0
    %328 = vmatmul.mubr.bf16.gmra.mrb[0].mxu0 %v199
    %v329 = vpop.f32.mrb[0].mxu0
    %v330 = vadd.f32 0.0, %v329
    %v331 = vpop.f32.mrb[0].mxu0
    %v332 = vadd.f32 0.0, %v331
    %v333 = vpop.f32.mrb[0].mxu0
    %v334 = vadd.f32 0.0, %v333
    %v335 = vpop.f32.mrb[0].mxu0
    %v336 = vadd.f32 0.0, %v335
    %337 = vdwg.mxu0
    %338 = vmatprep.subr.bf16.mxu0 %v138
    %339 = vmatpush1.bf16.msra.mxu0 %v137
    %340 = vmatprep.subr.bf16.mxu0 0
    %341 = vmatpush1.bf16.msra.mxu0 0
    %342 = vmatprep.subr.bf16.mxu0 0
    %343 = vmatpush1.bf16.msra.mxu0 0
    %344 = vmatprep.subr.bf16.mxu0 0
    %345 = vmatpush1.bf16.msra.mxu0 0
    %346 = vmatprep.subr.bf16.mxu0 0
    %347 = vmatpush1.bf16.msra.mxu0 0
    %348 = vmatprep.subr.bf16.mxu0 0
    %349 = vmatpush1.bf16.msra.mxu0 0
    %350 = vmatprep.subr.bf16.mxu0 0
    %351 = vmatpush1.bf16.msra.mxu0 0
    %352 = vmatprep.subr.bf16.mxu0 0
    %353 = vmatpush1.bf16.msra.mxu0 0
    %354 = vmatprep.subr.bf16.mxu0 0
    %355 = vmatpush1.bf16.msra.mxu0 0
    %356 = vmatprep.subr.bf16.mxu0 0
    %357 = vmatpush1.bf16.msra.mxu0 0
    %358 = vmatprep.subr.bf16.mxu0 0
    %359 = vmatpush1.bf16.msra.mxu0 0
    %360 = vmatprep.subr.bf16.mxu0 0
    %361 = vmatpush1.bf16.msra.mxu0 0
    %362 = vmatprep.subr.bf16.mxu0 0
    %363 = vmatpush1.bf16.msra.mxu0 0
    %364 = vmatprep.subr.bf16.mxu0 0
    %365 = vmatpush1.bf16.msra.mxu0 0
    %366 = vmatprep.subr.bf16.mxu0 0
    %367 = vmatpush1.bf16.msra.mxu0 0
    %368 = vmatprep.subr.bf16.mxu0 0
    %369 = vmatpush1.bf16.msra.mxu0 0
    %370 = vmatprep.mubr.bf16.mxu0 0
    %371 = vmatmul.mubr.bf16.gmra.mrb[0].mxu0 %v250
    %v372 = vpop.f32.mrb[0].mxu0
    %v373 = vadd.f32 %v330, %v372
    %v374 = vpop.f32.mrb[0].mxu0
    %v375 = vadd.f32 %v332, %v374
    %v376 = vpop.f32.mrb[0].mxu0
    %v377 = vadd.f32 %v334, %v376
    %v378 = vpop.f32.mrb[0].mxu0
    %v379 = vadd.f32 %v336, %v378
    %380 = vdwg.mxu0
    %381 = vrot.lane.b32.xlu0 %v66, 15
    %v382 = vpop.permute.xlu0 %381
    %383 = vrot.lane.b32.xlu0 %v68, 15
    %v384 = vpop.permute.xlu0 %383
    %385 = vrot.lane.b32.xlu0 %v70, 15
    %v386 = vpop.permute.xlu0 %385
    %387 = vrot.lane.b32.xlu0 %v72, 15
    %v388 = vpop.permute.xlu0 %387
    %389 = vrot.lane.b32.xlu0 %v67, 15
    %v390 = vpop.permute.xlu0 %389
    %391 = vrot.lane.b32.xlu0 %v69, 15
    %v392 = vpop.permute.xlu0 %391
    %393 = vrot.lane.b32.xlu0 %v71, 15
    %v394 = vpop.permute.xlu0 %393
    %395 = vrot.lane.b32.xlu0 %v73, 15
    %v396 = vpop.permute.xlu0 %395
    %vm397 = vcmp.lt.s32.totalorder %v106, 15
    %v398 = vsel %vm397, %v382, %v390
    %v399 = vsel %vm397, %v384, %v392
    %v400 = vsel %vm397, %v386, %v394
    %v401 = vsel %vm397, %v388, %v396
    %v402 = vsel %vm397, %v390, %v382
    %v403 = vsel %vm397, %v392, %v384
    %v404 = vsel %vm397, %v394, %v386
    %v405 = vsel %vm397, %v396, %v388
    %v407 = vlaneseq
    %v408 = vshrl.u32 %v407, 7
    %v409 = vsub.s32 0, %v408
    %v410 = vrot.slane %v78, %v409
    %v411 = vlaneseq
    %v412 = vshrl.u32 %v411, 7
    %v413 = vsub.s32 1, %v412
    %v414 = vrot.slane %v78, %v413
    %v417 = vmul.f32 %v402, %v410
    %v418 = vmul.f32 %v398, %v414
    %v419 = vmul.f32 %v403, %v410
    %v420 = vmul.f32 %v399, %v414
    %v421 = vmul.f32 %v404, %v410
    %v422 = vmul.f32 %v400, %v414
    %v423 = vmul.f32 %v405, %v410
    %v424 = vmul.f32 %v401, %v414
    %v425 = vpack.c.bf16 %v419, %v417
    %v426 = vpack.c.bf16 %v420, %v418
    %v427 = vpack.c.bf16 %v423, %v421
    %v428 = vpack.c.bf16 %v424, %v422
    %s429 = scalar_lea.vmem [#allocation5], 16
    %v430 = vld [vmem:[%s429] sm:$0xf]
    %v431 = vld [vmem:[%s429 + $0x4] sm:$0xf]
    %v434 = vunpack.c.l.b16 %v430
    %v435 = vunpack.c.l.b16 %v431
    %v436 = vpack.c.b16 %v435, %v434
    %v438 = vsel %vm197, %v436, 0
    %440 = vmatprep.subr.bf16.mxu0 %v426
    %441 = vmatpush1.bf16.msra.mxu0 %v425
    %442 = vmatprep.subr.bf16.mxu0 0
    %443 = vmatpush1.bf16.msra.mxu0 0
    %444 = vmatprep.subr.bf16.mxu0 0
    %445 = vmatpush1.bf16.msra.mxu0 0
    %446 = vmatprep.subr.bf16.mxu0 0
    %447 = vmatpush1.bf16.msra.mxu0 0
    %448 = vmatprep.subr.bf16.mxu0 0
    %449 = vmatpush1.bf16.msra.mxu0 0
    %450 = vmatprep.subr.bf16.mxu0 0
    %451 = vmatpush1.bf16.msra.mxu0 0
    %452 = vmatprep.subr.bf16.mxu0 0
    %453 = vmatpush1.bf16.msra.mxu0 0
    %454 = vmatprep.subr.bf16.mxu0 0
    %455 = vmatpush1.bf16.msra.mxu0 0
    %456 = vmatprep.subr.bf16.mxu0 0
    %457 = vmatpush1.bf16.msra.mxu0 0
    %458 = vmatprep.subr.bf16.mxu0 0
    %459 = vmatpush1.bf16.msra.mxu0 0
    %460 = vmatprep.subr.bf16.mxu0 0
    %461 = vmatpush1.bf16.msra.mxu0 0
    %462 = vmatprep.subr.bf16.mxu0 0
    %463 = vmatpush1.bf16.msra.mxu0 0
    %464 = vmatprep.subr.bf16.mxu0 0
    %465 = vmatpush1.bf16.msra.mxu0 0
    %466 = vmatprep.subr.bf16.mxu0 0
    %467 = vmatpush1.bf16.msra.mxu0 0
    %468 = vmatprep.subr.bf16.mxu0 0
    %469 = vmatpush1.bf16.msra.mxu0 0
    %470 = vmatprep.subr.bf16.mxu0 0
    %471 = vmatpush1.bf16.msra.mxu0 0
    %472 = vmatprep.mubr.bf16.mxu0 0
    %473 = vmatmul.mubr.bf16.gmra.mrb[0].mxu0 %v438
    %v474 = vpop.f32.mrb[0].mxu0
    %v475 = vadd.f32 0.0, %v474
    %v476 = vpop.f32.mrb[0].mxu0
    %v477 = vadd.f32 0.0, %v476
    %v478 = vpop.f32.mrb[0].mxu0
    %v479 = vadd.f32 0.0, %v478
    %v480 = vpop.f32.mrb[0].mxu0
    %v481 = vadd.f32 0.0, %v480
    %482 = vdwg.mxu0
    %v483 = vadd.f32 %v287, %v475
    %v484 = vadd.f32 %v289, %v477
    %v485 = vadd.f32 %v291, %v479
    %v486 = vadd.f32 %v293, %v481
    %487 = vmatprep.subr.bf16.mxu0 %v428
    %488 = vmatpush1.bf16.msra.mxu0 %v427
    %489 = vmatprep.subr.bf16.mxu0 0
    %490 = vmatpush1.bf16.msra.mxu0 0
    %491 = vmatprep.subr.bf16.mxu0 0
    %492 = vmatpush1.bf16.msra.mxu0 0
    %493 = vmatprep.subr.bf16.mxu0 0
    %494 = vmatpush1.bf16.msra.mxu0 0
    %495 = vmatprep.subr.bf16.mxu0 0
    %496 = vmatpush1.bf16.msra.mxu0 0
    %497 = vmatprep.subr.bf16.mxu0 0
    %498 = vmatpush1.bf16.msra.mxu0 0
    %499 = vmatprep.subr.bf16.mxu0 0
    %500 = vmatpush1.bf16.msra.mxu0 0
    %501 = vmatprep.subr.bf16.mxu0 0
    %502 = vmatpush1.bf16.msra.mxu0 0
    %503 = vmatprep.subr.bf16.mxu0 0
    %504 = vmatpush1.bf16.msra.mxu0 0
    %505 = vmatprep.subr.bf16.mxu0 0
    %506 = vmatpush1.bf16.msra.mxu0 0
    %507 = vmatprep.subr.bf16.mxu0 0
    %508 = vmatpush1.bf16.msra.mxu0 0
    %509 = vmatprep.subr.bf16.mxu0 0
    %510 = vmatpush1.bf16.msra.mxu0 0
    %511 = vmatprep.subr.bf16.mxu0 0
    %512 = vmatpush1.bf16.msra.mxu0 0
    %513 = vmatprep.subr.bf16.mxu0 0
    %514 = vmatpush1.bf16.msra.mxu0 0
    %515 = vmatprep.subr.bf16.mxu0 0
    %516 = vmatpush1.bf16.msra.mxu0 0
    %517 = vmatprep.subr.bf16.mxu0 0
    %518 = vmatpush1.bf16.msra.mxu0 0
    %519 = vmatprep.mubr.bf16.mxu0 0
    %520 = vmatmul.mubr.bf16.gmra.mrb[0].mxu0 %v438
    %v521 = vpop.f32.mrb[0].mxu0
    %v522 = vadd.f32 0.0, %v521
    %v523 = vpop.f32.mrb[0].mxu0
    %v524 = vadd.f32 0.0, %v523
    %v525 = vpop.f32.mrb[0].mxu0
    %v526 = vadd.f32 0.0, %v525
    %v527 = vpop.f32.mrb[0].mxu0
    %v528 = vadd.f32 0.0, %v527
    %529 = vdwg.mxu0
    %v530 = vadd.f32 %v373, %v522
    %v531 = vadd.f32 %v375, %v524
    %v532 = vadd.f32 %v377, %v526
    %v533 = vadd.f32 %v379, %v528
    %534 = vrot.lane.b32.xlu0 %v66, 1
    %v535 = vpop.permute.xlu0 %534
    %536 = vrot.lane.b32.xlu0 %v68, 1
    %v537 = vpop.permute.xlu0 %536
    %538 = vrot.lane.b32.xlu0 %v70, 1
    %v539 = vpop.permute.xlu0 %538
    %540 = vrot.lane.b32.xlu0 %v72, 1
    %v541 = vpop.permute.xlu0 %540
    %542 = vrot.lane.b32.xlu0 %v67, 1
    %v543 = vpop.permute.xlu0 %542
    %544 = vrot.lane.b32.xlu0 %v69, 1
    %v545 = vpop.permute.xlu0 %544
    %546 = vrot.lane.b32.xlu0 %v71, 1
    %v547 = vpop.permute.xlu0 %546
    %548 = vrot.lane.b32.xlu0 %v73, 1
    %v549 = vpop.permute.xlu0 %548
    %vm550 = vcmp.lt.s32.totalorder %v106, 1
    %v551 = vsel %vm550, %v535, %v543
    %v552 = vsel %vm550, %v537, %v545
    %v553 = vsel %vm550, %v539, %v547
    %v554 = vsel %vm550, %v541, %v549
    %v555 = vsel %vm550, %v543, %v535
    %v556 = vsel %vm550, %v545, %v537
    %v557 = vsel %vm550, %v547, %v539
    %v558 = vsel %vm550, %v549, %v541
    %v560 = vlaneseq
    %v561 = vshrl.u32 %v560, 7
    %v562 = vsub.s32 0, %v561
    %v563 = vrot.slane %v80, %v562
    %v564 = vlaneseq
    %v565 = vshrl.u32 %v564, 7
    %v566 = vsub.s32 1, %v565
    %v567 = vrot.slane %v80, %v566
    %v570 = vmul.f32 %v555, %v563
    %v571 = vmul.f32 %v551, %v567
    %v572 = vmul.f32 %v556, %v563
    %v573 = vmul.f32 %v552, %v567
    %v574 = vmul.f32 %v557, %v563
    %v575 = vmul.f32 %v553, %v567
    %v576 = vmul.f32 %v558, %v563
    %v577 = vmul.f32 %v554, %v567
    %v578 = vpack.c.bf16 %v572, %v570
    %v579 = vpack.c.bf16 %v573, %v571
    %v580 = vpack.c.bf16 %v576, %v574
    %v581 = vpack.c.bf16 %v577, %v575
    %s582 = scalar_lea.vmem [#allocation5], 24
    %v583 = vld [vmem:[%s582] sm:$0xf]
    %v584 = vld [vmem:[%s582 + $0x4] sm:$0xf]
    %v587 = vunpack.c.l.b16 %v583
    %v588 = vunpack.c.l.b16 %v584
    %v589 = vpack.c.b16 %v588, %v587
    %v591 = vsel %vm197, %v589, 0
    %593 = vmatprep.subr.bf16.mxu0 %v579
    %594 = vmatpush1.bf16.msra.mxu0 %v578
    %595 = vmatprep.subr.bf16.mxu0 0
    %596 = vmatpush1.bf16.msra.mxu0 0
    %597 = vmatprep.subr.bf16.mxu0 0
    %598 = vmatpush1.bf16.msra.mxu0 0
    %599 = vmatprep.subr.bf16.mxu0 0
    %600 = vmatpush1.bf16.msra.mxu0 0
    %601 = vmatprep.subr.bf16.mxu0 0
    %602 = vmatpush1.bf16.msra.mxu0 0
    %603 = vmatprep.subr.bf16.mxu0 0
    %604 = vmatpush1.bf16.msra.mxu0 0
    %605 = vmatprep.subr.bf16.mxu0 0
    %606 = vmatpush1.bf16.msra.mxu0 0
    %607 = vmatprep.subr.bf16.mxu0 0
    %608 = vmatpush1.bf16.msra.mxu0 0
    %609 = vmatprep.subr.bf16.mxu0 0
    %610 = vmatpush1.bf16.msra.mxu0 0
    %611 = vmatprep.subr.bf16.mxu0 0
    %612 = vmatpush1.bf16.msra.mxu0 0
    %613 = vmatprep.subr.bf16.mxu0 0
    %614 = vmatpush1.bf16.msra.mxu0 0
    %615 = vmatprep.subr.bf16.mxu0 0
    %616 = vmatpush1.bf16.msra.mxu0 0
    %617 = vmatprep.subr.bf16.mxu0 0
    %618 = vmatpush1.bf16.msra.mxu0 0
    %619 = vmatprep.subr.bf16.mxu0 0
    %620 = vmatpush1.bf16.msra.mxu0 0
    %621 = vmatprep.subr.bf16.mxu0 0
    %622 = vmatpush1.bf16.msra.mxu0 0
    %623 = vmatprep.subr.bf16.mxu0 0
    %624 = vmatpush1.bf16.msra.mxu0 0
    %625 = vmatprep.mubr.bf16.mxu0 0
    %626 = vmatmul.mubr.bf16.gmra.mrb[0].mxu0 %v591
    %v627 = vpop.f32.mrb[0].mxu0
    %v628 = vadd.f32 0.0, %v627
    %v629 = vpop.f32.mrb[0].mxu0
    %v630 = vadd.f32 0.0, %v629
    %v631 = vpop.f32.mrb[0].mxu0
    %v632 = vadd.f32 0.0, %v631
    %v633 = vpop.f32.mrb[0].mxu0
    %v634 = vadd.f32 0.0, %v633
    %635 = vdwg.mxu0
    %v636 = vadd.f32 %v483, %v628
    %v637 = vadd.f32 %v484, %v630
    %v638 = vadd.f32 %v485, %v632
    %v639 = vadd.f32 %v486, %v634
    %640 = vmatprep.subr.bf16.mxu0 %v581
    %641 = vmatpush1.bf16.msra.mxu0 %v580
    %642 = vmatprep.subr.bf16.mxu0 0
    %643 = vmatpush1.bf16.msra.mxu0 0
    %644 = vmatprep.subr.bf16.mxu0 0
    %645 = vmatpush1.bf16.msra.mxu0 0
    %646 = vmatprep.subr.bf16.mxu0 0
    %647 = vmatpush1.bf16.msra.mxu0 0
    %648 = vmatprep.subr.bf16.mxu0 0
    %649 = vmatpush1.bf16.msra.mxu0 0
    %650 = vmatprep.subr.bf16.mxu0 0
    %651 = vmatpush1.bf16.msra.mxu0 0
    %652 = vmatprep.subr.bf16.mxu0 0
    %653 = vmatpush1.bf16.msra.mxu0 0
    %654 = vmatprep.subr.bf16.mxu0 0
    %655 = vmatpush1.bf16.msra.mxu0 0
    %656 = vmatprep.subr.bf16.mxu0 0
    %657 = vmatpush1.bf16.msra.mxu0 0
    %658 = vmatprep.subr.bf16.mxu0 0
    %659 = vmatpush1.bf16.msra.mxu0 0
    %660 = vmatprep.subr.bf16.mxu0 0
    %661 = vmatpush1.bf16.msra.mxu0 0
    %662 = vmatprep.subr.bf16.mxu0 0
    %663 = vmatpush1.bf16.msra.mxu0 0
    %664 = vmatprep.subr.bf16.mxu0 0
    %665 = vmatpush1.bf16.msra.mxu0 0
    %666 = vmatprep.subr.bf16.mxu0 0
    %667 = vmatpush1.bf16.msra.mxu0 0
    %668 = vmatprep.subr.bf16.mxu0 0
    %669 = vmatpush1.bf16.msra.mxu0 0
    %670 = vmatprep.subr.bf16.mxu0 0
    %671 = vmatpush1.bf16.msra.mxu0 0
    %672 = vmatprep.mubr.bf16.mxu0 0
    %673 = vmatmul.mubr.bf16.gmra.mrb[0].mxu0 %v591
    %v674 = vpop.f32.mrb[0].mxu0
    %v675 = vadd.f32 0.0, %v674
    %v676 = vpop.f32.mrb[0].mxu0
    %v677 = vadd.f32 0.0, %v676
    %v678 = vpop.f32.mrb[0].mxu0
    %v679 = vadd.f32 0.0, %v678
    %v680 = vpop.f32.mrb[0].mxu0
    %v681 = vadd.f32 0.0, %v680
    %682 = vdwg.mxu0
    %v683 = vadd.f32 %v530, %v675
    %v684 = vadd.f32 %v531, %v677
    %v685 = vadd.f32 %v532, %v679
    %v686 = vadd.f32 %v533, %v681
    %v687 = vpack.c.bf16 %v68, %v66
    %v688 = vpack.c.bf16 %v69, %v67
    %v689 = vpack.c.bf16 %v72, %v70
    %v690 = vpack.c.bf16 %v73, %v71
    %s691 = scalar_lea.vmem [#allocation5], 32
    %v692 = vld [vmem:[%s691] sm:$0xf]
    %v693 = vld [vmem:[%s691 + $0x4] sm:$0xf]
    %v696 = vunpack.c.l.b16 %v692
    %v697 = vunpack.c.l.b16 %v693
    %v698 = vpack.c.b16 %v697, %v696
    %v700 = vsel %vm197, %v698, 0
    %702 = vmatprep.subr.bf16.mxu0 %v688
    %703 = vmatpush1.bf16.msra.mxu0 %v687
    %704 = vmatprep.subr.bf16.mxu0 0
    %705 = vmatpush1.bf16.msra.mxu0 0
    %706 = vmatprep.subr.bf16.mxu0 0
    %707 = vmatpush1.bf16.msra.mxu0 0
    %708 = vmatprep.subr.bf16.mxu0 0
    %709 = vmatpush1.bf16.msra.mxu0 0
    %710 = vmatprep.subr.bf16.mxu0 0
    %711 = vmatpush1.bf16.msra.mxu0 0
    %712 = vmatprep.subr.bf16.mxu0 0
    %713 = vmatpush1.bf16.msra.mxu0 0
    %714 = vmatprep.subr.bf16.mxu0 0
    %715 = vmatpush1.bf16.msra.mxu0 0
    %716 = vmatprep.subr.bf16.mxu0 0
    %717 = vmatpush1.bf16.msra.mxu0 0
    %718 = vmatprep.subr.bf16.mxu0 0
    %719 = vmatpush1.bf16.msra.mxu0 0
    %720 = vmatprep.subr.bf16.mxu0 0
    %721 = vmatpush1.bf16.msra.mxu0 0
    %722 = vmatprep.subr.bf16.mxu0 0
    %723 = vmatpush1.bf16.msra.mxu0 0
    %724 = vmatprep.subr.bf16.mxu0 0
    %725 = vmatpush1.bf16.msra.mxu0 0
    %726 = vmatprep.subr.bf16.mxu0 0
    %727 = vmatpush1.bf16.msra.mxu0 0
    %728 = vmatprep.subr.bf16.mxu0 0
    %729 = vmatpush1.bf16.msra.mxu0 0
    %730 = vmatprep.subr.bf16.mxu0 0
    %731 = vmatpush1.bf16.msra.mxu0 0
    %732 = vmatprep.subr.bf16.mxu0 0
    %733 = vmatpush1.bf16.msra.mxu0 0
    %734 = vmatprep.mubr.bf16.mxu0 0
    %735 = vmatmul.mubr.bf16.gmra.mrb[0].mxu0 %v700
    %v736 = vpop.f32.mrb[0].mxu0
    %v737 = vadd.f32 0.0, %v736
    %v738 = vpop.f32.mrb[0].mxu0
    %v739 = vadd.f32 0.0, %v738
    %v740 = vpop.f32.mrb[0].mxu0
    %v741 = vadd.f32 0.0, %v740
    %v742 = vpop.f32.mrb[0].mxu0
    %v743 = vadd.f32 0.0, %v742
    %744 = vdwg.mxu0
    %v745 = vadd.f32 %v636, %v737
    %v746 = vadd.f32 %v637, %v739
    %v747 = vadd.f32 %v638, %v741
    %v748 = vadd.f32 %v639, %v743
    %749 = vmatprep.subr.bf16.mxu0 %v690
    %750 = vmatpush1.bf16.msra.mxu0 %v689
    %751 = vmatprep.subr.bf16.mxu0 0
    %752 = vmatpush1.bf16.msra.mxu0 0
    %753 = vmatprep.subr.bf16.mxu0 0
    %754 = vmatpush1.bf16.msra.mxu0 0
    %755 = vmatprep.subr.bf16.mxu0 0
    %756 = vmatpush1.bf16.msra.mxu0 0
    %757 = vmatprep.subr.bf16.mxu0 0
    %758 = vmatpush1.bf16.msra.mxu0 0
    %759 = vmatprep.subr.bf16.mxu0 0
    %760 = vmatpush1.bf16.msra.mxu0 0
    %761 = vmatprep.subr.bf16.mxu0 0
    %762 = vmatpush1.bf16.msra.mxu0 0
    %763 = vmatprep.subr.bf16.mxu0 0
    %764 = vmatpush1.bf16.msra.mxu0 0
    %765 = vmatprep.subr.bf16.mxu0 0
    %766 = vmatpush1.bf16.msra.mxu0 0
    %767 = vmatprep.subr.bf16.mxu0 0
    %768 = vmatpush1.bf16.msra.mxu0 0
    %769 = vmatprep.subr.bf16.mxu0 0
    %770 = vmatpush1.bf16.msra.mxu0 0
    %771 = vmatprep.subr.bf16.mxu0 0
    %772 = vmatpush1.bf16.msra.mxu0 0
    %773 = vmatprep.subr.bf16.mxu0 0
    %774 = vmatpush1.bf16.msra.mxu0 0
    %775 = vmatprep.subr.bf16.mxu0 0
    %776 = vmatpush1.bf16.msra.mxu0 0
    %777 = vmatprep.subr.bf16.mxu0 0
    %778 = vmatpush1.bf16.msra.mxu0 0
    %779 = vmatprep.subr.bf16.mxu0 0
    %780 = vmatpush1.bf16.msra.mxu0 0
    %781 = vmatprep.mubr.bf16.mxu0 0
    %782 = vmatmul.mubr.bf16.gmra.mrb[0].mxu0 %v700
    %v783 = vpop.f32.mrb[0].mxu0
    %v784 = vadd.f32 0.0, %v783
    %v785 = vpop.f32.mrb[0].mxu0
    %v786 = vadd.f32 0.0, %v785
    %v787 = vpop.f32.mrb[0].mxu0
    %v788 = vadd.f32 0.0, %v787
    %v789 = vpop.f32.mrb[0].mxu0
    %v790 = vadd.f32 0.0, %v789
    %791 = vdwg.mxu0
    %v792 = vadd.f32 %v683, %v784
    %v793 = vadd.f32 %v684, %v786
    %v794 = vadd.f32 %v685, %v788
    %v795 = vadd.f32 %v686, %v790
    %796 = vrot.lane.b32.xlu0 %v66, 127
    %v797 = vpop.permute.xlu0 %796
    %798 = vrot.lane.b32.xlu0 %v68, 127
    %v799 = vpop.permute.xlu0 %798
    %800 = vrot.lane.b32.xlu0 %v70, 127
    %v801 = vpop.permute.xlu0 %800
    %802 = vrot.lane.b32.xlu0 %v72, 127
    %v803 = vpop.permute.xlu0 %802
    %804 = vrot.lane.b32.xlu0 %v67, 127
    %v805 = vpop.permute.xlu0 %804
    %806 = vrot.lane.b32.xlu0 %v69, 127
    %v807 = vpop.permute.xlu0 %806
    %808 = vrot.lane.b32.xlu0 %v71, 127
    %v809 = vpop.permute.xlu0 %808
    %810 = vrot.lane.b32.xlu0 %v73, 127
    %v811 = vpop.permute.xlu0 %810
    %vm812 = vcmp.lt.s32.totalorder %v106, 127
    %v813 = vsel %vm812, %v797, %v805
    %v814 = vsel %vm812, %v799, %v807
    %v815 = vsel %vm812, %v801, %v809
    %v816 = vsel %vm812, %v803, %v811
    %v817 = vsel %vm812, %v805, %v797
    %v818 = vsel %vm812, %v807, %v799
    %v819 = vsel %vm812, %v809, %v801
    %v820 = vsel %vm812, %v811, %v803
    %v822 = vlaneseq
    %v823 = vshrl.u32 %v822, 7
    %v824 = vsub.s32 0, %v823
    %v825 = vrot.slane %v82, %v824
    %v826 = vlaneseq
    %v827 = vshrl.u32 %v826, 7
    %v828 = vsub.s32 1, %v827
    %v829 = vrot.slane %v82, %v828
    %v832 = vmul.f32 %v813, %v825
    %v833 = vmul.f32 %v817, %v829
    %v834 = vmul.f32 %v814, %v825
    %v835 = vmul.f32 %v818, %v829
    %v836 = vmul.f32 %v815, %v825
    %v837 = vmul.f32 %v819, %v829
    %v838 = vmul.f32 %v816, %v825
    %v839 = vmul.f32 %v820, %v829
    %v840 = vpack.c.bf16 %v834, %v832
    %v841 = vpack.c.bf16 %v835, %v833
    %v842 = vpack.c.bf16 %v838, %v836
    %v843 = vpack.c.bf16 %v839, %v837
    %s844 = scalar_lea.vmem [#allocation5], 40
    %v845 = vld [vmem:[%s844] sm:$0xf]
    %v846 = vld [vmem:[%s844 + $0x4] sm:$0xf]
    %v849 = vunpack.c.l.b16 %v845
    %v850 = vunpack.c.l.b16 %v846
    %v851 = vpack.c.b16 %v850, %v849
    %v853 = vsel %vm197, %v851, 0
    %855 = vmatprep.subr.bf16.mxu0 %v841
    %856 = vmatpush1.bf16.msra.mxu0 %v840
    %857 = vmatprep.subr.bf16.mxu0 0
    %858 = vmatpush1.bf16.msra.mxu0 0
    %859 = vmatprep.subr.bf16.mxu0 0
    %860 = vmatpush1.bf16.msra.mxu0 0
    %861 = vmatprep.subr.bf16.mxu0 0
    %862 = vmatpush1.bf16.msra.mxu0 0
    %863 = vmatprep.subr.bf16.mxu0 0
    %864 = vmatpush1.bf16.msra.mxu0 0
    %865 = vmatprep.subr.bf16.mxu0 0
    %866 = vmatpush1.bf16.msra.mxu0 0
    %867 = vmatprep.subr.bf16.mxu0 0
    %868 = vmatpush1.bf16.msra.mxu0 0
    %869 = vmatprep.subr.bf16.mxu0 0
    %870 = vmatpush1.bf16.msra.mxu0 0
    %871 = vmatprep.subr.bf16.mxu0 0
    %872 = vmatpush1.bf16.msra.mxu0 0
    %873 = vmatprep.subr.bf16.mxu0 0
    %874 = vmatpush1.bf16.msra.mxu0 0
    %875 = vmatprep.subr.bf16.mxu0 0
    %876 = vmatpush1.bf16.msra.mxu0 0
    %877 = vmatprep.subr.bf16.mxu0 0
    %878 = vmatpush1.bf16.msra.mxu0 0
    %879 = vmatprep.subr.bf16.mxu0 0
    %880 = vmatpush1.bf16.msra.mxu0 0
    %881 = vmatprep.subr.bf16.mxu0 0
    %882 = vmatpush1.bf16.msra.mxu0 0
    %883 = vmatprep.subr.bf16.mxu0 0
    %884 = vmatpush1.bf16.msra.mxu0 0
    %885 = vmatprep.subr.bf16.mxu0 0
    %886 = vmatpush1.bf16.msra.mxu0 0
    %887 = vmatprep.mubr.bf16.mxu0 0
    %888 = vmatmul.mubr.bf16.gmra.mrb[0].mxu0 %v853
    %v889 = vpop.f32.mrb[0].mxu0
    %v890 = vadd.f32 0.0, %v889
    %v891 = vpop.f32.mrb[0].mxu0
    %v892 = vadd.f32 0.0, %v891
    %v893 = vpop.f32.mrb[0].mxu0
    %v894 = vadd.f32 0.0, %v893
    %v895 = vpop.f32.mrb[0].mxu0
    %v896 = vadd.f32 0.0, %v895
    %897 = vdwg.mxu0
    %v898 = vadd.f32 %v745, %v890
    %v899 = vadd.f32 %v746, %v892
    %v900 = vadd.f32 %v747, %v894
    %v901 = vadd.f32 %v748, %v896
    %902 = vmatprep.subr.bf16.mxu0 %v843
    %903 = vmatpush1.bf16.msra.mxu0 %v842
    %904 = vmatprep.subr.bf16.mxu0 0
    %905 = vmatpush1.bf16.msra.mxu0 0
    %906 = vmatprep.subr.bf16.mxu0 0
    %907 = vmatpush1.bf16.msra.mxu0 0
    %908 = vmatprep.subr.bf16.mxu0 0
    %909 = vmatpush1.bf16.msra.mxu0 0
    %910 = vmatprep.subr.bf16.mxu0 0
    %911 = vmatpush1.bf16.msra.mxu0 0
    %912 = vmatprep.subr.bf16.mxu0 0
    %913 = vmatpush1.bf16.msra.mxu0 0
    %914 = vmatprep.subr.bf16.mxu0 0
    %915 = vmatpush1.bf16.msra.mxu0 0
    %916 = vmatprep.subr.bf16.mxu0 0
    %917 = vmatpush1.bf16.msra.mxu0 0
    %918 = vmatprep.subr.bf16.mxu0 0
    %919 = vmatpush1.bf16.msra.mxu0 0
    %920 = vmatprep.subr.bf16.mxu0 0
    %921 = vmatpush1.bf16.msra.mxu0 0
    %922 = vmatprep.subr.bf16.mxu0 0
    %923 = vmatpush1.bf16.msra.mxu0 0
    %924 = vmatprep.subr.bf16.mxu0 0
    %925 = vmatpush1.bf16.msra.mxu0 0
    %926 = vmatprep.subr.bf16.mxu0 0
    %927 = vmatpush1.bf16.msra.mxu0 0
    %928 = vmatprep.subr.bf16.mxu0 0
    %929 = vmatpush1.bf16.msra.mxu0 0
    %930 = vmatprep.subr.bf16.mxu0 0
    %931 = vmatpush1.bf16.msra.mxu0 0
    %932 = vmatprep.subr.bf16.mxu0 0
    %933 = vmatpush1.bf16.msra.mxu0 0
    %934 = vmatprep.mubr.bf16.mxu0 0
    %935 = vmatmul.mubr.bf16.gmra.mrb[0].mxu0 %v853
    %v936 = vpop.f32.mrb[0].mxu0
    %v937 = vadd.f32 0.0, %v936
    %v938 = vpop.f32.mrb[0].mxu0
    %v939 = vadd.f32 0.0, %v938
    %v940 = vpop.f32.mrb[0].mxu0
    %v941 = vadd.f32 0.0, %v940
    %v942 = vpop.f32.mrb[0].mxu0
    %v943 = vadd.f32 0.0, %v942
    %944 = vdwg.mxu0
    %v945 = vadd.f32 %v792, %v937
    %v946 = vadd.f32 %v793, %v939
    %v947 = vadd.f32 %v794, %v941
    %v948 = vadd.f32 %v795, %v943
    %949 = vrot.lane.b32.xlu0 %v66, 113
    %v950 = vpop.permute.xlu0 %949
    %951 = vrot.lane.b32.xlu0 %v68, 113
    %v952 = vpop.permute.xlu0 %951
    %953 = vrot.lane.b32.xlu0 %v70, 113
    %v954 = vpop.permute.xlu0 %953
    %955 = vrot.lane.b32.xlu0 %v72, 113
    %v956 = vpop.permute.xlu0 %955
    %957 = vrot.lane.b32.xlu0 %v67, 113
    %v958 = vpop.permute.xlu0 %957
    %959 = vrot.lane.b32.xlu0 %v69, 113
    %v960 = vpop.permute.xlu0 %959
    %961 = vrot.lane.b32.xlu0 %v71, 113
    %v962 = vpop.permute.xlu0 %961
    %963 = vrot.lane.b32.xlu0 %v73, 113
    %v964 = vpop.permute.xlu0 %963
    %vm965 = vcmp.lt.s32.totalorder %v106, 113
    %v966 = vsel %vm965, %v950, %v958
    %v967 = vsel %vm965, %v952, %v960
    %v968 = vsel %vm965, %v954, %v962
    %v969 = vsel %vm965, %v956, %v964
    %v970 = vsel %vm965, %v958, %v950
    %v971 = vsel %vm965, %v960, %v952
    %v972 = vsel %vm965, %v962, %v954
    %v973 = vsel %vm965, %v964, %v956
    %v975 = vlaneseq
    %v976 = vshrl.u32 %v975, 7
    %v977 = vsub.s32 0, %v976
    %v978 = vrot.slane %v84, %v977
    %v979 = vlaneseq
    %v980 = vshrl.u32 %v979, 7
    %v981 = vsub.s32 1, %v980
    %v982 = vrot.slane %v84, %v981
    %v985 = vmul.f32 %v966, %v978
    %v986 = vmul.f32 %v970, %v982
    %v987 = vmul.f32 %v967, %v978
    %v988 = vmul.f32 %v971, %v982
    %v989 = vmul.f32 %v968, %v978
    %v990 = vmul.f32 %v972, %v982
    %v991 = vmul.f32 %v969, %v978
    %v992 = vmul.f32 %v973, %v982
    %v993 = vpack.c.bf16 %v987, %v985
    %v994 = vpack.c.bf16 %v988, %v986
    %v995 = vpack.c.bf16 %v991, %v989
    %v996 = vpack.c.bf16 %v992, %v990
    %s997 = scalar_lea.vmem [#allocation5], 48
    %v998 = vld [vmem:[%s997] sm:$0xf]
    %v999 = vld [vmem:[%s997 + $0x4] sm:$0xf]
    %v1002 = vunpack.c.l.b16 %v998
    %v1003 = vunpack.c.l.b16 %v999
    %v1004 = vpack.c.b16 %v1003, %v1002
    %v1006 = vsel %vm197, %v1004, 0
    %1008 = vmatprep.subr.bf16.mxu0 %v994
    %1009 = vmatpush1.bf16.msra.mxu0 %v993
    %1010 = vmatprep.subr.bf16.mxu0 0
    %1011 = vmatpush1.bf16.msra.mxu0 0
    %1012 = vmatprep.subr.bf16.mxu0 0
    %1013 = vmatpush1.bf16.msra.mxu0 0
    %1014 = vmatprep.subr.bf16.mxu0 0
    %1015 = vmatpush1.bf16.msra.mxu0 0
    %1016 = vmatprep.subr.bf16.mxu0 0
    %1017 = vmatpush1.bf16.msra.mxu0 0
    %1018 = vmatprep.subr.bf16.mxu0 0
    %1019 = vmatpush1.bf16.msra.mxu0 0
    %1020 = vmatprep.subr.bf16.mxu0 0
    %1021 = vmatpush1.bf16.msra.mxu0 0
    %1022 = vmatprep.subr.bf16.mxu0 0
    %1023 = vmatpush1.bf16.msra.mxu0 0
    %1024 = vmatprep.subr.bf16.mxu0 0
    %1025 = vmatpush1.bf16.msra.mxu0 0
    %1026 = vmatprep.subr.bf16.mxu0 0
    %1027 = vmatpush1.bf16.msra.mxu0 0
    %1028 = vmatprep.subr.bf16.mxu0 0
    %1029 = vmatpush1.bf16.msra.mxu0 0
    %1030 = vmatprep.subr.bf16.mxu0 0
    %1031 = vmatpush1.bf16.msra.mxu0 0
    %1032 = vmatprep.subr.bf16.mxu0 0
    %1033 = vmatpush1.bf16.msra.mxu0 0
    %1034 = vmatprep.subr.bf16.mxu0 0
    %1035 = vmatpush1.bf16.msra.mxu0 0
    %1036 = vmatprep.subr.bf16.mxu0 0
    %1037 = vmatpush1.bf16.msra.mxu0 0
    %1038 = vmatprep.subr.bf16.mxu0 0
    %1039 = vmatpush1.bf16.msra.mxu0 0
    %1040 = vmatprep.mubr.bf16.mxu0 0
    %1041 = vmatmul.mubr.bf16.gmra.mrb[0].mxu0 %v1006
    %v1042 = vpop.f32.mrb[0].mxu0
    %v1043 = vadd.f32 0.0, %v1042
    %v1044 = vpop.f32.mrb[0].mxu0
    %v1045 = vadd.f32 0.0, %v1044
    %v1046 = vpop.f32.mrb[0].mxu0
    %v1047 = vadd.f32 0.0, %v1046
    %v1048 = vpop.f32.mrb[0].mxu0
    %v1049 = vadd.f32 0.0, %v1048
    %1050 = vdwg.mxu0
    %v1051 = vadd.f32 %v898, %v1043
    %v1052 = vadd.f32 %v899, %v1045
    %v1053 = vadd.f32 %v900, %v1047
    %v1054 = vadd.f32 %v901, %v1049
    %1055 = vmatprep.subr.bf16.mxu0 %v996
    %1056 = vmatpush1.bf16.msra.mxu0 %v995
    %1057 = vmatprep.subr.bf16.mxu0 0
    %1058 = vmatpush1.bf16.msra.mxu0 0
    %1059 = vmatprep.subr.bf16.mxu0 0
    %1060 = vmatpush1.bf16.msra.mxu0 0
    %1061 = vmatprep.subr.bf16.mxu0 0
    %1062 = vmatpush1.bf16.msra.mxu0 0
    %1063 = vmatprep.subr.bf16.mxu0 0
    %1064 = vmatpush1.bf16.msra.mxu0 0
    %1065 = vmatprep.subr.bf16.mxu0 0
    %1066 = vmatpush1.bf16.msra.mxu0 0
    %1067 = vmatprep.subr.bf16.mxu0 0
    %1068 = vmatpush1.bf16.msra.mxu0 0
    %1069 = vmatprep.subr.bf16.mxu0 0
    %1070 = vmatpush1.bf16.msra.mxu0 0
    %1071 = vmatprep.subr.bf16.mxu0 0
    %1072 = vmatpush1.bf16.msra.mxu0 0
    %1073 = vmatprep.subr.bf16.mxu0 0
    %1074 = vmatpush1.bf16.msra.mxu0 0
    %1075 = vmatprep.subr.bf16.mxu0 0
    %1076 = vmatpush1.bf16.msra.mxu0 0
    %1077 = vmatprep.subr.bf16.mxu0 0
    %1078 = vmatpush1.bf16.msra.mxu0 0
    %1079 = vmatprep.subr.bf16.mxu0 0
    %1080 = vmatpush1.bf16.msra.mxu0 0
    %1081 = vmatprep.subr.bf16.mxu0 0
    %1082 = vmatpush1.bf16.msra.mxu0 0
    %1083 = vmatprep.subr.bf16.mxu0 0
    %1084 = vmatpush1.bf16.msra.mxu0 0
    %1085 = vmatprep.subr.bf16.mxu0 0
    %1086 = vmatpush1.bf16.msra.mxu0 0
    %1087 = vmatprep.mubr.bf16.mxu0 0
    %1088 = vmatmul.mubr.bf16.gmra.mrb[0].mxu0 %v1006
    %v1089 = vpop.f32.mrb[0].mxu0
    %v1090 = vadd.f32 0.0, %v1089
    %v1091 = vpop.f32.mrb[0].mxu0
    %v1092 = vadd.f32 0.0, %v1091
    %v1093 = vpop.f32.mrb[0].mxu0
    %v1094 = vadd.f32 0.0, %v1093
    %v1095 = vpop.f32.mrb[0].mxu0
    %v1096 = vadd.f32 0.0, %v1095
    %1097 = vdwg.mxu0
    %v1098 = vadd.f32 %v945, %v1090
    %v1099 = vadd.f32 %v946, %v1092
    %v1100 = vadd.f32 %v947, %v1094
    %v1101 = vadd.f32 %v948, %v1096
    %1102 = vrot.lane.b32.xlu0 %v66, 112
    %v1103 = vpop.permute.xlu0 %1102
    %1104 = vrot.lane.b32.xlu0 %v68, 112
    %v1105 = vpop.permute.xlu0 %1104
    %1106 = vrot.lane.b32.xlu0 %v70, 112
    %v1107 = vpop.permute.xlu0 %1106
    %1108 = vrot.lane.b32.xlu0 %v72, 112
    %v1109 = vpop.permute.xlu0 %1108
    %1110 = vrot.lane.b32.xlu0 %v67, 112
    %v1111 = vpop.permute.xlu0 %1110
    %1112 = vrot.lane.b32.xlu0 %v69, 112
    %v1113 = vpop.permute.xlu0 %1112
    %1114 = vrot.lane.b32.xlu0 %v71, 112
    %v1115 = vpop.permute.xlu0 %1114
    %1116 = vrot.lane.b32.xlu0 %v73, 112
    %v1117 = vpop.permute.xlu0 %1116
    %vm1118 = vcmp.lt.s32.totalorder %v106, 112
    %v1119 = vsel %vm1118, %v1103, %v1111
    %v1120 = vsel %vm1118, %v1105, %v1113
    %v1121 = vsel %vm1118, %v1107, %v1115
    %v1122 = vsel %vm1118, %v1109, %v1117
    %v1123 = vsel %vm1118, %v1111, %v1103
    %v1124 = vsel %vm1118, %v1113, %v1105
    %v1125 = vsel %vm1118, %v1115, %v1107
    %v1126 = vsel %vm1118, %v1117, %v1109
    %v1128 = vlaneseq
    %v1129 = vshrl.u32 %v1128, 7
    %v1130 = vsub.s32 0, %v1129
    %v1131 = vrot.slane %v86, %v1130
    %v1132 = vlaneseq
    %v1133 = vshrl.u32 %v1132, 7
    %v1134 = vsub.s32 1, %v1133
    %v1135 = vrot.slane %v86, %v1134
    %v1138 = vmul.f32 %v1119, %v1131
    %v1139 = vmul.f32 %v1123, %v1135
    %v1140 = vmul.f32 %v1120, %v1131
    %v1141 = vmul.f32 %v1124, %v1135
    %v1142 = vmul.f32 %v1121, %v1131
    %v1143 = vmul.f32 %v1125, %v1135
    %v1144 = vmul.f32 %v1122, %v1131
    %v1145 = vmul.f32 %v1126, %v1135
    %v1146 = vpack.c.bf16 %v1140, %v1138
    %v1147 = vpack.c.bf16 %v1141, %v1139
    %v1148 = vpack.c.bf16 %v1144, %v1142
    %v1149 = vpack.c.bf16 %v1145, %v1143
    %s1150 = scalar_lea.vmem [#allocation5], 56
    %v1151 = vld [vmem:[%s1150] sm:$0xf]
    %v1152 = vld [vmem:[%s1150 + $0x4] sm:$0xf]
    %v1155 = vunpack.c.l.b16 %v1151
    %v1156 = vunpack.c.l.b16 %v1152
    %v1157 = vpack.c.b16 %v1156, %v1155
    %v1159 = vsel %vm197, %v1157, 0
    %1161 = vmatprep.subr.bf16.mxu0 %v1147
    %1162 = vmatpush1.bf16.msra.mxu0 %v1146
    %1163 = vmatprep.subr.bf16.mxu0 0
    %1164 = vmatpush1.bf16.msra.mxu0 0
    %1165 = vmatprep.subr.bf16.mxu0 0
    %1166 = vmatpush1.bf16.msra.mxu0 0
    %1167 = vmatprep.subr.bf16.mxu0 0
    %1168 = vmatpush1.bf16.msra.mxu0 0
    %1169 = vmatprep.subr.bf16.mxu0 0
    %1170 = vmatpush1.bf16.msra.mxu0 0
    %1171 = vmatprep.subr.bf16.mxu0 0
    %1172 = vmatpush1.bf16.msra.mxu0 0
    %1173 = vmatprep.subr.bf16.mxu0 0
    %1174 = vmatpush1.bf16.msra.mxu0 0
    %1175 = vmatprep.subr.bf16.mxu0 0
    %1176 = vmatpush1.bf16.msra.mxu0 0
    %1177 = vmatprep.subr.bf16.mxu0 0
    %1178 = vmatpush1.bf16.msra.mxu0 0
    %1179 = vmatprep.subr.bf16.mxu0 0
    %1180 = vmatpush1.bf16.msra.mxu0 0
    %1181 = vmatprep.subr.bf16.mxu0 0
    %1182 = vmatpush1.bf16.msra.mxu0 0
    %1183 = vmatprep.subr.bf16.mxu0 0
    %1184 = vmatpush1.bf16.msra.mxu0 0
    %1185 = vmatprep.subr.bf16.mxu0 0
    %1186 = vmatpush1.bf16.msra.mxu0 0
    %1187 = vmatprep.subr.bf16.mxu0 0
    %1188 = vmatpush1.bf16.msra.mxu0 0
    %1189 = vmatprep.subr.bf16.mxu0 0
    %1190 = vmatpush1.bf16.msra.mxu0 0
    %1191 = vmatprep.subr.bf16.mxu0 0
    %1192 = vmatpush1.bf16.msra.mxu0 0
    %1193 = vmatprep.mubr.bf16.mxu0 0
    %1194 = vmatmul.mubr.bf16.gmra.mrb[0].mxu0 %v1159
    %v1195 = vpop.f32.mrb[0].mxu0
    %v1196 = vadd.f32 0.0, %v1195
    %v1197 = vpop.f32.mrb[0].mxu0
    %v1198 = vadd.f32 0.0, %v1197
    %v1199 = vpop.f32.mrb[0].mxu0
    %v1200 = vadd.f32 0.0, %v1199
    %v1201 = vpop.f32.mrb[0].mxu0
    %v1202 = vadd.f32 0.0, %v1201
    %1203 = vdwg.mxu0
    %v1204 = vadd.f32 %v1051, %v1196
    %v1205 = vadd.f32 %v1052, %v1198
    %v1206 = vadd.f32 %v1053, %v1200
    %v1207 = vadd.f32 %v1054, %v1202
    %1208 = vmatprep.subr.bf16.mxu0 %v1149
    %1209 = vmatpush1.bf16.msra.mxu0 %v1148
    %1210 = vmatprep.subr.bf16.mxu0 0
    %1211 = vmatpush1.bf16.msra.mxu0 0
    %1212 = vmatprep.subr.bf16.mxu0 0
    %1213 = vmatpush1.bf16.msra.mxu0 0
    %1214 = vmatprep.subr.bf16.mxu0 0
    %1215 = vmatpush1.bf16.msra.mxu0 0
    %1216 = vmatprep.subr.bf16.mxu0 0
    %1217 = vmatpush1.bf16.msra.mxu0 0
    %1218 = vmatprep.subr.bf16.mxu0 0
    %1219 = vmatpush1.bf16.msra.mxu0 0
    %1220 = vmatprep.subr.bf16.mxu0 0
    %1221 = vmatpush1.bf16.msra.mxu0 0
    %1222 = vmatprep.subr.bf16.mxu0 0
    %1223 = vmatpush1.bf16.msra.mxu0 0
    %1224 = vmatprep.subr.bf16.mxu0 0
    %1225 = vmatpush1.bf16.msra.mxu0 0
    %1226 = vmatprep.subr.bf16.mxu0 0
    %1227 = vmatpush1.bf16.msra.mxu0 0
    %1228 = vmatprep.subr.bf16.mxu0 0
    %1229 = vmatpush1.bf16.msra.mxu0 0
    %1230 = vmatprep.subr.bf16.mxu0 0
    %1231 = vmatpush1.bf16.msra.mxu0 0
    %1232 = vmatprep.subr.bf16.mxu0 0
    %1233 = vmatpush1.bf16.msra.mxu0 0
    %1234 = vmatprep.subr.bf16.mxu0 0
    %1235 = vmatpush1.bf16.msra.mxu0 0
    %1236 = vmatprep.subr.bf16.mxu0 0
    %1237 = vmatpush1.bf16.msra.mxu0 0
    %1238 = vmatprep.subr.bf16.mxu0 0
    %1239 = vmatpush1.bf16.msra.mxu0 0
    %1240 = vmatprep.mubr.bf16.mxu0 0
    %1241 = vmatmul.mubr.bf16.gmra.mrb[0].mxu0 %v1159
    %v1242 = vpop.f32.mrb[0].mxu0
    %v1243 = vadd.f32 0.0, %v1242
    %v1244 = vpop.f32.mrb[0].mxu0
    %v1245 = vadd.f32 0.0, %v1244
    %v1246 = vpop.f32.mrb[0].mxu0
    %v1247 = vadd.f32 0.0, %v1246
    %v1248 = vpop.f32.mrb[0].mxu0
    %v1249 = vadd.f32 0.0, %v1248
    %1250 = vdwg.mxu0
    %v1251 = vadd.f32 %v1098, %v1243
    %v1252 = vadd.f32 %v1099, %v1245
    %v1253 = vadd.f32 %v1100, %v1247
    %v1254 = vadd.f32 %v1101, %v1249
    %1255 = vrot.lane.b32.xlu0 %v66, 111
    %v1256 = vpop.permute.xlu0 %1255
    %1257 = vrot.lane.b32.xlu0 %v68, 111
    %v1258 = vpop.permute.xlu0 %1257
    %1259 = vrot.lane.b32.xlu0 %v70, 111
    %v1260 = vpop.permute.xlu0 %1259
    %1261 = vrot.lane.b32.xlu0 %v72, 111
    %v1262 = vpop.permute.xlu0 %1261
    %1263 = vrot.lane.b32.xlu0 %v67, 111
    %v1264 = vpop.permute.xlu0 %1263
    %1265 = vrot.lane.b32.xlu0 %v69, 111
    %v1266 = vpop.permute.xlu0 %1265
    %1267 = vrot.lane.b32.xlu0 %v71, 111
    %v1268 = vpop.permute.xlu0 %1267
    %1269 = vrot.lane.b32.xlu0 %v73, 111
    %v1270 = vpop.permute.xlu0 %1269
    %vm1271 = vcmp.lt.s32.totalorder %v106, 111
    %v1272 = vsel %vm1271, %v1256, %v1264
    %v1273 = vsel %vm1271, %v1258, %v1266
    %v1274 = vsel %vm1271, %v1260, %v1268
    %v1275 = vsel %vm1271, %v1262, %v1270
    %v1276 = vsel %vm1271, %v1264, %v1256
    %v1277 = vsel %vm1271, %v1266, %v1258
    %v1278 = vsel %vm1271, %v1268, %v1260
    %v1279 = vsel %vm1271, %v1270, %v1262
    %v1281 = vlaneseq
    %v1282 = vshrl.u32 %v1281, 7
    %v1283 = vsub.s32 0, %v1282
    %v1284 = vrot.slane %v88, %v1283
    %v1285 = vlaneseq
    %v1286 = vshrl.u32 %v1285, 7
    %v1287 = vsub.s32 1, %v1286
    %v1288 = vrot.slane %v88, %v1287
    %v1291 = vmul.f32 %v1272, %v1284
    %v1292 = vmul.f32 %v1276, %v1288
    %v1293 = vmul.f32 %v1273, %v1284
    %v1294 = vmul.f32 %v1277, %v1288
    %v1295 = vmul.f32 %v1274, %v1284
    %v1296 = vmul.f32 %v1278, %v1288
    %v1297 = vmul.f32 %v1275, %v1284
    %v1298 = vmul.f32 %v1279, %v1288
    %v1299 = vpack.c.bf16 %v1293, %v1291
    %v1300 = vpack.c.bf16 %v1294, %v1292
    %v1301 = vpack.c.bf16 %v1297, %v1295
    %v1302 = vpack.c.bf16 %v1298, %v1296
    %s1303 = scalar_lea.vmem [#allocation5], 64
    %v1304 = vld [vmem:[%s1303] sm:$0xf]
    %v1305 = vld [vmem:[%s1303 + $0x4] sm:$0xf]
    %v1308 = vunpack.c.l.b16 %v1304
    %v1309 = vunpack.c.l.b16 %v1305
    %v1310 = vpack.c.b16 %v1309, %v1308
    %v1312 = vsel %vm197, %v1310, 0
    %1314 = vmatprep.subr.bf16.mxu0 %v1300
    %1315 = vmatpush1.bf16.msra.mxu0 %v1299
    %1316 = vmatprep.subr.bf16.mxu0 0
    %1317 = vmatpush1.bf16.msra.mxu0 0
    %1318 = vmatprep.subr.bf16.mxu0 0
    %1319 = vmatpush1.bf16.msra.mxu0 0
    %1320 = vmatprep.subr.bf16.mxu0 0
    %1321 = vmatpush1.bf16.msra.mxu0 0
    %1322 = vmatprep.subr.bf16.mxu0 0
    %1323 = vmatpush1.bf16.msra.mxu0 0
    %1324 = vmatprep.subr.bf16.mxu0 0
    %1325 = vmatpush1.bf16.msra.mxu0 0
    %1326 = vmatprep.subr.bf16.mxu0 0
    %1327 = vmatpush1.bf16.msra.mxu0 0
    %1328 = vmatprep.subr.bf16.mxu0 0
    %1329 = vmatpush1.bf16.msra.mxu0 0
    %1330 = vmatprep.subr.bf16.mxu0 0
    %1331 = vmatpush1.bf16.msra.mxu0 0
    %1332 = vmatprep.subr.bf16.mxu0 0
    %1333 = vmatpush1.bf16.msra.mxu0 0
    %1334 = vmatprep.subr.bf16.mxu0 0
    %1335 = vmatpush1.bf16.msra.mxu0 0
    %1336 = vmatprep.subr.bf16.mxu0 0
    %1337 = vmatpush1.bf16.msra.mxu0 0
    %1338 = vmatprep.subr.bf16.mxu0 0
    %1339 = vmatpush1.bf16.msra.mxu0 0
    %1340 = vmatprep.subr.bf16.mxu0 0
    %1341 = vmatpush1.bf16.msra.mxu0 0
    %1342 = vmatprep.subr.bf16.mxu0 0
    %1343 = vmatpush1.bf16.msra.mxu0 0
    %1344 = vmatprep.subr.bf16.mxu0 0
    %1345 = vmatpush1.bf16.msra.mxu0 0
    %1346 = vmatprep.mubr.bf16.mxu0 0
    %1347 = vmatmul.mubr.bf16.gmra.mrb[0].mxu0 %v1312
    %v1348 = vpop.f32.mrb[0].mxu0
    %v1349 = vadd.f32 0.0, %v1348
    %v1350 = vpop.f32.mrb[0].mxu0
    %v1351 = vadd.f32 0.0, %v1350
    %v1352 = vpop.f32.mrb[0].mxu0
    %v1353 = vadd.f32 0.0, %v1352
    %v1354 = vpop.f32.mrb[0].mxu0
    %v1355 = vadd.f32 0.0, %v1354
    %1356 = vdwg.mxu0
    %v1357 = vadd.f32 %v1204, %v1349
    %v1358 = vadd.f32 %v1205, %v1351
    %v1359 = vadd.f32 %v1206, %v1353
    %v1360 = vadd.f32 %v1207, %v1355
    %1361 = vmatprep.subr.bf16.mxu0 %v1302
    %1362 = vmatpush1.bf16.msra.mxu0 %v1301
    %1363 = vmatprep.subr.bf16.mxu0 0
    %1364 = vmatpush1.bf16.msra.mxu0 0
    %1365 = vmatprep.subr.bf16.mxu0 0
    %1366 = vmatpush1.bf16.msra.mxu0 0
    %1367 = vmatprep.subr.bf16.mxu0 0
    %1368 = vmatpush1.bf16.msra.mxu0 0
    %1369 = vmatprep.subr.bf16.mxu0 0
    %1370 = vmatpush1.bf16.msra.mxu0 0
    %1371 = vmatprep.subr.bf16.mxu0 0
    %1372 = vmatpush1.bf16.msra.mxu0 0
    %1373 = vmatprep.subr.bf16.mxu0 0
    %1374 = vmatpush1.bf16.msra.mxu0 0
    %1375 = vmatprep.subr.bf16.mxu0 0
    %1376 = vmatpush1.bf16.msra.mxu0 0
    %1377 = vmatprep.subr.bf16.mxu0 0
    %1378 = vmatpush1.bf16.msra.mxu0 0
    %1379 = vmatprep.subr.bf16.mxu0 0
    %1380 = vmatpush1.bf16.msra.mxu0 0
    %1381 = vmatprep.subr.bf16.mxu0 0
    %1382 = vmatpush1.bf16.msra.mxu0 0
    %1383 = vmatprep.subr.bf16.mxu0 0
    %1384 = vmatpush1.bf16.msra.mxu0 0
    %1385 = vmatprep.subr.bf16.mxu0 0
    %1386 = vmatpush1.bf16.msra.mxu0 0
    %1387 = vmatprep.subr.bf16.mxu0 0
    %1388 = vmatpush1.bf16.msra.mxu0 0
    %1389 = vmatprep.subr.bf16.mxu0 0
    %1390 = vmatpush1.bf16.msra.mxu0 0
    %1391 = vmatprep.subr.bf16.mxu0 0
    %1392 = vmatpush1.bf16.msra.mxu0 0
    %1393 = vmatprep.mubr.bf16.mxu0 0
    %1394 = vmatmul.mubr.bf16.gmra.mrb[0].mxu0 %v1312
    %v1395 = vpop.f32.mrb[0].mxu0
    %v1396 = vadd.f32 0.0, %v1395
    %v1397 = vpop.f32.mrb[0].mxu0
    %v1398 = vadd.f32 0.0, %v1397
    %v1399 = vpop.f32.mrb[0].mxu0
    %v1400 = vadd.f32 0.0, %v1399
    %v1401 = vpop.f32.mrb[0].mxu0
    %v1402 = vadd.f32 0.0, %v1401
    %1403 = vdwg.mxu0
    %v1404 = vadd.f32 %v1251, %v1396
    %v1405 = vadd.f32 %v1252, %v1398
    %v1406 = vadd.f32 %v1253, %v1400
    %v1407 = vadd.f32 %v1254, %v1402
    %v1408 = vld [vmem:[%s2] sm:$0xff]
    %v1409 = vld [vmem:[%s2 + $0x8] sm:$0xff]
    %1411 = vset.pattern.permute.xlu0 0
    %1412 = vperm.xlu0 %1411, %v1408
    %v1413 = vpop.permute.xlu0 %1412
    %1416 = vset.pattern.permute.xlu0 0
    %1417 = vperm.xlu0 %1416, %v1409
    %v1418 = vpop.permute.xlu0 %1417
    %v1420 = vadd.f32 %v1357, %v1413
    %v1421 = vadd.f32 %v1358, %v1413
    %v1422 = vadd.f32 %v1359, %v1418
    %v1423 = vadd.f32 %v1360, %v1418
    %v1424 = vadd.f32 %v1404, %v1413
    %v1425 = vadd.f32 %v1405, %v1413
    %v1426 = vadd.f32 %v1406, %v1418
    %v1427 = vadd.f32 %v1407, %v1418
    %v1428 = vmax.f32 %v1420, 0.0
    %v1429 = vmax.f32 %v1421, 0.0
    %v1430 = vmax.f32 %v1422, 0.0
    %v1431 = vmax.f32 %v1423, 0.0
    %v1432 = vmax.f32 %v1424, 0.0
    %v1433 = vmax.f32 %v1425, 0.0
    %v1434 = vmax.f32 %v1426, 0.0
    %v1435 = vmax.f32 %v1427, 0.0
    %1436 = vrot.lane.b32.xlu0 %v1428, 17
    %v1437 = vpop.permute.xlu0 %1436
    %1438 = vrot.lane.b32.xlu0 %v1430, 17
    %v1439 = vpop.permute.xlu0 %1438
    %1440 = vrot.lane.b32.xlu0 %v1432, 17
    %v1441 = vpop.permute.xlu0 %1440
    %1442 = vrot.lane.b32.xlu0 %v1434, 17
    %v1443 = vpop.permute.xlu0 %1442
    %1444 = vrot.lane.b32.xlu0 %v1429, 17
    %v1445 = vpop.permute.xlu0 %1444
    %1446 = vrot.lane.b32.xlu0 %v1431, 17
    %v1447 = vpop.permute.xlu0 %1446
    %1448 = vrot.lane.b32.xlu0 %v1433, 17
    %v1449 = vpop.permute.xlu0 %1448
    %1450 = vrot.lane.b32.xlu0 %v1435, 17
    %v1451 = vpop.permute.xlu0 %1450
    %v1452 = vsel %vm107, %v1437, %v1445
    %v1453 = vsel %vm107, %v1439, %v1447
    %v1454 = vsel %vm107, %v1441, %v1449
    %v1455 = vsel %vm107, %v1443, %v1451
    %v1456 = vsel %vm107, %v1445, %v1437
    %v1457 = vsel %vm107, %v1447, %v1439
    %v1458 = vsel %vm107, %v1449, %v1441
    %v1459 = vsel %vm107, %v1451, %v1443
    %v1460 = vmul.f32 %v1456, %v120
    %v1461 = vmul.f32 %v1452, %v124
    %v1462 = vmul.f32 %v1457, %v120
    %v1463 = vmul.f32 %v1453, %v124
    %v1464 = vmul.f32 %v1458, %v120
    %v1465 = vmul.f32 %v1454, %v124
    %v1466 = vmul.f32 %v1459, %v120
    %v1467 = vmul.f32 %v1455, %v124
    %v1468 = vpack.c.bf16 %v1462, %v1460
    %v1469 = vpack.c.bf16 %v1463, %v1461
    %v1470 = vpack.c.bf16 %v1466, %v1464
    %v1471 = vpack.c.bf16 %v1467, %v1465
    %v1472 = vld [vmem:[#allocation7] sm:$0xf]
    %v1473 = vld [vmem:[#allocation7 + $0x4] sm:$0xf]
    %1474 = vrot.lane.b32.xlu0 %v1428, 16
    %v1475 = vpop.permute.xlu0 %1474
    %1476 = vrot.lane.b32.xlu0 %v1430, 16
    %v1477 = vpop.permute.xlu0 %1476
    %1478 = vrot.lane.b32.xlu0 %v1432, 16
    %v1479 = vpop.permute.xlu0 %1478
    %1480 = vrot.lane.b32.xlu0 %v1434, 16
    %v1481 = vpop.permute.xlu0 %1480
    %1482 = vrot.lane.b32.xlu0 %v1429, 16
    %v1483 = vpop.permute.xlu0 %1482
    %1484 = vrot.lane.b32.xlu0 %v1431, 16
    %v1485 = vpop.permute.xlu0 %1484
    %1486 = vrot.lane.b32.xlu0 %v1433, 16
    %v1487 = vpop.permute.xlu0 %1486
    %1488 = vrot.lane.b32.xlu0 %v1435, 16
    %v1489 = vpop.permute.xlu0 %1488
    %v1490 = vsel %vm157, %v1475, %v1483
    %v1491 = vsel %vm157, %v1477, %v1485
    %v1492 = vsel %vm157, %v1479, %v1487
    %v1493 = vsel %vm157, %v1481, %v1489
    %v1494 = vsel %vm157, %v1483, %v1475
    %v1495 = vsel %vm157, %v1485, %v1477
    %v1496 = vsel %vm157, %v1487, %v1479
    %v1497 = vsel %vm157, %v1489, %v1481
    %v1498 = vmul.f32 %v1494, %v170
    %v1499 = vmul.f32 %v1490, %v174
    %v1500 = vmul.f32 %v1495, %v170
    %v1501 = vmul.f32 %v1491, %v174
    %v1502 = vmul.f32 %v1496, %v170
    %v1503 = vmul.f32 %v1492, %v174
    %v1504 = vmul.f32 %v1497, %v170
    %v1505 = vmul.f32 %v1493, %v174
    %v1506 = vpack.c.bf16 %v1500, %v1498
    %v1507 = vpack.c.bf16 %v1501, %v1499
    %v1508 = vpack.c.bf16 %v1504, %v1502
    %v1509 = vpack.c.bf16 %v1505, %v1503
    %s1510 = scalar_lea.vmem [#allocation7], 8
    %v1511 = vld [vmem:[%s1510] sm:$0xf]
    %v1512 = vld [vmem:[%s1510 + $0x4] sm:$0xf]
    %v1515 = vunpack.c.l.b16 %v1511
    %v1516 = vunpack.c.l.b16 %v1512
    %v1517 = vpack.c.b16 %v1516, %v1515
    %v1519 = vsel %vm197, %v1517, 0
    %1521 = vmatprep.subr.bf16.mxu0 %v1507
    %1522 = vmatpush1.bf16.msra.mxu0 %v1506
    %1523 = vmatprep.subr.bf16.mxu0 0
    %1524 = vmatpush1.bf16.msra.mxu0 0
    %1525 = vmatprep.subr.bf16.mxu0 0
    %1526 = vmatpush1.bf16.msra.mxu0 0
    %1527 = vmatprep.subr.bf16.mxu0 0
    %1528 = vmatpush1.bf16.msra.mxu0 0
    %1529 = vmatprep.subr.bf16.mxu0 0
    %1530 = vmatpush1.bf16.msra.mxu0 0
    %1531 = vmatprep.subr.bf16.mxu0 0
    %1532 = vmatpush1.bf16.msra.mxu0 0
    %1533 = vmatprep.subr.bf16.mxu0 0
    %1534 = vmatpush1.bf16.msra.mxu0 0
    %1535 = vmatprep.subr.bf16.mxu0 0
    %1536 = vmatpush1.bf16.msra.mxu0 0
    %1537 = vmatprep.subr.bf16.mxu0 0
    %1538 = vmatpush1.bf16.msra.mxu0 0
    %1539 = vmatprep.subr.bf16.mxu0 0
    %1540 = vmatpush1.bf16.msra.mxu0 0
    %1541 = vmatprep.subr.bf16.mxu0 0
    %1542 = vmatpush1.bf16.msra.mxu0 0
    %1543 = vmatprep.subr.bf16.mxu0 0
    %1544 = vmatpush1.bf16.msra.mxu0 0
    %1545 = vmatprep.subr.bf16.mxu0 0
    %1546 = vmatpush1.bf16.msra.mxu0 0
    %1547 = vmatprep.subr.bf16.mxu0 0
    %1548 = vmatpush1.bf16.msra.mxu0 0
    %1549 = vmatprep.subr.bf16.mxu0 0
    %1550 = vmatpush1.bf16.msra.mxu0 0
    %1551 = vmatprep.subr.bf16.mxu0 0
    %1552 = vmatpush1.bf16.msra.mxu0 0
    %1553 = vmatprep.mubr.bf16.mxu0 0
    %1554 = vmatmul.mubr.bf16.gmra.mrb[0].mxu0 %v1519
    %v1555 = vpop.f32.mrb[0].mxu0
    %v1556 = vadd.f32 0.0, %v1555
    %v1557 = vpop.f32.mrb[0].mxu0
    %v1558 = vadd.f32 0.0, %v1557
    %v1559 = vpop.f32.mrb[0].mxu0
    %v1560 = vadd.f32 0.0, %v1559
    %v1561 = vpop.f32.mrb[0].mxu0
    %v1562 = vadd.f32 0.0, %v1561
    %1563 = vdwg.mxu0
    %v1566 = vunpack.c.l.b16 %v1472
    %v1567 = vunpack.c.l.b16 %v1473
    %v1568 = vpack.c.b16 %v1567, %v1566
    %v1570 = vsel %vm197, %v1568, 0
    %1572 = vmatprep.subr.bf16.mxu0 %v1469
    %1573 = vmatpush1.bf16.msra.mxu0 %v1468
    %1574 = vmatprep.subr.bf16.mxu0 0
    %1575 = vmatpush1.bf16.msra.mxu0 0
    %1576 = vmatprep.subr.bf16.mxu0 0
    %1577 = vmatpush1.bf16.msra.mxu0 0
    %1578 = vmatprep.subr.bf16.mxu0 0
    %1579 = vmatpush1.bf16.msra.mxu0 0
    %1580 = vmatprep.subr.bf16.mxu0 0
    %1581 = vmatpush1.bf16.msra.mxu0 0
    %1582 = vmatprep.subr.bf16.mxu0 0
    %1583 = vmatpush1.bf16.msra.mxu0 0
    %1584 = vmatprep.subr.bf16.mxu0 0
    %1585 = vmatpush1.bf16.msra.mxu0 0
    %1586 = vmatprep.subr.bf16.mxu0 0
    %1587 = vmatpush1.bf16.msra.mxu0 0
    %1588 = vmatprep.subr.bf16.mxu0 0
    %1589 = vmatpush1.bf16.msra.mxu0 0
    %1590 = vmatprep.subr.bf16.mxu0 0
    %1591 = vmatpush1.bf16.msra.mxu0 0
    %1592 = vmatprep.subr.bf16.mxu0 0
    %1593 = vmatpush1.bf16.msra.mxu0 0
    %1594 = vmatprep.subr.bf16.mxu0 0
    %1595 = vmatpush1.bf16.msra.mxu0 0
    %1596 = vmatprep.subr.bf16.mxu0 0
    %1597 = vmatpush1.bf16.msra.mxu0 0
    %1598 = vmatprep.subr.bf16.mxu0 0
    %1599 = vmatpush1.bf16.msra.mxu0 0
    %1600 = vmatprep.subr.bf16.mxu0 0
    %1601 = vmatpush1.bf16.msra.mxu0 0
    %1602 = vmatprep.subr.bf16.mxu0 0
    %1603 = vmatpush1.bf16.msra.mxu0 0
    %1604 = vmatprep.mubr.bf16.mxu0 0
    %1605 = vmatmul.mubr.bf16.gmra.mrb[0].mxu0 %v1570
    %v1606 = vpop.f32.mrb[0].mxu0
    %v1607 = vadd.f32 %v1556, %v1606
    %v1608 = vpop.f32.mrb[0].mxu0
    %v1609 = vadd.f32 %v1558, %v1608
    %v1610 = vpop.f32.mrb[0].mxu0
    %v1611 = vadd.f32 %v1560, %v1610
    %v1612 = vpop.f32.mrb[0].mxu0
    %v1613 = vadd.f32 %v1562, %v1612
    %1614 = vdwg.mxu0
    %1615 = vmatprep.subr.bf16.mxu0 %v1509
    %1616 = vmatpush1.bf16.msra.mxu0 %v1508
    %1617 = vmatprep.subr.bf16.mxu0 0
    %1618 = vmatpush1.bf16.msra.mxu0 0
    %1619 = vmatprep.subr.bf16.mxu0 0
    %1620 = vmatpush1.bf16.msra.mxu0 0
    %1621 = vmatprep.subr.bf16.mxu0 0
    %1622 = vmatpush1.bf16.msra.mxu0 0
    %1623 = vmatprep.subr.bf16.mxu0 0
    %1624 = vmatpush1.bf16.msra.mxu0 0
    %1625 = vmatprep.subr.bf16.mxu0 0
    %1626 = vmatpush1.bf16.msra.mxu0 0
    %1627 = vmatprep.subr.bf16.mxu0 0
    %1628 = vmatpush1.bf16.msra.mxu0 0
    %1629 = vmatprep.subr.bf16.mxu0 0
    %1630 = vmatpush1.bf16.msra.mxu0 0
    %1631 = vmatprep.subr.bf16.mxu0 0
    %1632 = vmatpush1.bf16.msra.mxu0 0
    %1633 = vmatprep.subr.bf16.mxu0 0
    %1634 = vmatpush1.bf16.msra.mxu0 0
    %1635 = vmatprep.subr.bf16.mxu0 0
    %1636 = vmatpush1.bf16.msra.mxu0 0
    %1637 = vmatprep.subr.bf16.mxu0 0
    %1638 = vmatpush1.bf16.msra.mxu0 0
    %1639 = vmatprep.subr.bf16.mxu0 0
    %1640 = vmatpush1.bf16.msra.mxu0 0
    %1641 = vmatprep.subr.bf16.mxu0 0
    %1642 = vmatpush1.bf16.msra.mxu0 0
    %1643 = vmatprep.subr.bf16.mxu0 0
    %1644 = vmatpush1.bf16.msra.mxu0 0
    %1645 = vmatprep.subr.bf16.mxu0 0
    %1646 = vmatpush1.bf16.msra.mxu0 0
    %1647 = vmatprep.mubr.bf16.mxu0 0
    %1648 = vmatmul.mubr.bf16.gmra.mrb[0].mxu0 %v1519
    %v1649 = vpop.f32.mrb[0].mxu0
    %v1650 = vadd.f32 0.0, %v1649
    %v1651 = vpop.f32.mrb[0].mxu0
    %v1652 = vadd.f32 0.0, %v1651
    %v1653 = vpop.f32.mrb[0].mxu0
    %v1654 = vadd.f32 0.0, %v1653
    %v1655 = vpop.f32.mrb[0].mxu0
    %v1656 = vadd.f32 0.0, %v1655
    %1657 = vdwg.mxu0
    %1658 = vmatprep.subr.bf16.mxu0 %v1471
    %1659 = vmatpush1.bf16.msra.mxu0 %v1470
    %1660 = vmatprep.subr.bf16.mxu0 0
    %1661 = vmatpush1.bf16.msra.mxu0 0
    %1662 = vmatprep.subr.bf16.mxu0 0
    %1663 = vmatpush1.bf16.msra.mxu0 0
    %1664 = vmatprep.subr.bf16.mxu0 0
    %1665 = vmatpush1.bf16.msra.mxu0 0
    %1666 = vmatprep.subr.bf16.mxu0 0
    %1667 = vmatpush1.bf16.msra.mxu0 0
    %1668 = vmatprep.subr.bf16.mxu0 0
    %1669 = vmatpush1.bf16.msra.mxu0 0
    %1670 = vmatprep.subr.bf16.mxu0 0
    %1671 = vmatpush1.bf16.msra.mxu0 0
    %1672 = vmatprep.subr.bf16.mxu0 0
    %1673 = vmatpush1.bf16.msra.mxu0 0
    %1674 = vmatprep.subr.bf16.mxu0 0
    %1675 = vmatpush1.bf16.msra.mxu0 0
    %1676 = vmatprep.subr.bf16.mxu0 0
    %1677 = vmatpush1.bf16.msra.mxu0 0
    %1678 = vmatprep.subr.bf16.mxu0 0
    %1679 = vmatpush1.bf16.msra.mxu0 0
    %1680 = vmatprep.subr.bf16.mxu0 0
    %1681 = vmatpush1.bf16.msra.mxu0 0
    %1682 = vmatprep.subr.bf16.mxu0 0
    %1683 = vmatpush1.bf16.msra.mxu0 0
    %1684 = vmatprep.subr.bf16.mxu0 0
    %1685 = vmatpush1.bf16.msra.mxu0 0
    %1686 = vmatprep.subr.bf16.mxu0 0
    %1687 = vmatpush1.bf16.msra.mxu0 0
    %1688 = vmatprep.subr.bf16.mxu0 0
    %1689 = vmatpush1.bf16.msra.mxu0 0
    %1690 = vmatprep.mubr.bf16.mxu0 0
    %1691 = vmatmul.mubr.bf16.gmra.mrb[0].mxu0 %v1570
    %v1692 = vpop.f32.mrb[0].mxu0
    %v1693 = vadd.f32 %v1650, %v1692
    %v1694 = vpop.f32.mrb[0].mxu0
    %v1695 = vadd.f32 %v1652, %v1694
    %v1696 = vpop.f32.mrb[0].mxu0
    %v1697 = vadd.f32 %v1654, %v1696
    %v1698 = vpop.f32.mrb[0].mxu0
    %v1699 = vadd.f32 %v1656, %v1698
    %1700 = vdwg.mxu0
    %1701 = vrot.lane.b32.xlu0 %v1428, 15
    %v1702 = vpop.permute.xlu0 %1701
    %1703 = vrot.lane.b32.xlu0 %v1430, 15
    %v1704 = vpop.permute.xlu0 %1703
    %1705 = vrot.lane.b32.xlu0 %v1432, 15
    %v1706 = vpop.permute.xlu0 %1705
    %1707 = vrot.lane.b32.xlu0 %v1434, 15
    %v1708 = vpop.permute.xlu0 %1707
    %1709 = vrot.lane.b32.xlu0 %v1429, 15
    %v1710 = vpop.permute.xlu0 %1709
    %1711 = vrot.lane.b32.xlu0 %v1431, 15
    %v1712 = vpop.permute.xlu0 %1711
    %1713 = vrot.lane.b32.xlu0 %v1433, 15
    %v1714 = vpop.permute.xlu0 %1713
    %1715 = vrot.lane.b32.xlu0 %v1435, 15
    %v1716 = vpop.permute.xlu0 %1715
    %v1717 = vsel %vm397, %v1702, %v1710
    %v1718 = vsel %vm397, %v1704, %v1712
    %v1719 = vsel %vm397, %v1706, %v1714
    %v1720 = vsel %vm397, %v1708, %v1716
    %v1721 = vsel %vm397, %v1710, %v1702
    %v1722 = vsel %vm397, %v1712, %v1704
    %v1723 = vsel %vm397, %v1714, %v1706
    %v1724 = vsel %vm397, %v1716, %v1708
    %v1725 = vmul.f32 %v1721, %v410
    %v1726 = vmul.f32 %v1717, %v414
    %v1727 = vmul.f32 %v1722, %v410
    %v1728 = vmul.f32 %v1718, %v414
    %v1729 = vmul.f32 %v1723, %v410
    %v1730 = vmul.f32 %v1719, %v414
    %v1731 = vmul.f32 %v1724, %v410
    %v1732 = vmul.f32 %v1720, %v414
    %v1733 = vpack.c.bf16 %v1727, %v1725
    %v1734 = vpack.c.bf16 %v1728, %v1726
    %v1735 = vpack.c.bf16 %v1731, %v1729
    %v1736 = vpack.c.bf16 %v1732, %v1730
    %s1737 = scalar_lea.vmem [#allocation7], 16
    %v1738 = vld [vmem:[%s1737] sm:$0xf]
    %v1739 = vld [vmem:[%s1737 + $0x4] sm:$0xf]
    %v1742 = vunpack.c.l.b16 %v1738
    %v1743 = vunpack.c.l.b16 %v1739
    %v1744 = vpack.c.b16 %v1743, %v1742
    %v1746 = vsel %vm197, %v1744, 0
    %1748 = vmatprep.subr.bf16.mxu0 %v1734
    %1749 = vmatpush1.bf16.msra.mxu0 %v1733
    %1750 = vmatprep.subr.bf16.mxu0 0
    %1751 = vmatpush1.bf16.msra.mxu0 0
    %1752 = vmatprep.subr.bf16.mxu0 0
    %1753 = vmatpush1.bf16.msra.mxu0 0
    %1754 = vmatprep.subr.bf16.mxu0 0
    %1755 = vmatpush1.bf16.msra.mxu0 0
    %1756 = vmatprep.subr.bf16.mxu0 0
    %1757 = vmatpush1.bf16.msra.mxu0 0
    %1758 = vmatprep.subr.bf16.mxu0 0
    %1759 = vmatpush1.bf16.msra.mxu0 0
    %1760 = vmatprep.subr.bf16.mxu0 0
    %1761 = vmatpush1.bf16.msra.mxu0 0
    %1762 = vmatprep.subr.bf16.mxu0 0
    %1763 = vmatpush1.bf16.msra.mxu0 0
    %1764 = vmatprep.subr.bf16.mxu0 0
    %1765 = vmatpush1.bf16.msra.mxu0 0
    %1766 = vmatprep.subr.bf16.mxu0 0
    %1767 = vmatpush1.bf16.msra.mxu0 0
    %1768 = vmatprep.subr.bf16.mxu0 0
    %1769 = vmatpush1.bf16.msra.mxu0 0
    %1770 = vmatprep.subr.bf16.mxu0 0
    %1771 = vmatpush1.bf16.msra.mxu0 0
    %1772 = vmatprep.subr.bf16.mxu0 0
    %1773 = vmatpush1.bf16.msra.mxu0 0
    %1774 = vmatprep.subr.bf16.mxu0 0
    %1775 = vmatpush1.bf16.msra.mxu0 0
    %1776 = vmatprep.subr.bf16.mxu0 0
    %1777 = vmatpush1.bf16.msra.mxu0 0
    %1778 = vmatprep.subr.bf16.mxu0 0
    %1779 = vmatpush1.bf16.msra.mxu0 0
    %1780 = vmatprep.mubr.bf16.mxu0 0
    %1781 = vmatmul.mubr.bf16.gmra.mrb[0].mxu0 %v1746
    %v1782 = vpop.f32.mrb[0].mxu0
    %v1783 = vadd.f32 0.0, %v1782
    %v1784 = vpop.f32.mrb[0].mxu0
    %v1785 = vadd.f32 0.0, %v1784
    %v1786 = vpop.f32.mrb[0].mxu0
    %v1787 = vadd.f32 0.0, %v1786
    %v1788 = vpop.f32.mrb[0].mxu0
    %v1789 = vadd.f32 0.0, %v1788
    %1790 = vdwg.mxu0
    %v1791 = vadd.f32 %v1607, %v1783
    %v1792 = vadd.f32 %v1609, %v1785
    %v1793 = vadd.f32 %v1611, %v1787
    %v1794 = vadd.f32 %v1613, %v1789
    %1795 = vmatprep.subr.bf16.mxu0 %v1736
    %1796 = vmatpush1.bf16.msra.mxu0 %v1735
    %1797 = vmatprep.subr.bf16.mxu0 0
    %1798 = vmatpush1.bf16.msra.mxu0 0
    %1799 = vmatprep.subr.bf16.mxu0 0
    %1800 = vmatpush1.bf16.msra.mxu0 0
    %1801 = vmatprep.subr.bf16.mxu0 0
    %1802 = vmatpush1.bf16.msra.mxu0 0
    %1803 = vmatprep.subr.bf16.mxu0 0
    %1804 = vmatpush1.bf16.msra.mxu0 0
    %1805 = vmatprep.subr.bf16.mxu0 0
    %1806 = vmatpush1.bf16.msra.mxu0 0
    %1807 = vmatprep.subr.bf16.mxu0 0
    %1808 = vmatpush1.bf16.msra.mxu0 0
    %1809 = vmatprep.subr.bf16.mxu0 0
    %1810 = vmatpush1.bf16.msra.mxu0 0
    %1811 = vmatprep.subr.bf16.mxu0 0
    %1812 = vmatpush1.bf16.msra.mxu0 0
    %1813 = vmatprep.subr.bf16.mxu0 0
    %1814 = vmatpush1.bf16.msra.mxu0 0
    %1815 = vmatprep.subr.bf16.mxu0 0
    %1816 = vmatpush1.bf16.msra.mxu0 0
    %1817 = vmatprep.subr.bf16.mxu0 0
    %1818 = vmatpush1.bf16.msra.mxu0 0
    %1819 = vmatprep.subr.bf16.mxu0 0
    %1820 = vmatpush1.bf16.msra.mxu0 0
    %1821 = vmatprep.subr.bf16.mxu0 0
    %1822 = vmatpush1.bf16.msra.mxu0 0
    %1823 = vmatprep.subr.bf16.mxu0 0
    %1824 = vmatpush1.bf16.msra.mxu0 0
    %1825 = vmatprep.subr.bf16.mxu0 0
    %1826 = vmatpush1.bf16.msra.mxu0 0
    %1827 = vmatprep.mubr.bf16.mxu0 0
    %1828 = vmatmul.mubr.bf16.gmra.mrb[0].mxu0 %v1746
    %v1829 = vpop.f32.mrb[0].mxu0
    %v1830 = vadd.f32 0.0, %v1829
    %v1831 = vpop.f32.mrb[0].mxu0
    %v1832 = vadd.f32 0.0, %v1831
    %v1833 = vpop.f32.mrb[0].mxu0
    %v1834 = vadd.f32 0.0, %v1833
    %v1835 = vpop.f32.mrb[0].mxu0
    %v1836 = vadd.f32 0.0, %v1835
    %1837 = vdwg.mxu0
    %v1838 = vadd.f32 %v1693, %v1830
    %v1839 = vadd.f32 %v1695, %v1832
    %v1840 = vadd.f32 %v1697, %v1834
    %v1841 = vadd.f32 %v1699, %v1836
    %1842 = vrot.lane.b32.xlu0 %v1428, 1
    %v1843 = vpop.permute.xlu0 %1842
    %1844 = vrot.lane.b32.xlu0 %v1430, 1
    %v1845 = vpop.permute.xlu0 %1844
    %1846 = vrot.lane.b32.xlu0 %v1432, 1
    %v1847 = vpop.permute.xlu0 %1846
    %1848 = vrot.lane.b32.xlu0 %v1434, 1
    %v1849 = vpop.permute.xlu0 %1848
    %1850 = vrot.lane.b32.xlu0 %v1429, 1
    %v1851 = vpop.permute.xlu0 %1850
    %1852 = vrot.lane.b32.xlu0 %v1431, 1
    %v1853 = vpop.permute.xlu0 %1852
    %1854 = vrot.lane.b32.xlu0 %v1433, 1
    %v1855 = vpop.permute.xlu0 %1854
    %1856 = vrot.lane.b32.xlu0 %v1435, 1
    %v1857 = vpop.permute.xlu0 %1856
    %v1858 = vsel %vm550, %v1843, %v1851
    %v1859 = vsel %vm550, %v1845, %v1853
    %v1860 = vsel %vm550, %v1847, %v1855
    %v1861 = vsel %vm550, %v1849, %v1857
    %v1862 = vsel %vm550, %v1851, %v1843
    %v1863 = vsel %vm550, %v1853, %v1845
    %v1864 = vsel %vm550, %v1855, %v1847
    %v1865 = vsel %vm550, %v1857, %v1849
    %v1866 = vmul.f32 %v1862, %v563
    %v1867 = vmul.f32 %v1858, %v567
    %v1868 = vmul.f32 %v1863, %v563
    %v1869 = vmul.f32 %v1859, %v567
    %v1870 = vmul.f32 %v1864, %v563
    %v1871 = vmul.f32 %v1860, %v567
    %v1872 = vmul.f32 %v1865, %v563
    %v1873 = vmul.f32 %v1861, %v567
    %v1874 = vpack.c.bf16 %v1868, %v1866
    %v1875 = vpack.c.bf16 %v1869, %v1867
    %v1876 = vpack.c.bf16 %v1872, %v1870
    %v1877 = vpack.c.bf16 %v1873, %v1871
    %s1878 = scalar_lea.vmem [#allocation7], 24
    %v1879 = vld [vmem:[%s1878] sm:$0xf]
    %v1880 = vld [vmem:[%s1878 + $0x4] sm:$0xf]
    %v1883 = vunpack.c.l.b16 %v1879
    %v1884 = vunpack.c.l.b16 %v1880
    %v1885 = vpack.c.b16 %v1884, %v1883
    %v1887 = vsel %vm197, %v1885, 0
    %1889 = vmatprep.subr.bf16.mxu0 %v1875
    %1890 = vmatpush1.bf16.msra.mxu0 %v1874
    %1891 = vmatprep.subr.bf16.mxu0 0
    %1892 = vmatpush1.bf16.msra.mxu0 0
    %1893 = vmatprep.subr.bf16.mxu0 0
    %1894 = vmatpush1.bf16.msra.mxu0 0
    %1895 = vmatprep.subr.bf16.mxu0 0
    %1896 = vmatpush1.bf16.msra.mxu0 0
    %1897 = vmatprep.subr.bf16.mxu0 0
    %1898 = vmatpush1.bf16.msra.mxu0 0
    %1899 = vmatprep.subr.bf16.mxu0 0
    %1900 = vmatpush1.bf16.msra.mxu0 0
    %1901 = vmatprep.subr.bf16.mxu0 0
    %1902 = vmatpush1.bf16.msra.mxu0 0
    %1903 = vmatprep.subr.bf16.mxu0 0
    %1904 = vmatpush1.bf16.msra.mxu0 0
    %1905 = vmatprep.subr.bf16.mxu0 0
    %1906 = vmatpush1.bf16.msra.mxu0 0
    %1907 = vmatprep.subr.bf16.mxu0 0
    %1908 = vmatpush1.bf16.msra.mxu0 0
    %1909 = vmatprep.subr.bf16.mxu0 0
    %1910 = vmatpush1.bf16.msra.mxu0 0
    %1911 = vmatprep.subr.bf16.mxu0 0
    %1912 = vmatpush1.bf16.msra.mxu0 0
    %1913 = vmatprep.subr.bf16.mxu0 0
    %1914 = vmatpush1.bf16.msra.mxu0 0
    %1915 = vmatprep.subr.bf16.mxu0 0
    %1916 = vmatpush1.bf16.msra.mxu0 0
    %1917 = vmatprep.subr.bf16.mxu0 0
    %1918 = vmatpush1.bf16.msra.mxu0 0
    %1919 = vmatprep.subr.bf16.mxu0 0
    %1920 = vmatpush1.bf16.msra.mxu0 0
    %1921 = vmatprep.mubr.bf16.mxu0 0
    %1922 = vmatmul.mubr.bf16.gmra.mrb[0].mxu0 %v1887
    %v1923 = vpop.f32.mrb[0].mxu0
    %v1924 = vadd.f32 0.0, %v1923
    %v1925 = vpop.f32.mrb[0].mxu0
    %v1926 = vadd.f32 0.0, %v1925
    %v1927 = vpop.f32.mrb[0].mxu0
    %v1928 = vadd.f32 0.0, %v1927
    %v1929 = vpop.f32.mrb[0].mxu0
    %v1930 = vadd.f32 0.0, %v1929
    %1931 = vdwg.mxu0
    %v1932 = vadd.f32 %v1791, %v1924
    %v1933 = vadd.f32 %v1792, %v1926
    %v1934 = vadd.f32 %v1793, %v1928
    %v1935 = vadd.f32 %v1794, %v1930
    %1936 = vmatprep.subr.bf16.mxu0 %v1877
    %1937 = vmatpush1.bf16.msra.mxu0 %v1876
    %1938 = vmatprep.subr.bf16.mxu0 0
    %1939 = vmatpush1.bf16.msra.mxu0 0
    %1940 = vmatprep.subr.bf16.mxu0 0
    %1941 = vmatpush1.bf16.msra.mxu0 0
    %1942 = vmatprep.subr.bf16.mxu0 0
    %1943 = vmatpush1.bf16.msra.mxu0 0
    %1944 = vmatprep.subr.bf16.mxu0 0
    %1945 = vmatpush1.bf16.msra.mxu0 0
    %1946 = vmatprep.subr.bf16.mxu0 0
    %1947 = vmatpush1.bf16.msra.mxu0 0
    %1948 = vmatprep.subr.bf16.mxu0 0
    %1949 = vmatpush1.bf16.msra.mxu0 0
    %1950 = vmatprep.subr.bf16.mxu0 0
    %1951 = vmatpush1.bf16.msra.mxu0 0
    %1952 = vmatprep.subr.bf16.mxu0 0
    %1953 = vmatpush1.bf16.msra.mxu0 0
    %1954 = vmatprep.subr.bf16.mxu0 0
    %1955 = vmatpush1.bf16.msra.mxu0 0
    %1956 = vmatprep.subr.bf16.mxu0 0
    %1957 = vmatpush1.bf16.msra.mxu0 0
    %1958 = vmatprep.subr.bf16.mxu0 0
    %1959 = vmatpush1.bf16.msra.mxu0 0
    %1960 = vmatprep.subr.bf16.mxu0 0
    %1961 = vmatpush1.bf16.msra.mxu0 0
    %1962 = vmatprep.subr.bf16.mxu0 0
    %1963 = vmatpush1.bf16.msra.mxu0 0
    %1964 = vmatprep.subr.bf16.mxu0 0
    %1965 = vmatpush1.bf16.msra.mxu0 0
    %1966 = vmatprep.subr.bf16.mxu0 0
    %1967 = vmatpush1.bf16.msra.mxu0 0
    %1968 = vmatprep.mubr.bf16.mxu0 0
    %1969 = vmatmul.mubr.bf16.gmra.mrb[0].mxu0 %v1887
    %v1970 = vpop.f32.mrb[0].mxu0
    %v1971 = vadd.f32 0.0, %v1970
    %v1972 = vpop.f32.mrb[0].mxu0
    %v1973 = vadd.f32 0.0, %v1972
    %v1974 = vpop.f32.mrb[0].mxu0
    %v1975 = vadd.f32 0.0, %v1974
    %v1976 = vpop.f32.mrb[0].mxu0
    %v1977 = vadd.f32 0.0, %v1976
    %1978 = vdwg.mxu0
    %v1979 = vadd.f32 %v1838, %v1971
    %v1980 = vadd.f32 %v1839, %v1973
    %v1981 = vadd.f32 %v1840, %v1975
    %v1982 = vadd.f32 %v1841, %v1977
    %v1983 = vpack.c.bf16 %v1430, %v1428
    %v1984 = vpack.c.bf16 %v1431, %v1429
    %v1985 = vpack.c.bf16 %v1434, %v1432
    %v1986 = vpack.c.bf16 %v1435, %v1433
    %s1987 = scalar_lea.vmem [#allocation7], 32
    %v1988 = vld [vmem:[%s1987] sm:$0xf]
    %v1989 = vld [vmem:[%s1987 + $0x4] sm:$0xf]
    %v1992 = vunpack.c.l.b16 %v1988
    %v1993 = vunpack.c.l.b16 %v1989
    %v1994 = vpack.c.b16 %v1993, %v1992
    %v1996 = vsel %vm197, %v1994, 0
    %1998 = vmatprep.subr.bf16.mxu0 %v1984
    %1999 = vmatpush1.bf16.msra.mxu0 %v1983
    %2000 = vmatprep.subr.bf16.mxu0 0
    %2001 = vmatpush1.bf16.msra.mxu0 0
    %2002 = vmatprep.subr.bf16.mxu0 0
    %2003 = vmatpush1.bf16.msra.mxu0 0
    %2004 = vmatprep.subr.bf16.mxu0 0
    %2005 = vmatpush1.bf16.msra.mxu0 0
    %2006 = vmatprep.subr.bf16.mxu0 0
    %2007 = vmatpush1.bf16.msra.mxu0 0
    %2008 = vmatprep.subr.bf16.mxu0 0
    %2009 = vmatpush1.bf16.msra.mxu0 0
    %2010 = vmatprep.subr.bf16.mxu0 0
    %2011 = vmatpush1.bf16.msra.mxu0 0
    %2012 = vmatprep.subr.bf16.mxu0 0
    %2013 = vmatpush1.bf16.msra.mxu0 0
    %2014 = vmatprep.subr.bf16.mxu0 0
    %2015 = vmatpush1.bf16.msra.mxu0 0
    %2016 = vmatprep.subr.bf16.mxu0 0
    %2017 = vmatpush1.bf16.msra.mxu0 0
    %2018 = vmatprep.subr.bf16.mxu0 0
    %2019 = vmatpush1.bf16.msra.mxu0 0
    %2020 = vmatprep.subr.bf16.mxu0 0
    %2021 = vmatpush1.bf16.msra.mxu0 0
    %2022 = vmatprep.subr.bf16.mxu0 0
    %2023 = vmatpush1.bf16.msra.mxu0 0
    %2024 = vmatprep.subr.bf16.mxu0 0
    %2025 = vmatpush1.bf16.msra.mxu0 0
    %2026 = vmatprep.subr.bf16.mxu0 0
    %2027 = vmatpush1.bf16.msra.mxu0 0
    %2028 = vmatprep.subr.bf16.mxu0 0
    %2029 = vmatpush1.bf16.msra.mxu0 0
    %2030 = vmatprep.mubr.bf16.mxu0 0
    %2031 = vmatmul.mubr.bf16.gmra.mrb[0].mxu0 %v1996
    %v2032 = vpop.f32.mrb[0].mxu0
    %v2033 = vadd.f32 0.0, %v2032
    %v2034 = vpop.f32.mrb[0].mxu0
    %v2035 = vadd.f32 0.0, %v2034
    %v2036 = vpop.f32.mrb[0].mxu0
    %v2037 = vadd.f32 0.0, %v2036
    %v2038 = vpop.f32.mrb[0].mxu0
    %v2039 = vadd.f32 0.0, %v2038
    %2040 = vdwg.mxu0
    %v2041 = vadd.f32 %v1932, %v2033
    %v2042 = vadd.f32 %v1933, %v2035
    %v2043 = vadd.f32 %v1934, %v2037
    %v2044 = vadd.f32 %v1935, %v2039
    %2045 = vmatprep.subr.bf16.mxu0 %v1986
    %2046 = vmatpush1.bf16.msra.mxu0 %v1985
    %2047 = vmatprep.subr.bf16.mxu0 0
    %2048 = vmatpush1.bf16.msra.mxu0 0
    %2049 = vmatprep.subr.bf16.mxu0 0
    %2050 = vmatpush1.bf16.msra.mxu0 0
    %2051 = vmatprep.subr.bf16.mxu0 0
    %2052 = vmatpush1.bf16.msra.mxu0 0
    %2053 = vmatprep.subr.bf16.mxu0 0
    %2054 = vmatpush1.bf16.msra.mxu0 0
    %2055 = vmatprep.subr.bf16.mxu0 0
    %2056 = vmatpush1.bf16.msra.mxu0 0
    %2057 = vmatprep.subr.bf16.mxu0 0
    %2058 = vmatpush1.bf16.msra.mxu0 0
    %2059 = vmatprep.subr.bf16.mxu0 0
    %2060 = vmatpush1.bf16.msra.mxu0 0
    %2061 = vmatprep.subr.bf16.mxu0 0
    %2062 = vmatpush1.bf16.msra.mxu0 0
    %2063 = vmatprep.subr.bf16.mxu0 0
    %2064 = vmatpush1.bf16.msra.mxu0 0
    %2065 = vmatprep.subr.bf16.mxu0 0
    %2066 = vmatpush1.bf16.msra.mxu0 0
    %2067 = vmatprep.subr.bf16.mxu0 0
    %2068 = vmatpush1.bf16.msra.mxu0 0
    %2069 = vmatprep.subr.bf16.mxu0 0
    %2070 = vmatpush1.bf16.msra.mxu0 0
    %2071 = vmatprep.subr.bf16.mxu0 0
    %2072 = vmatpush1.bf16.msra.mxu0 0
    %2073 = vmatprep.subr.bf16.mxu0 0
    %2074 = vmatpush1.bf16.msra.mxu0 0
    %2075 = vmatprep.subr.bf16.mxu0 0
    %2076 = vmatpush1.bf16.msra.mxu0 0
    %2077 = vmatprep.mubr.bf16.mxu0 0
    %2078 = vmatmul.mubr.bf16.gmra.mrb[0].mxu0 %v1996
    %v2079 = vpop.f32.mrb[0].mxu0
    %v2080 = vadd.f32 0.0, %v2079
    %v2081 = vpop.f32.mrb[0].mxu0
    %v2082 = vadd.f32 0.0, %v2081
    %v2083 = vpop.f32.mrb[0].mxu0
    %v2084 = vadd.f32 0.0, %v2083
    %v2085 = vpop.f32.mrb[0].mxu0
    %v2086 = vadd.f32 0.0, %v2085
    %2087 = vdwg.mxu0
    %v2088 = vadd.f32 %v1979, %v2080
    %v2089 = vadd.f32 %v1980, %v2082
    %v2090 = vadd.f32 %v1981, %v2084
    %v2091 = vadd.f32 %v1982, %v2086
    %2092 = vrot.lane.b32.xlu0 %v1428, 127
    %v2093 = vpop.permute.xlu0 %2092
    %2094 = vrot.lane.b32.xlu0 %v1430, 127
    %v2095 = vpop.permute.xlu0 %2094
    %2096 = vrot.lane.b32.xlu0 %v1432, 127
    %v2097 = vpop.permute.xlu0 %2096
    %2098 = vrot.lane.b32.xlu0 %v1434, 127
    %v2099 = vpop.permute.xlu0 %2098
    %2100 = vrot.lane.b32.xlu0 %v1429, 127
    %v2101 = vpop.permute.xlu0 %2100
    %2102 = vrot.lane.b32.xlu0 %v1431, 127
    %v2103 = vpop.permute.xlu0 %2102
    %2104 = vrot.lane.b32.xlu0 %v1433, 127
    %v2105 = vpop.permute.xlu0 %2104
    %2106 = vrot.lane.b32.xlu0 %v1435, 127
    %v2107 = vpop.permute.xlu0 %2106
    %v2108 = vsel %vm812, %v2093, %v2101
    %v2109 = vsel %vm812, %v2095, %v2103
    %v2110 = vsel %vm812, %v2097, %v2105
    %v2111 = vsel %vm812, %v2099, %v2107
    %v2112 = vsel %vm812, %v2101, %v2093
    %v2113 = vsel %vm812, %v2103, %v2095
    %v2114 = vsel %vm812, %v2105, %v2097
    %v2115 = vsel %vm812, %v2107, %v2099
    %v2116 = vmul.f32 %v2108, %v825
    %v2117 = vmul.f32 %v2112, %v829
    %v2118 = vmul.f32 %v2109, %v825
    %v2119 = vmul.f32 %v2113, %v829
    %v2120 = vmul.f32 %v2110, %v825
    %v2121 = vmul.f32 %v2114, %v829
    %v2122 = vmul.f32 %v2111, %v825
    %v2123 = vmul.f32 %v2115, %v829
    %v2124 = vpack.c.bf16 %v2118, %v2116
    %v2125 = vpack.c.bf16 %v2119, %v2117
    %v2126 = vpack.c.bf16 %v2122, %v2120
    %v2127 = vpack.c.bf16 %v2123, %v2121
    %s2128 = scalar_lea.vmem [#allocation7], 40
    %v2129 = vld [vmem:[%s2128] sm:$0xf]
    %v2130 = vld [vmem:[%s2128 + $0x4] sm:$0xf]
    %v2133 = vunpack.c.l.b16 %v2129
    %v2134 = vunpack.c.l.b16 %v2130
    %v2135 = vpack.c.b16 %v2134, %v2133
    %v2137 = vsel %vm197, %v2135, 0
    %2139 = vmatprep.subr.bf16.mxu0 %v2125
    %2140 = vmatpush1.bf16.msra.mxu0 %v2124
    %2141 = vmatprep.subr.bf16.mxu0 0
    %2142 = vmatpush1.bf16.msra.mxu0 0
    %2143 = vmatprep.subr.bf16.mxu0 0
    %2144 = vmatpush1.bf16.msra.mxu0 0
    %2145 = vmatprep.subr.bf16.mxu0 0
    %2146 = vmatpush1.bf16.msra.mxu0 0
    %2147 = vmatprep.subr.bf16.mxu0 0
    %2148 = vmatpush1.bf16.msra.mxu0 0
    %2149 = vmatprep.subr.bf16.mxu0 0
    %2150 = vmatpush1.bf16.msra.mxu0 0
    %2151 = vmatprep.subr.bf16.mxu0 0
    %2152 = vmatpush1.bf16.msra.mxu0 0
    %2153 = vmatprep.subr.bf16.mxu0 0
    %2154 = vmatpush1.bf16.msra.mxu0 0
    %2155 = vmatprep.subr.bf16.mxu0 0
    %2156 = vmatpush1.bf16.msra.mxu0 0
    %2157 = vmatprep.subr.bf16.mxu0 0
    %2158 = vmatpush1.bf16.msra.mxu0 0
    %2159 = vmatprep.subr.bf16.mxu0 0
    %2160 = vmatpush1.bf16.msra.mxu0 0
    %2161 = vmatprep.subr.bf16.mxu0 0
    %2162 = vmatpush1.bf16.msra.mxu0 0
    %2163 = vmatprep.subr.bf16.mxu0 0
    %2164 = vmatpush1.bf16.msra.mxu0 0
    %2165 = vmatprep.subr.bf16.mxu0 0
    %2166 = vmatpush1.bf16.msra.mxu0 0
    %2167 = vmatprep.subr.bf16.mxu0 0
    %2168 = vmatpush1.bf16.msra.mxu0 0
    %2169 = vmatprep.subr.bf16.mxu0 0
    %2170 = vmatpush1.bf16.msra.mxu0 0
    %2171 = vmatprep.mubr.bf16.mxu0 0
    %2172 = vmatmul.mubr.bf16.gmra.mrb[0].mxu0 %v2137
    %v2173 = vpop.f32.mrb[0].mxu0
    %v2174 = vadd.f32 0.0, %v2173
    %v2175 = vpop.f32.mrb[0].mxu0
    %v2176 = vadd.f32 0.0, %v2175
    %v2177 = vpop.f32.mrb[0].mxu0
    %v2178 = vadd.f32 0.0, %v2177
    %v2179 = vpop.f32.mrb[0].mxu0
    %v2180 = vadd.f32 0.0, %v2179
    %2181 = vdwg.mxu0
    %v2182 = vadd.f32 %v2041, %v2174
    %v2183 = vadd.f32 %v2042, %v2176
    %v2184 = vadd.f32 %v2043, %v2178
    %v2185 = vadd.f32 %v2044, %v2180
    %2186 = vmatprep.subr.bf16.mxu0 %v2127
    %2187 = vmatpush1.bf16.msra.mxu0 %v2126
    %2188 = vmatprep.subr.bf16.mxu0 0
    %2189 = vmatpush1.bf16.msra.mxu0 0
    %2190 = vmatprep.subr.bf16.mxu0 0
    %2191 = vmatpush1.bf16.msra.mxu0 0
    %2192 = vmatprep.subr.bf16.mxu0 0
    %2193 = vmatpush1.bf16.msra.mxu0 0
    %2194 = vmatprep.subr.bf16.mxu0 0
    %2195 = vmatpush1.bf16.msra.mxu0 0
    %2196 = vmatprep.subr.bf16.mxu0 0
    %2197 = vmatpush1.bf16.msra.mxu0 0
    %2198 = vmatprep.subr.bf16.mxu0 0
    %2199 = vmatpush1.bf16.msra.mxu0 0
    %2200 = vmatprep.subr.bf16.mxu0 0
    %2201 = vmatpush1.bf16.msra.mxu0 0
    %2202 = vmatprep.subr.bf16.mxu0 0
    %2203 = vmatpush1.bf16.msra.mxu0 0
    %2204 = vmatprep.subr.bf16.mxu0 0
    %2205 = vmatpush1.bf16.msra.mxu0 0
    %2206 = vmatprep.subr.bf16.mxu0 0
    %2207 = vmatpush1.bf16.msra.mxu0 0
    %2208 = vmatprep.subr.bf16.mxu0 0
    %2209 = vmatpush1.bf16.msra.mxu0 0
    %2210 = vmatprep.subr.bf16.mxu0 0
    %2211 = vmatpush1.bf16.msra.mxu0 0
    %2212 = vmatprep.subr.bf16.mxu0 0
    %2213 = vmatpush1.bf16.msra.mxu0 0
    %2214 = vmatprep.subr.bf16.mxu0 0
    %2215 = vmatpush1.bf16.msra.mxu0 0
    %2216 = vmatprep.subr.bf16.mxu0 0
    %2217 = vmatpush1.bf16.msra.mxu0 0
    %2218 = vmatprep.mubr.bf16.mxu0 0
    %2219 = vmatmul.mubr.bf16.gmra.mrb[0].mxu0 %v2137
    %v2220 = vpop.f32.mrb[0].mxu0
    %v2221 = vadd.f32 0.0, %v2220
    %v2222 = vpop.f32.mrb[0].mxu0
    %v2223 = vadd.f32 0.0, %v2222
    %v2224 = vpop.f32.mrb[0].mxu0
    %v2225 = vadd.f32 0.0, %v2224
    %v2226 = vpop.f32.mrb[0].mxu0
    %v2227 = vadd.f32 0.0, %v2226
    %2228 = vdwg.mxu0
    %v2229 = vadd.f32 %v2088, %v2221
    %v2230 = vadd.f32 %v2089, %v2223
    %v2231 = vadd.f32 %v2090, %v2225
    %v2232 = vadd.f32 %v2091, %v2227
    %2233 = vrot.lane.b32.xlu0 %v1428, 113
    %v2234 = vpop.permute.xlu0 %2233
    %2235 = vrot.lane.b32.xlu0 %v1430, 113
    %v2236 = vpop.permute.xlu0 %2235
    %2237 = vrot.lane.b32.xlu0 %v1432, 113
    %v2238 = vpop.permute.xlu0 %2237
    %2239 = vrot.lane.b32.xlu0 %v1434, 113
    %v2240 = vpop.permute.xlu0 %2239
    %2241 = vrot.lane.b32.xlu0 %v1429, 113
    %v2242 = vpop.permute.xlu0 %2241
    %2243 = vrot.lane.b32.xlu0 %v1431, 113
    %v2244 = vpop.permute.xlu0 %2243
    %2245 = vrot.lane.b32.xlu0 %v1433, 113
    %v2246 = vpop.permute.xlu0 %2245
    %2247 = vrot.lane.b32.xlu0 %v1435, 113
    %v2248 = vpop.permute.xlu0 %2247
    %v2249 = vsel %vm965, %v2234, %v2242
    %v2250 = vsel %vm965, %v2236, %v2244
    %v2251 = vsel %vm965, %v2238, %v2246
    %v2252 = vsel %vm965, %v2240, %v2248
    %v2253 = vsel %vm965, %v2242, %v2234
    %v2254 = vsel %vm965, %v2244, %v2236
    %v2255 = vsel %vm965, %v2246, %v2238
    %v2256 = vsel %vm965, %v2248, %v2240
    %v2257 = vmul.f32 %v2249, %v978
    %v2258 = vmul.f32 %v2253, %v982
    %v2259 = vmul.f32 %v2250, %v978
    %v2260 = vmul.f32 %v2254, %v982
    %v2261 = vmul.f32 %v2251, %v978
    %v2262 = vmul.f32 %v2255, %v982
    %v2263 = vmul.f32 %v2252, %v978
    %v2264 = vmul.f32 %v2256, %v982
    %v2265 = vpack.c.bf16 %v2259, %v2257
    %v2266 = vpack.c.bf16 %v2260, %v2258
    %v2267 = vpack.c.bf16 %v2263, %v2261
    %v2268 = vpack.c.bf16 %v2264, %v2262
    %s2269 = scalar_lea.vmem [#allocation7], 48
    %v2270 = vld [vmem:[%s2269] sm:$0xf]
    %v2271 = vld [vmem:[%s2269 + $0x4] sm:$0xf]
    %v2274 = vunpack.c.l.b16 %v2270
    %v2275 = vunpack.c.l.b16 %v2271
    %v2276 = vpack.c.b16 %v2275, %v2274
    %v2278 = vsel %vm197, %v2276, 0
    %2280 = vmatprep.subr.bf16.mxu0 %v2266
    %2281 = vmatpush1.bf16.msra.mxu0 %v2265
    %2282 = vmatprep.subr.bf16.mxu0 0
    %2283 = vmatpush1.bf16.msra.mxu0 0
    %2284 = vmatprep.subr.bf16.mxu0 0
    %2285 = vmatpush1.bf16.msra.mxu0 0
    %2286 = vmatprep.subr.bf16.mxu0 0
    %2287 = vmatpush1.bf16.msra.mxu0 0
    %2288 = vmatprep.subr.bf16.mxu0 0
    %2289 = vmatpush1.bf16.msra.mxu0 0
    %2290 = vmatprep.subr.bf16.mxu0 0
    %2291 = vmatpush1.bf16.msra.mxu0 0
    %2292 = vmatprep.subr.bf16.mxu0 0
    %2293 = vmatpush1.bf16.msra.mxu0 0
    %2294 = vmatprep.subr.bf16.mxu0 0
    %2295 = vmatpush1.bf16.msra.mxu0 0
    %2296 = vmatprep.subr.bf16.mxu0 0
    %2297 = vmatpush1.bf16.msra.mxu0 0
    %2298 = vmatprep.subr.bf16.mxu0 0
    %2299 = vmatpush1.bf16.msra.mxu0 0
    %2300 = vmatprep.subr.bf16.mxu0 0
    %2301 = vmatpush1.bf16.msra.mxu0 0
    %2302 = vmatprep.subr.bf16.mxu0 0
    %2303 = vmatpush1.bf16.msra.mxu0 0
    %2304 = vmatprep.subr.bf16.mxu0 0
    %2305 = vmatpush1.bf16.msra.mxu0 0
    %2306 = vmatprep.subr.bf16.mxu0 0
    %2307 = vmatpush1.bf16.msra.mxu0 0
    %2308 = vmatprep.subr.bf16.mxu0 0
    %2309 = vmatpush1.bf16.msra.mxu0 0
    %2310 = vmatprep.subr.bf16.mxu0 0
    %2311 = vmatpush1.bf16.msra.mxu0 0
    %2312 = vmatprep.mubr.bf16.mxu0 0
    %2313 = vmatmul.mubr.bf16.gmra.mrb[0].mxu0 %v2278
    %v2314 = vpop.f32.mrb[0].mxu0
    %v2315 = vadd.f32 0.0, %v2314
    %v2316 = vpop.f32.mrb[0].mxu0
    %v2317 = vadd.f32 0.0, %v2316
    %v2318 = vpop.f32.mrb[0].mxu0
    %v2319 = vadd.f32 0.0, %v2318
    %v2320 = vpop.f32.mrb[0].mxu0
    %v2321 = vadd.f32 0.0, %v2320
    %2322 = vdwg.mxu0
    %v2323 = vadd.f32 %v2182, %v2315
    %v2324 = vadd.f32 %v2183, %v2317
    %v2325 = vadd.f32 %v2184, %v2319
    %v2326 = vadd.f32 %v2185, %v2321
    %2327 = vmatprep.subr.bf16.mxu0 %v2268
    %2328 = vmatpush1.bf16.msra.mxu0 %v2267
    %2329 = vmatprep.subr.bf16.mxu0 0
    %2330 = vmatpush1.bf16.msra.mxu0 0
    %2331 = vmatprep.subr.bf16.mxu0 0
    %2332 = vmatpush1.bf16.msra.mxu0 0
    %2333 = vmatprep.subr.bf16.mxu0 0
    %2334 = vmatpush1.bf16.msra.mxu0 0
    %2335 = vmatprep.subr.bf16.mxu0 0
    %2336 = vmatpush1.bf16.msra.mxu0 0
    %2337 = vmatprep.subr.bf16.mxu0 0
    %2338 = vmatpush1.bf16.msra.mxu0 0
    %2339 = vmatprep.subr.bf16.mxu0 0
    %2340 = vmatpush1.bf16.msra.mxu0 0
    %2341 = vmatprep.subr.bf16.mxu0 0
    %2342 = vmatpush1.bf16.msra.mxu0 0
    %2343 = vmatprep.subr.bf16.mxu0 0
    %2344 = vmatpush1.bf16.msra.mxu0 0
    %2345 = vmatprep.subr.bf16.mxu0 0
    %2346 = vmatpush1.bf16.msra.mxu0 0
    %2347 = vmatprep.subr.bf16.mxu0 0
    %2348 = vmatpush1.bf16.msra.mxu0 0
    %2349 = vmatprep.subr.bf16.mxu0 0
    %2350 = vmatpush1.bf16.msra.mxu0 0
    %2351 = vmatprep.subr.bf16.mxu0 0
    %2352 = vmatpush1.bf16.msra.mxu0 0
    %2353 = vmatprep.subr.bf16.mxu0 0
    %2354 = vmatpush1.bf16.msra.mxu0 0
    %2355 = vmatprep.subr.bf16.mxu0 0
    %2356 = vmatpush1.bf16.msra.mxu0 0
    %2357 = vmatprep.subr.bf16.mxu0 0
    %2358 = vmatpush1.bf16.msra.mxu0 0
    %2359 = vmatprep.mubr.bf16.mxu0 0
    %2360 = vmatmul.mubr.bf16.gmra.mrb[0].mxu0 %v2278
    %v2361 = vpop.f32.mrb[0].mxu0
    %v2362 = vadd.f32 0.0, %v2361
    %v2363 = vpop.f32.mrb[0].mxu0
    %v2364 = vadd.f32 0.0, %v2363
    %v2365 = vpop.f32.mrb[0].mxu0
    %v2366 = vadd.f32 0.0, %v2365
    %v2367 = vpop.f32.mrb[0].mxu0
    %v2368 = vadd.f32 0.0, %v2367
    %2369 = vdwg.mxu0
    %v2370 = vadd.f32 %v2229, %v2362
    %v2371 = vadd.f32 %v2230, %v2364
    %v2372 = vadd.f32 %v2231, %v2366
    %v2373 = vadd.f32 %v2232, %v2368
    %2374 = vrot.lane.b32.xlu0 %v1428, 112
    %v2375 = vpop.permute.xlu0 %2374
    %2376 = vrot.lane.b32.xlu0 %v1430, 112
    %v2377 = vpop.permute.xlu0 %2376
    %2378 = vrot.lane.b32.xlu0 %v1432, 112
    %v2379 = vpop.permute.xlu0 %2378
    %2380 = vrot.lane.b32.xlu0 %v1434, 112
    %v2381 = vpop.permute.xlu0 %2380
    %2382 = vrot.lane.b32.xlu0 %v1429, 112
    %v2383 = vpop.permute.xlu0 %2382
    %2384 = vrot.lane.b32.xlu0 %v1431, 112
    %v2385 = vpop.permute.xlu0 %2384
    %2386 = vrot.lane.b32.xlu0 %v1433, 112
    %v2387 = vpop.permute.xlu0 %2386
    %2388 = vrot.lane.b32.xlu0 %v1435, 112
    %v2389 = vpop.permute.xlu0 %2388
    %v2390 = vsel %vm1118, %v2375, %v2383
    %v2391 = vsel %vm1118, %v2377, %v2385
    %v2392 = vsel %vm1118, %v2379, %v2387
    %v2393 = vsel %vm1118, %v2381, %v2389
    %v2394 = vsel %vm1118, %v2383, %v2375
    %v2395 = vsel %vm1118, %v2385, %v2377
    %v2396 = vsel %vm1118, %v2387, %v2379
    %v2397 = vsel %vm1118, %v2389, %v2381
    %v2398 = vmul.f32 %v2390, %v1131
    %v2399 = vmul.f32 %v2394, %v1135
    %v2400 = vmul.f32 %v2391, %v1131
    %v2401 = vmul.f32 %v2395, %v1135
    %v2402 = vmul.f32 %v2392, %v1131
    %v2403 = vmul.f32 %v2396, %v1135
    %v2404 = vmul.f32 %v2393, %v1131
    %v2405 = vmul.f32 %v2397, %v1135
    %v2406 = vpack.c.bf16 %v2400, %v2398
    %v2407 = vpack.c.bf16 %v2401, %v2399
    %v2408 = vpack.c.bf16 %v2404, %v2402
    %v2409 = vpack.c.bf16 %v2405, %v2403
    %s2410 = scalar_lea.vmem [#allocation7], 56
    %v2411 = vld [vmem:[%s2410] sm:$0xf]
    %v2412 = vld [vmem:[%s2410 + $0x4] sm:$0xf]
    %v2415 = vunpack.c.l.b16 %v2411
    %v2416 = vunpack.c.l.b16 %v2412
    %v2417 = vpack.c.b16 %v2416, %v2415
    %v2419 = vsel %vm197, %v2417, 0
    %2421 = vmatprep.subr.bf16.mxu0 %v2407
    %2422 = vmatpush1.bf16.msra.mxu0 %v2406
    %2423 = vmatprep.subr.bf16.mxu0 0
    %2424 = vmatpush1.bf16.msra.mxu0 0
    %2425 = vmatprep.subr.bf16.mxu0 0
    %2426 = vmatpush1.bf16.msra.mxu0 0
    %2427 = vmatprep.subr.bf16.mxu0 0
    %2428 = vmatpush1.bf16.msra.mxu0 0
    %2429 = vmatprep.subr.bf16.mxu0 0
    %2430 = vmatpush1.bf16.msra.mxu0 0
    %2431 = vmatprep.subr.bf16.mxu0 0
    %2432 = vmatpush1.bf16.msra.mxu0 0
    %2433 = vmatprep.subr.bf16.mxu0 0
    %2434 = vmatpush1.bf16.msra.mxu0 0
    %2435 = vmatprep.subr.bf16.mxu0 0
    %2436 = vmatpush1.bf16.msra.mxu0 0
    %2437 = vmatprep.subr.bf16.mxu0 0
    %2438 = vmatpush1.bf16.msra.mxu0 0
    %2439 = vmatprep.subr.bf16.mxu0 0
    %2440 = vmatpush1.bf16.msra.mxu0 0
    %2441 = vmatprep.subr.bf16.mxu0 0
    %2442 = vmatpush1.bf16.msra.mxu0 0
    %2443 = vmatprep.subr.bf16.mxu0 0
    %2444 = vmatpush1.bf16.msra.mxu0 0
    %2445 = vmatprep.subr.bf16.mxu0 0
    %2446 = vmatpush1.bf16.msra.mxu0 0
    %2447 = vmatprep.subr.bf16.mxu0 0
    %2448 = vmatpush1.bf16.msra.mxu0 0
    %2449 = vmatprep.subr.bf16.mxu0 0
    %2450 = vmatpush1.bf16.msra.mxu0 0
    %2451 = vmatprep.subr.bf16.mxu0 0
    %2452 = vmatpush1.bf16.msra.mxu0 0
    %2453 = vmatprep.mubr.bf16.mxu0 0
    %2454 = vmatmul.mubr.bf16.gmra.mrb[0].mxu0 %v2419
    %v2455 = vpop.f32.mrb[0].mxu0
    %v2456 = vadd.f32 0.0, %v2455
    %v2457 = vpop.f32.mrb[0].mxu0
    %v2458 = vadd.f32 0.0, %v2457
    %v2459 = vpop.f32.mrb[0].mxu0
    %v2460 = vadd.f32 0.0, %v2459
    %v2461 = vpop.f32.mrb[0].mxu0
    %v2462 = vadd.f32 0.0, %v2461
    %2463 = vdwg.mxu0
    %v2464 = vadd.f32 %v2323, %v2456
    %v2465 = vadd.f32 %v2324, %v2458
    %v2466 = vadd.f32 %v2325, %v2460
    %v2467 = vadd.f32 %v2326, %v2462
    %2468 = vmatprep.subr.bf16.mxu0 %v2409
    %2469 = vmatpush1.bf16.msra.mxu0 %v2408
    %2470 = vmatprep.subr.bf16.mxu0 0
    %2471 = vmatpush1.bf16.msra.mxu0 0
    %2472 = vmatprep.subr.bf16.mxu0 0
    %2473 = vmatpush1.bf16.msra.mxu0 0
    %2474 = vmatprep.subr.bf16.mxu0 0
    %2475 = vmatpush1.bf16.msra.mxu0 0
    %2476 = vmatprep.subr.bf16.mxu0 0
    %2477 = vmatpush1.bf16.msra.mxu0 0
    %2478 = vmatprep.subr.bf16.mxu0 0
    %2479 = vmatpush1.bf16.msra.mxu0 0
    %2480 = vmatprep.subr.bf16.mxu0 0
    %2481 = vmatpush1.bf16.msra.mxu0 0
    %2482 = vmatprep.subr.bf16.mxu0 0
    %2483 = vmatpush1.bf16.msra.mxu0 0
    %2484 = vmatprep.subr.bf16.mxu0 0
    %2485 = vmatpush1.bf16.msra.mxu0 0
    %2486 = vmatprep.subr.bf16.mxu0 0
    %2487 = vmatpush1.bf16.msra.mxu0 0
    %2488 = vmatprep.subr.bf16.mxu0 0
    %2489 = vmatpush1.bf16.msra.mxu0 0
    %2490 = vmatprep.subr.bf16.mxu0 0
    %2491 = vmatpush1.bf16.msra.mxu0 0
    %2492 = vmatprep.subr.bf16.mxu0 0
    %2493 = vmatpush1.bf16.msra.mxu0 0
    %2494 = vmatprep.subr.bf16.mxu0 0
    %2495 = vmatpush1.bf16.msra.mxu0 0
    %2496 = vmatprep.subr.bf16.mxu0 0
    %2497 = vmatpush1.bf16.msra.mxu0 0
    %2498 = vmatprep.subr.bf16.mxu0 0
    %2499 = vmatpush1.bf16.msra.mxu0 0
    %2500 = vmatprep.mubr.bf16.mxu0 0
    %2501 = vmatmul.mubr.bf16.gmra.mrb[0].mxu0 %v2419
    %v2502 = vpop.f32.mrb[0].mxu0
    %v2503 = vadd.f32 0.0, %v2502
    %v2504 = vpop.f32.mrb[0].mxu0
    %v2505 = vadd.f32 0.0, %v2504
    %v2506 = vpop.f32.mrb[0].mxu0
    %v2507 = vadd.f32 0.0, %v2506
    %v2508 = vpop.f32.mrb[0].mxu0
    %v2509 = vadd.f32 0.0, %v2508
    %2510 = vdwg.mxu0
    %v2511 = vadd.f32 %v2370, %v2503
    %v2512 = vadd.f32 %v2371, %v2505
    %v2513 = vadd.f32 %v2372, %v2507
    %v2514 = vadd.f32 %v2373, %v2509
    %2515 = vrot.lane.b32.xlu0 %v1428, 111
    %v2516 = vpop.permute.xlu0 %2515
    %2517 = vrot.lane.b32.xlu0 %v1430, 111
    %v2518 = vpop.permute.xlu0 %2517
    %2519 = vrot.lane.b32.xlu0 %v1432, 111
    %v2520 = vpop.permute.xlu0 %2519
    %2521 = vrot.lane.b32.xlu0 %v1434, 111
    %v2522 = vpop.permute.xlu0 %2521
    %2523 = vrot.lane.b32.xlu0 %v1429, 111
    %v2524 = vpop.permute.xlu0 %2523
    %2525 = vrot.lane.b32.xlu0 %v1431, 111
    %v2526 = vpop.permute.xlu0 %2525
    %2527 = vrot.lane.b32.xlu0 %v1433, 111
    %v2528 = vpop.permute.xlu0 %2527
    %2529 = vrot.lane.b32.xlu0 %v1435, 111
    %v2530 = vpop.permute.xlu0 %2529
    %v2531 = vsel %vm1271, %v2516, %v2524
    %v2532 = vsel %vm1271, %v2518, %v2526
    %v2533 = vsel %vm1271, %v2520, %v2528
    %v2534 = vsel %vm1271, %v2522, %v2530
    %v2535 = vsel %vm1271, %v2524, %v2516
    %v2536 = vsel %vm1271, %v2526, %v2518
    %v2537 = vsel %vm1271, %v2528, %v2520
    %v2538 = vsel %vm1271, %v2530, %v2522
    %v2539 = vmul.f32 %v2531, %v1284
    %v2540 = vmul.f32 %v2535, %v1288
    %v2541 = vmul.f32 %v2532, %v1284
    %v2542 = vmul.f32 %v2536, %v1288
    %v2543 = vmul.f32 %v2533, %v1284
    %v2544 = vmul.f32 %v2537, %v1288
    %v2545 = vmul.f32 %v2534, %v1284
    %v2546 = vmul.f32 %v2538, %v1288
    %v2547 = vpack.c.bf16 %v2541, %v2539
    %v2548 = vpack.c.bf16 %v2542, %v2540
    %v2549 = vpack.c.bf16 %v2545, %v2543
    %v2550 = vpack.c.bf16 %v2546, %v2544
    %s2551 = scalar_lea.vmem [#allocation7], 64
    %v2552 = vld [vmem:[%s2551] sm:$0xf]
    %v2553 = vld [vmem:[%s2551 + $0x4] sm:$0xf]
    %v2556 = vunpack.c.l.b16 %v2552
    %v2557 = vunpack.c.l.b16 %v2553
    %v2558 = vpack.c.b16 %v2557, %v2556
    %v2560 = vsel %vm197, %v2558, 0
    %2562 = vmatprep.subr.bf16.mxu0 %v2548
    %2563 = vmatpush1.bf16.msra.mxu0 %v2547
    %2564 = vmatprep.subr.bf16.mxu0 0
    %2565 = vmatpush1.bf16.msra.mxu0 0
    %2566 = vmatprep.subr.bf16.mxu0 0
    %2567 = vmatpush1.bf16.msra.mxu0 0
    %2568 = vmatprep.subr.bf16.mxu0 0
    %2569 = vmatpush1.bf16.msra.mxu0 0
    %2570 = vmatprep.subr.bf16.mxu0 0
    %2571 = vmatpush1.bf16.msra.mxu0 0
    %2572 = vmatprep.subr.bf16.mxu0 0
    %2573 = vmatpush1.bf16.msra.mxu0 0
    %2574 = vmatprep.subr.bf16.mxu0 0
    %2575 = vmatpush1.bf16.msra.mxu0 0
    %2576 = vmatprep.subr.bf16.mxu0 0
    %2577 = vmatpush1.bf16.msra.mxu0 0
    %2578 = vmatprep.subr.bf16.mxu0 0
    %2579 = vmatpush1.bf16.msra.mxu0 0
    %2580 = vmatprep.subr.bf16.mxu0 0
    %2581 = vmatpush1.bf16.msra.mxu0 0
    %2582 = vmatprep.subr.bf16.mxu0 0
    %2583 = vmatpush1.bf16.msra.mxu0 0
    %2584 = vmatprep.subr.bf16.mxu0 0
    %2585 = vmatpush1.bf16.msra.mxu0 0
    %2586 = vmatprep.subr.bf16.mxu0 0
    %2587 = vmatpush1.bf16.msra.mxu0 0
    %2588 = vmatprep.subr.bf16.mxu0 0
    %2589 = vmatpush1.bf16.msra.mxu0 0
    %2590 = vmatprep.subr.bf16.mxu0 0
    %2591 = vmatpush1.bf16.msra.mxu0 0
    %2592 = vmatprep.subr.bf16.mxu0 0
    %2593 = vmatpush1.bf16.msra.mxu0 0
    %2594 = vmatprep.mubr.bf16.mxu0 0
    %2595 = vmatmul.mubr.bf16.gmra.mrb[0].mxu0 %v2560
    %v2596 = vpop.f32.mrb[0].mxu0
    %v2597 = vadd.f32 0.0, %v2596
    %v2598 = vpop.f32.mrb[0].mxu0
    %v2599 = vadd.f32 0.0, %v2598
    %v2600 = vpop.f32.mrb[0].mxu0
    %v2601 = vadd.f32 0.0, %v2600
    %v2602 = vpop.f32.mrb[0].mxu0
    %v2603 = vadd.f32 0.0, %v2602
    %2604 = vdwg.mxu0
    %v2605 = vadd.f32 %v2464, %v2597
    %v2606 = vadd.f32 %v2465, %v2599
    %v2607 = vadd.f32 %v2466, %v2601
    %v2608 = vadd.f32 %v2467, %v2603
    %2609 = vmatprep.subr.bf16.mxu0 %v2550
    %2610 = vmatpush1.bf16.msra.mxu0 %v2549
    %2611 = vmatprep.subr.bf16.mxu0 0
    %2612 = vmatpush1.bf16.msra.mxu0 0
    %2613 = vmatprep.subr.bf16.mxu0 0
    %2614 = vmatpush1.bf16.msra.mxu0 0
    %2615 = vmatprep.subr.bf16.mxu0 0
    %2616 = vmatpush1.bf16.msra.mxu0 0
    %2617 = vmatprep.subr.bf16.mxu0 0
    %2618 = vmatpush1.bf16.msra.mxu0 0
    %2619 = vmatprep.subr.bf16.mxu0 0
    %2620 = vmatpush1.bf16.msra.mxu0 0
    %2621 = vmatprep.subr.bf16.mxu0 0
    %2622 = vmatpush1.bf16.msra.mxu0 0
    %2623 = vmatprep.subr.bf16.mxu0 0
    %2624 = vmatpush1.bf16.msra.mxu0 0
    %2625 = vmatprep.subr.bf16.mxu0 0
    %2626 = vmatpush1.bf16.msra.mxu0 0
    %2627 = vmatprep.subr.bf16.mxu0 0
    %2628 = vmatpush1.bf16.msra.mxu0 0
    %2629 = vmatprep.subr.bf16.mxu0 0
    %2630 = vmatpush1.bf16.msra.mxu0 0
    %2631 = vmatprep.subr.bf16.mxu0 0
    %2632 = vmatpush1.bf16.msra.mxu0 0
    %2633 = vmatprep.subr.bf16.mxu0 0
    %2634 = vmatpush1.bf16.msra.mxu0 0
    %2635 = vmatprep.subr.bf16.mxu0 0
    %2636 = vmatpush1.bf16.msra.mxu0 0
    %2637 = vmatprep.subr.bf16.mxu0 0
    %2638 = vmatpush1.bf16.msra.mxu0 0
    %2639 = vmatprep.subr.bf16.mxu0 0
    %2640 = vmatpush1.bf16.msra.mxu0 0
    %2641 = vmatprep.mubr.bf16.mxu0 0
    %2642 = vmatmul.mubr.bf16.gmra.mrb[0].mxu0 %v2560
    %v2643 = vpop.f32.mrb[0].mxu0
    %v2644 = vadd.f32 0.0, %v2643
    %v2645 = vpop.f32.mrb[0].mxu0
    %v2646 = vadd.f32 0.0, %v2645
    %v2647 = vpop.f32.mrb[0].mxu0
    %v2648 = vadd.f32 0.0, %v2647
    %v2649 = vpop.f32.mrb[0].mxu0
    %v2650 = vadd.f32 0.0, %v2649
    %2651 = vdwg.mxu0
    %v2652 = vadd.f32 %v2511, %v2644
    %v2653 = vadd.f32 %v2512, %v2646
    %v2654 = vadd.f32 %v2513, %v2648
    %v2655 = vadd.f32 %v2514, %v2650
    %v2656 = vld [vmem:[%s4] sm:$0xff]
    %v2657 = vld [vmem:[%s4 + $0x8] sm:$0xff]
    %2659 = vset.pattern.permute.xlu0 0
    %2660 = vperm.xlu0 %2659, %v2656
    %v2661 = vpop.permute.xlu0 %2660
    %2664 = vset.pattern.permute.xlu0 0
    %2665 = vperm.xlu0 %2664, %v2657
    %v2666 = vpop.permute.xlu0 %2665
    %v2668 = vadd.f32 %v2605, %v2661
    %v2669 = vadd.f32 %v2606, %v2661
    %v2670 = vadd.f32 %v2607, %v2666
    %v2671 = vadd.f32 %v2608, %v2666
    %v2672 = vadd.f32 %v2652, %v2661
    %v2673 = vadd.f32 %v2653, %v2661
    %v2674 = vadd.f32 %v2654, %v2666
    %v2675 = vadd.f32 %v2655, %v2666
    %v2676 = vadd.f32 %v2668, %v66
    %v2677 = vadd.f32 %v2669, %v67
    %v2678 = vadd.f32 %v2670, %v68
    %v2679 = vadd.f32 %v2671, %v69
    %v2680 = vadd.f32 %v2672, %v70
    %v2681 = vadd.f32 %v2673, %v71
    %v2682 = vadd.f32 %v2674, %v72
    %v2683 = vadd.f32 %v2675, %v73
    %2684 = vst [vmem:[#allocation8] sm:$0xff] %v2676
    %2685 = vst [vmem:[#allocation8 + $0x8] sm:$0xff] %v2677
    %2686 = vst [vmem:[#allocation8 + $0x10] sm:$0xff] %v2678
    %2687 = vst [vmem:[#allocation8 + $0x18] sm:$0xff] %v2679
    %2688 = vst [vmem:[#allocation8 + $0x20] sm:$0xff] %v2680
    %2689 = vst [vmem:[#allocation8 + $0x28] sm:$0xff] %v2681
    %2690 = vst [vmem:[#allocation8 + $0x30] sm:$0xff] %v2682
    %2691 = vst [vmem:[#allocation8 + $0x38] sm:$0xff] %v2683
    // Predicated region
    $region38: #{tpu_custom_call.1} parent=1 // pred_check
      _
    $region39: #{tpu_custom_call.1} parent=1 // pred_check_branch
      %2693 = sbr.rel (0) target = $region41
    $region40: #{tpu_custom_call.1} parent=1 // pred_region
      %s2695 = ssub.s32 1024, 1024
      %2696 = vsyncadd [#allocation4], %s2695
      %s2697 = sshll.u32 [#allocation8], 4
      %s2698 = int_to_ptr.vmem [resolvable:$true] %s2697
      %2703 = dma.vmem_to_hbm [thread:$0]  %s2698, 1024, %s6, [#allocation4], 256, 256, 16
    $region41: #{tpu_custom_call.1} parent=1 // pred_fallthru
      _
    // Predicated region
    $region42: #{tpu_custom_call.1} parent=1 // pred_check
      _
    $region43: #{tpu_custom_call.1} parent=1 // pred_check_branch
      %2705 = sbr.rel (0) target = $region45
    $region44: #{tpu_custom_call.1} parent=1 // pred_region
      %2706 = dma.done [#allocation4], 1024
    $region45: #{tpu_custom_call.1} parent=1 // pred_fallthru
      _
    %2707 = vsyncpa [#allocation3], 1
    %2708 = vsyncpa [#allocation6], 1
    %2709 = vsyncpa [#allocation4], 1

</llo_original>
